<compile_context>
chip_gen: v6e
topology: v6e:2x2x1
jax: 0.10.0
libtpu: 0.0.40
codegen_flags: <defaults>
</compile_context>

<pallas_src>
import numpy as np

import jax
import jax.numpy as jnp
from jax import lax
from jax.experimental import pallas as pl
from jax.experimental.pallas import tpu as pltpu


# ------------------------- host-side cell lowering -------------------------- #

def _conv_matrix(w, hin, win, stride, pad):
    """Dense M s.t. NCHW-flat Conv2d is y = x_flat @ M.  w: (Cout, Cin, K, K)."""
    cout, cin, k, _ = w.shape
    oh = (hin + 2 * pad - k) // stride + 1
    ow = (win + 2 * pad - k) // stride + 1
    m = np.zeros((cin * hin * win, cout * oh * ow), np.float32)
    ci = np.arange(cin)
    co = np.arange(cout)
    for i in range(oh):
        for j in range(ow):
            for kh in range(k):
                for kw in range(k):
                    ih = stride * i - pad + kh
                    iw = stride * j - pad + kw
                    if 0 <= ih < hin and 0 <= iw < win:
                        rows = (ci * hin + ih) * win + iw
                        cols = (co * oh + i) * ow + j
                        m[np.ix_(rows, cols)] = w[:, :, kh, kw].T   # (Cin, Cout)
    return m, oh, ow


def _convtrans_matrix(w, hin, win, stride, pad):
    """Dense M s.t. NCHW-flat ConvTranspose2d is y = x_flat @ M.  w: (Cin, Cout, K, K)."""
    cin, cout, k, _ = w.shape
    oh = (hin - 1) * stride - 2 * pad + k
    ow = (win - 1) * stride - 2 * pad + k
    m = np.zeros((cin * hin * win, cout * oh * ow), np.float32)
    ci = np.arange(cin)
    co = np.arange(cout)
    for i in range(hin):
        for j in range(win):
            for kh in range(k):
                for kw in range(k):
                    o_h = stride * i - pad + kh
                    o_w = stride * j - pad + kw
                    if 0 <= o_h < oh and 0 <= o_w < ow:
                        rows = (ci * hin + i) * win + j
                        cols = (co * oh + o_h) * ow + o_w
                        m[np.ix_(rows, cols)] = w[:, :, kh, kw]     # (Cin, Cout)
    return m, oh, ow


def _bn_mats(c, spatial, gamma):
    """Per-channel reduce (N, C) and gamma-folded broadcast (C, N) matrices for
    NCHW-flat activations (N = C * spatial, channel is the outer column index)."""
    ind = np.kron(np.eye(c, dtype=np.float32),
                  np.ones((spatial, 1), np.float32))      # (N, C) 0/1 indicator
    ared = ind / float(spatial)                           # row-mean @ ared -> per-chan mean
    abr_g = np.ascontiguousarray((ind * gamma[None, :]).T)  # (C, N), gamma folded in
    return ared, abr_g


# ------------------------------ Pallas kernel -------------------------------- #

def _make_net_kernel(cells, eps=1e-5, slope=0.2):
    """Fused whole-network kernel: chain of (matmul -> BN|bias -> activation).

    cells: static tuple of (use_bn: bool, act: str).
    Ref layout: [x, *per-cell params..., out] with per-cell params
      [M_bf16] + ([ared, abr_gamma, beta_flat] if use_bn else [bias_flat]).
    """

    def kernel(*refs):
        x_ref, out_ref = refs[0], refs[-1]
        params = refs[1:-1]
        y = x_ref[...]                                            # (B, N) f32
        idx = 0
        for use_bn, act in cells:
            m = params[idx][...]                                  # (N_in, N_out) bf16
            idx += 1
            y = jnp.dot(y.astype(jnp.bfloat16), m,
                        preferred_element_type=jnp.float32)       # (B, N_out) f32
            if use_bn:
                ared = params[idx][...]                           # (N_out, C) f32
                abr = params[idx + 1][...]                        # (C, N_out) f32 (gamma folded)
                beta = params[idx + 2][...]                       # (1, N_out) f32
                idx += 3
                # training-mode batch stats over (B, H, W) == rows + spatial cols
                mean_c = jnp.dot(jnp.mean(y, axis=0, keepdims=True), ared,
                                 preferred_element_type=jnp.float32)      # (1, C)
                m2_c = jnp.dot(jnp.mean(y * y, axis=0, keepdims=True), ared,
                               preferred_element_type=jnp.float32)        # (1, C)
                var_c = jnp.maximum(m2_c - mean_c * mean_c, 0.0)
                inv_c = lax.rsqrt(var_c + eps)                            # (1, C)
                scale = jnp.dot(inv_c, abr,
                                preferred_element_type=jnp.float32)       # (1, N_out)
                shift = beta - jnp.dot(mean_c * inv_c, abr,
                                       preferred_element_type=jnp.float32)
                y = y * scale + shift
                # NOTE: conv bias skipped here — it cancels exactly with BN mean.
            else:
                bias = params[idx][...]                           # (1, N_out) f32
                idx += 1
                y = y + bias
            if act == "relu":
                y = jnp.maximum(y, 0.0)
            elif act == "leaky_relu":
                y = jnp.where(y > 0, y, slope * y)
            elif act == "tanh":
                y = jnp.tanh(y)
            elif act == "sigmoid":
                y = pl.reciprocal(1.0 + jnp.exp(-y), approx=True)
        out_ref[...] = y

    return kernel


# ----------------------------- phenotype build ------------------------------- #

def _build_net(defs, in_chw, keys, init_std):
    """Lower each cell to (M_bf16, BN/bias vectors); return static cfg + params."""
    c, h, w_sp = in_chw
    cells_static = []
    flat_params = []
    for (kind, wshape, stride, pad, use_bn, act), k in zip(defs, keys):
        w = np.asarray(init_std * jax.random.normal(k, wshape, dtype=jnp.float32))
        if kind == "convtrans":
            cin, cout = wshape[0], wshape[1]
            m, oh, ow = _convtrans_matrix(w, h, w_sp, stride, pad)
        else:
            cout, cin = wshape[0], wshape[1]
            m, oh, ow = _conv_matrix(w, h, w_sp, stride, pad)
        assert cin == c, (cin, c)
        spatial = oh * ow
        flat_params.append(jnp.asarray(m, dtype=jnp.bfloat16))
        if use_bn:
            gamma = np.ones((cout,), np.float32)     # BatchNorm2d affine init
            beta = np.zeros((cout,), np.float32)
            ared, abr_g = _bn_mats(cout, spatial, gamma)
            flat_params += [
                jnp.asarray(ared),
                jnp.asarray(abr_g),
                jnp.asarray(np.repeat(beta, spatial)[None, :]),
            ]
        else:
            bias = np.zeros((cout,), np.float32)     # conv bias (zero-init here)
            flat_params.append(jnp.asarray(np.repeat(bias, spatial)[None, :]))
        cells_static.append((use_bn, act))
        c, h, w_sp = cout, oh, ow
    return tuple(cells_static), flat_params, (c, h, w_sp)


def _make_forward(cells_static, flat_params, out_chw, batch):
    kernel = _make_net_kernel(cells_static)
    n_out = out_chw[0] * out_chw[1] * out_chw[2]
    vmem = pl.BlockSpec(memory_space=pltpu.MemorySpace.VMEM)
    call = pl.pallas_call(
        kernel,
        out_shape=jax.ShapeDtypeStruct((batch, n_out), jnp.float32),
        in_specs=[vmem] * (1 + len(flat_params)),
        out_specs=vmem,
    )

    @jax.jit
    def fwd(x):
        xf = jnp.reshape(x, (batch, -1)).astype(jnp.float32)   # NCHW flatten (no copy)
        y = call(xf, *flat_params)
        return jnp.reshape(y, (batch,) + tuple(out_chw))

    return fwd


class GANPhenotypePallas:
    """Pallas re-implementation of GANPhenotype.forward for a fixed valid genotype.

    Generator    : z   (B, 32, 1, 1)  -> img   (B, 4, 16, 16)
    Discriminator: img (B, 4, 16, 16) -> score (B, 1, 1, 1)
    """

    def __init__(self, key, z_dim=32, img_ch=4, init_std=0.02):
        ks = jax.random.split(key, 6)
        # (kind, w_shape, stride, pad, use_bn, act)
        gen_defs = [
            ("convtrans", (z_dim, 16, 4, 4), 1, 0, True, "relu"),
            ("convtrans", (16, 8, 4, 4), 2, 1, True, "relu"),
            ("convtrans", (8, img_ch, 4, 4), 2, 1, False, "tanh"),
        ]
        disc_defs = [
            ("conv", (8, img_ch, 4, 4), 2, 1, False, "leaky_relu"),
            ("conv", (16, 8, 4, 4), 2, 1, True, "leaky_relu"),
            ("conv", (1, 16, 4, 4), 1, 0, False, "sigmoid"),
        ]
        self._nets = {
            "generator": _build_net(gen_defs, (z_dim, 1, 1), ks[:3], init_std),
            "discriminator": _build_net(disc_defs, (img_ch, 16, 16), ks[3:], init_std),
        }
        self._fwd = {}

    def forward(self, g_or_d, x):
        name = "generator" if g_or_d == "generator" else "discriminator"
        batch = int(x.shape[0])
        ck = (name, batch)
        if ck not in self._fwd:
            cells, params, out_chw = self._nets[name]
            self._fwd[ck] = _make_forward(cells, params, out_chw, batch)
        return self._fwd[ck](x)


# --------------------------------- main -------------------------------------- #

if __name__ == "__main__":
    key = jax.random.PRNGKey(0)
    k_model, k_z, k_x = jax.random.split(key, 3)

    model = GANPhenotypePallas(k_model, z_dim=32, img_ch=4)

    # generator input: latent noise, NCHW (B, Z, 1, 1)
    z = jax.random.normal(k_z, (2, 32, 1, 1), dtype=jnp.float32)
    # discriminator input: image, NCHW (B, C, H, W)
    x = jax.random.normal(k_x, (2, 4, 16, 16), dtype=jnp.float32)

    g_out = jax.block_until_ready(model.forward("generator", z))
    d_real = jax.block_until_ready(model.forward("discriminator", x))
    d_fake = jax.block_until_ready(model.forward("discriminator", g_out))

    assert g_out.shape == (2, 4, 16, 16), g_out.shape
    assert d_real.shape == (2, 1, 1, 1), d_real.shape
    assert d_fake.shape == (2, 1, 1, 1), d_fake.shape
    assert bool(jnp.all(jnp.isfinite(g_out)))
    assert bool(jnp.all(jnp.abs(g_out) <= 1.0 + 1e-5))          # tanh range
    assert bool(jnp.all((d_real > -1e-3) & (d_real < 1.0 + 1e-3)))  # sigmoid range
    assert bool(jnp.all((d_fake > -1e-3) & (d_fake < 1.0 + 1e-3)))

    print("KERNEL_OK")
</pallas_src>

<mosaic_0001>
module attributes {stable_mosaic.version = 11 : i64} {
  func.func @kernel(%arg0: memref<2x32xf32, #tpu.memory_space<vmem>>, %arg1: memref<32x256xbf16, #tpu.memory_space<vmem>>, %arg2: memref<256x16xf32, #tpu.memory_space<vmem>>, %arg3: memref<16x256xf32, #tpu.memory_space<vmem>>, %arg4: memref<1x256xf32, #tpu.memory_space<vmem>>, %arg5: memref<256x512xbf16, #tpu.memory_space<vmem>>, %arg6: memref<512x8xf32, #tpu.memory_space<vmem>>, %arg7: memref<8x512xf32, #tpu.memory_space<vmem>>, %arg8: memref<1x512xf32, #tpu.memory_space<vmem>>, %arg9: memref<512x1024xbf16, #tpu.memory_space<vmem>>, %arg10: memref<1x1024xf32, #tpu.memory_space<vmem>>, %arg11: memref<2x1024xf32, #tpu.memory_space<vmem>>) attributes {dimension_semantics = [], scalar_prefetch = 0 : i64, scratch_operands = 0 : i64, tpu.core_type = #tpu.core_type<tc>} {
    %c0 = arith.constant 0 : index
    %c0_0 = arith.constant 0 : index
    %0 = vector.load %arg0[%c0, %c0_0] : memref<2x32xf32, #tpu.memory_space<vmem>>, vector<2x32xf32>
    %c0_1 = arith.constant 0 : index
    %c0_2 = arith.constant 0 : index
    %1 = vector.load %arg1[%c0_1, %c0_2] : memref<32x256xbf16, #tpu.memory_space<vmem>>, vector<32x256xbf16>
    %2 = arith.truncf %0 : vector<2x32xf32> to vector<2x32xbf16>
    %cst = arith.constant dense<0.000000e+00> : vector<2x256xf32>
    %3 = tpu.matmul %2, %1, %cst {dimension_numbers = #tpu.dot_dimension_numbers<[1], [0], [0], [1], [0, 0, 1, 1], [], []>} : vector<2x32xbf16>, vector<32x256xbf16>, vector<2x256xf32> -> vector<2x256xf32>
    %c0_3 = arith.constant 0 : index
    %c0_4 = arith.constant 0 : index
    %4 = vector.load %arg2[%c0_3, %c0_4] : memref<256x16xf32, #tpu.memory_space<vmem>>, vector<256x16xf32>
    %c0_5 = arith.constant 0 : index
    %c0_6 = arith.constant 0 : index
    %5 = vector.load %arg3[%c0_5, %c0_6] : memref<16x256xf32, #tpu.memory_space<vmem>>, vector<16x256xf32>
    %c0_7 = arith.constant 0 : index
    %c0_8 = arith.constant 0 : index
    %6 = vector.load %arg4[%c0_7, %c0_8] : memref<1x256xf32, #tpu.memory_space<vmem>>, vector<1x256xf32>
    %cst_9 = arith.constant dense<0.000000e+00> : vector<256xf32>
    %7 = vector.multi_reduction <add>, %3, %cst_9 [0] : vector<2x256xf32> to vector<256xf32>
    %8 = vector.shape_cast %7 : vector<256xf32> to vector<1x256xf32>
    %cst_10 = arith.constant 2.000000e+00 : f32
    %9 = vector.broadcast %cst_10 : f32 to vector<1x256xf32>
    %10 = arith.divf %8, %9 : vector<1x256xf32>
    %cst_11 = arith.constant dense<0.000000e+00> : vector<1x16xf32>
    %11 = tpu.matmul %10, %4, %cst_11 {dimension_numbers = #tpu.dot_dimension_numbers<[1], [0], [0], [1], [0, 0, 1, 1], [], []>} : vector<1x256xf32>, vector<256x16xf32>, vector<1x16xf32> -> vector<1x16xf32>
    %12 = arith.mulf %3, %3 : vector<2x256xf32>
    %cst_12 = arith.constant dense<0.000000e+00> : vector<256xf32>
    %13 = vector.multi_reduction <add>, %12, %cst_12 [0] : vector<2x256xf32> to vector<256xf32>
    %14 = vector.shape_cast %13 : vector<256xf32> to vector<1x256xf32>
    %cst_13 = arith.constant 2.000000e+00 : f32
    %15 = vector.broadcast %cst_13 : f32 to vector<1x256xf32>
    %16 = arith.divf %14, %15 : vector<1x256xf32>
    %cst_14 = arith.constant dense<0.000000e+00> : vector<1x16xf32>
    %17 = tpu.matmul %16, %4, %cst_14 {dimension_numbers = #tpu.dot_dimension_numbers<[1], [0], [0], [1], [0, 0, 1, 1], [], []>} : vector<1x256xf32>, vector<256x16xf32>, vector<1x16xf32> -> vector<1x16xf32>
    %18 = arith.mulf %11, %11 : vector<1x16xf32>
    %19 = arith.subf %17, %18 : vector<1x16xf32>
    %cst_15 = arith.constant 0.000000e+00 : f32
    %20 = vector.broadcast %cst_15 : f32 to vector<1x16xf32>
    %21 = arith.maximumf %19, %20 : vector<1x16xf32>
    %cst_16 = arith.constant 9.99999974E-6 : f32
    %22 = vector.broadcast %cst_16 : f32 to vector<1x16xf32>
    %23 = arith.addf %21, %22 : vector<1x16xf32>
    %24 = math.rsqrt %23 : vector<1x16xf32>
    %cst_17 = arith.constant dense<0.000000e+00> : vector<1x256xf32>
    %25 = tpu.matmul %24, %5, %cst_17 {dimension_numbers = #tpu.dot_dimension_numbers<[1], [0], [0], [1], [0, 0, 1, 1], [], []>} : vector<1x16xf32>, vector<16x256xf32>, vector<1x256xf32> -> vector<1x256xf32>
    %26 = arith.mulf %11, %24 : vector<1x16xf32>
    %cst_18 = arith.constant dense<0.000000e+00> : vector<1x256xf32>
    %27 = tpu.matmul %26, %5, %cst_18 {dimension_numbers = #tpu.dot_dimension_numbers<[1], [0], [0], [1], [0, 0, 1, 1], [], []>} : vector<1x16xf32>, vector<16x256xf32>, vector<1x256xf32> -> vector<1x256xf32>
    %28 = arith.subf %6, %27 : vector<1x256xf32>
    %29 = vector.broadcast %25 : vector<1x256xf32> to vector<2x256xf32>
    %30 = arith.mulf %3, %29 : vector<2x256xf32>
    %31 = vector.broadcast %28 : vector<1x256xf32> to vector<2x256xf32>
    %32 = arith.addf %30, %31 : vector<2x256xf32>
    %cst_19 = arith.constant 0.000000e+00 : f32
    %33 = vector.broadcast %cst_19 : f32 to vector<2x256xf32>
    %34 = arith.maximumf %32, %33 : vector<2x256xf32>
    %c0_20 = arith.constant 0 : index
    %c0_21 = arith.constant 0 : index
    %35 = vector.load %arg5[%c0_20, %c0_21] : memref<256x512xbf16, #tpu.memory_space<vmem>>, vector<256x512xbf16>
    %36 = arith.truncf %34 : vector<2x256xf32> to vector<2x256xbf16>
    %cst_22 = arith.constant dense<0.000000e+00> : vector<2x512xf32>
    %37 = tpu.matmul %36, %35, %cst_22 {dimension_numbers = #tpu.dot_dimension_numbers<[1], [0], [0], [1], [0, 0, 1, 1], [], []>} : vector<2x256xbf16>, vector<256x512xbf16>, vector<2x512xf32> -> vector<2x512xf32>
    %c0_23 = arith.constant 0 : index
    %c0_24 = arith.constant 0 : index
    %38 = vector.load %arg6[%c0_23, %c0_24] : memref<512x8xf32, #tpu.memory_space<vmem>>, vector<512x8xf32>
    %c0_25 = arith.constant 0 : index
    %c0_26 = arith.constant 0 : index
    %39 = vector.load %arg7[%c0_25, %c0_26] : memref<8x512xf32, #tpu.memory_space<vmem>>, vector<8x512xf32>
    %c0_27 = arith.constant 0 : index
    %c0_28 = arith.constant 0 : index
    %40 = vector.load %arg8[%c0_27, %c0_28] : memref<1x512xf32, #tpu.memory_space<vmem>>, vector<1x512xf32>
    %cst_29 = arith.constant dense<0.000000e+00> : vector<512xf32>
    %41 = vector.multi_reduction <add>, %37, %cst_29 [0] : vector<2x512xf32> to vector<512xf32>
    %42 = vector.shape_cast %41 : vector<512xf32> to vector<1x512xf32>
    %cst_30 = arith.constant 2.000000e+00 : f32
    %43 = vector.broadcast %cst_30 : f32 to vector<1x512xf32>
    %44 = arith.divf %42, %43 : vector<1x512xf32>
    %cst_31 = arith.constant dense<0.000000e+00> : vector<1x8xf32>
    %45 = tpu.matmul %44, %38, %cst_31 {dimension_numbers = #tpu.dot_dimension_numbers<[1], [0], [0], [1], [0, 0, 1, 1], [], []>} : vector<1x512xf32>, vector<512x8xf32>, vector<1x8xf32> -> vector<1x8xf32>
    %46 = arith.mulf %37, %37 : vector<2x512xf32>
    %cst_32 = arith.constant dense<0.000000e+00> : vector<512xf32>
    %47 = vector.multi_reduction <add>, %46, %cst_32 [0] : vector<2x512xf32> to vector<512xf32>
    %48 = vector.shape_cast %47 : vector<512xf32> to vector<1x512xf32>
    %cst_33 = arith.constant 2.000000e+00 : f32
    %49 = vector.broadcast %cst_33 : f32 to vector<1x512xf32>
    %50 = arith.divf %48, %49 : vector<1x512xf32>
    %cst_34 = arith.constant dense<0.000000e+00> : vector<1x8xf32>
    %51 = tpu.matmul %50, %38, %cst_34 {dimension_numbers = #tpu.dot_dimension_numbers<[1], [0], [0], [1], [0, 0, 1, 1], [], []>} : vector<1x512xf32>, vector<512x8xf32>, vector<1x8xf32> -> vector<1x8xf32>
    %52 = arith.mulf %45, %45 : vector<1x8xf32>
    %53 = arith.subf %51, %52 : vector<1x8xf32>
    %cst_35 = arith.constant 0.000000e+00 : f32
    %54 = vector.broadcast %cst_35 : f32 to vector<1x8xf32>
    %55 = arith.maximumf %53, %54 : vector<1x8xf32>
    %cst_36 = arith.constant 9.99999974E-6 : f32
    %56 = vector.broadcast %cst_36 : f32 to vector<1x8xf32>
    %57 = arith.addf %55, %56 : vector<1x8xf32>
    %58 = math.rsqrt %57 : vector<1x8xf32>
    %cst_37 = arith.constant dense<0.000000e+00> : vector<1x512xf32>
    %59 = tpu.matmul %58, %39, %cst_37 {dimension_numbers = #tpu.dot_dimension_numbers<[1], [0], [0], [1], [0, 0, 1, 1], [], []>} : vector<1x8xf32>, vector<8x512xf32>, vector<1x512xf32> -> vector<1x512xf32>
    %60 = arith.mulf %45, %58 : vector<1x8xf32>
    %cst_38 = arith.constant dense<0.000000e+00> : vector<1x512xf32>
    %61 = tpu.matmul %60, %39, %cst_38 {dimension_numbers = #tpu.dot_dimension_numbers<[1], [0], [0], [1], [0, 0, 1, 1], [], []>} : vector<1x8xf32>, vector<8x512xf32>, vector<1x512xf32> -> vector<1x512xf32>
    %62 = arith.subf %40, %61 : vector<1x512xf32>
    %63 = vector.broadcast %59 : vector<1x512xf32> to vector<2x512xf32>
    %64 = arith.mulf %37, %63 : vector<2x512xf32>
    %65 = vector.broadcast %62 : vector<1x512xf32> to vector<2x512xf32>
    %66 = arith.addf %64, %65 : vector<2x512xf32>
    %cst_39 = arith.constant 0.000000e+00 : f32
    %67 = vector.broadcast %cst_39 : f32 to vector<2x512xf32>
    %68 = arith.maximumf %66, %67 : vector<2x512xf32>
    %c0_40 = arith.constant 0 : index
    %c0_41 = arith.constant 0 : index
    %69 = vector.load %arg9[%c0_40, %c0_41] : memref<512x1024xbf16, #tpu.memory_space<vmem>>, vector<512x1024xbf16>
    %70 = arith.truncf %68 : vector<2x512xf32> to vector<2x512xbf16>
    %cst_42 = arith.constant dense<0.000000e+00> : vector<2x1024xf32>
    %71 = tpu.matmul %70, %69, %cst_42 {dimension_numbers = #tpu.dot_dimension_numbers<[1], [0], [0], [1], [0, 0, 1, 1], [], []>} : vector<2x512xbf16>, vector<512x1024xbf16>, vector<2x1024xf32> -> vector<2x1024xf32>
    %c0_43 = arith.constant 0 : index
    %c0_44 = arith.constant 0 : index
    %72 = vector.load %arg10[%c0_43, %c0_44] : memref<1x1024xf32, #tpu.memory_space<vmem>>, vector<1x1024xf32>
    %73 = vector.broadcast %72 : vector<1x1024xf32> to vector<2x1024xf32>
    %74 = arith.addf %71, %73 : vector<2x1024xf32>
    %75 = math.tanh %74 : vector<2x1024xf32>
    %c0_45 = arith.constant 0 : index
    %c0_46 = arith.constant 0 : index
    %76 = vector.load %arg11[%c0_45, %c0_46] : memref<2x1024xf32, #tpu.memory_space<vmem>>, vector<2x1024xf32>
    tpu.vector_store %arg11[%c0_45, %c0_46], %75 {strides = array<i32>} : memref<2x1024xf32, #tpu.memory_space<vmem>>, vector<2x1024xf32>,
    return
  }
}

</mosaic_0001>

<llo_original>
// kernel: fwd.1
$region0: #{fwd.1}
  #allocation0 [shape = 'u32[]', space=smem, size = 0x4, offset = 0x4, fixed_abs, tag = 'smem constant byte address 0x4 - core index']
  #allocation1 [shape = 'u32[144,128]{1,0:T(1,128)}', space=vmem, size = 0x12000, scoped, tag = 'internal scratch']
  %s0 = inlined_call_operand.vmem [shape: f32[2,32], index: 0, kind: input, shape index: {}]
  %s1 = inlined_call_operand.hbm [shape: bf16[32,256], index: 1, kind: input, shape index: {}]
  %s2 = inlined_call_operand.hbm [shape: f32[256,16], index: 2, kind: input, shape index: {}]
  %s3 = inlined_call_operand.hbm [shape: f32[16,256], index: 3, kind: input, shape index: {}]
  %s4 = inlined_call_operand.vmem [shape: f32[1,256], index: 4, kind: input, shape index: {}]
  %s5 = inlined_call_operand.hbm [shape: bf16[256,512], index: 5, kind: input, shape index: {}]
  %s6 = inlined_call_operand.hbm [shape: f32[512,8], index: 6, kind: input, shape index: {}]
  %s7 = inlined_call_operand.hbm [shape: f32[8,512], index: 7, kind: input, shape index: {}]
  %s8 = inlined_call_operand.vmem [shape: f32[1,512], index: 8, kind: input, shape index: {}]
  %s9 = inlined_call_operand.hbm [shape: bf16[512,1024], index: 9, kind: input, shape index: {}]
  %s10 = inlined_call_operand.vmem [shape: f32[1,1024], index: 10, kind: input, shape index: {}]
  %s11 = inlined_call_operand.vmem [shape: f32[2,1024], index: 11, kind: output, shape index: {}]
  %s12 = sld [smem:[#allocation0]]
  $region82: #{fwd.1} parent=0
    _
  %s14 = ssub.s32 1, %s12
  %s15 = scalar_select 0, %s14, %s12
  $region1: #{fwd.1} parent=0
    #allocation2 [shape = 'u8[16384]{0}', space=vmem, size = 0x4000, scoped, tag = 'input window, operand 1, single buffered']
    #allocation3 [shape = 's32[1]{0}', space=sflag, size = 0x4, scoped, tag = 'scoped memory for fwd.1']
    #allocation4 [shape = 'u8[131072]{0}', space=vmem, size = 0x20000, scoped, tag = 'input window, operand 2, single buffered']
    #allocation5 [shape = 's32[1]{0}', space=sflag, size = 0x4, scoped, tag = 'scoped memory for fwd.1']
    #allocation6 [shape = 'u8[16384]{0}', space=vmem, size = 0x4000, scoped, tag = 'input window, operand 3, single buffered']
    #allocation7 [shape = 'u8[262144]{0}', space=vmem, size = 0x40000, scoped, tag = 'input window, operand 5, single buffered']
    #allocation8 [shape = 's32[1]{0}', space=sflag, size = 0x4, scoped, tag = 'scoped memory for fwd.1']
    #allocation9 [shape = 'u8[262144]{0}', space=vmem, size = 0x40000, scoped, tag = 'input window, operand 6, single buffered']
    #allocation10 [shape = 'u8[16384]{0}', space=vmem, size = 0x4000, scoped, tag = 'input window, operand 7, single buffered']
    #allocation11 [shape = 's32[1]{0}', space=sflag, size = 0x4, scoped, tag = 'scoped memory for fwd.1']
    #allocation12 [shape = 'u8[1048576]{0}', space=vmem, size = 0x100000, scoped, tag = 'input window, operand 9, single buffered']
    %16 = vsyncpa [#allocation3], 0
    %17 = vsyncpa [#allocation5], 0
    %18 = vsyncpa [#allocation8], 0
    %19 = vsyncpa [#allocation11], 0
    // Predicated region
    $region2: #{fwd.1} parent=1 // pred_check
      _
    $region3: #{fwd.1} parent=1 // pred_check_branch
      %21 = sbr.rel (0) target = $region5
    $region4: #{fwd.1} parent=1 // pred_region
      _
    $region5: #{fwd.1} parent=1 // pred_fallthru
      _
    // Predicated region
    $region6: #{fwd.1} parent=1 // pred_check
      _
    $region7: #{fwd.1} parent=1 // pred_check_branch
      %23 = sbr.rel (0) target = $region9
    $region8: #{fwd.1} parent=1 // pred_region
      %s25 = ssub.s32 512, 512
      %26 = vsyncadd [#allocation3], %s25
      %s27 = sshll.u32 [#allocation2], 4
      %s28 = int_to_ptr.vmem [resolvable:$true] %s27
      %33 = dma.hbm_to_vmem [thread:$0]  %s1, 512, %s28, [#allocation3], 128, 128, 8
    $region9: #{fwd.1} parent=1 // pred_fallthru
      _
    // Predicated region
    $region10: #{fwd.1} parent=1 // pred_check
      _
    $region11: #{fwd.1} parent=1 // pred_check_branch
      %35 = sbr.rel (0) target = $region13
    $region12: #{fwd.1} parent=1 // pred_region
      %s37 = ssub.s32 4096, 4096
      %38 = vsyncadd [#allocation5], %s37
      %s39 = sshll.u32 [#allocation4], 4
      %s40 = int_to_ptr.vmem [resolvable:$true] %s39
      %45 = dma.hbm_to_vmem [thread:$0]  %s2, 4096, %s40, [#allocation5], 128, 128, 8
    $region13: #{fwd.1} parent=1 // pred_fallthru
      _
    // Predicated region
    $region14: #{fwd.1} parent=1 // pred_check
      _
    $region15: #{fwd.1} parent=1 // pred_check_branch
      %47 = sbr.rel (0) target = $region17
    $region16: #{fwd.1} parent=1 // pred_region
      %s49 = ssub.s32 512, 512
      %50 = vsyncadd [#allocation5], %s49
      %s51 = sshll.u32 [#allocation6], 4
      %s52 = int_to_ptr.vmem [resolvable:$true] %s51
      %57 = dma.hbm_to_vmem [thread:$0]  %s3, 512, %s52, [#allocation5], 256, 256, 16
    $region17: #{fwd.1} parent=1 // pred_fallthru
      _
    // Predicated region
    $region18: #{fwd.1} parent=1 // pred_check
      _
    $region19: #{fwd.1} parent=1 // pred_check_branch
      %59 = sbr.rel (0) target = $region21
    $region20: #{fwd.1} parent=1 // pred_region
      _
    $region21: #{fwd.1} parent=1 // pred_fallthru
      _
    // Predicated region
    $region22: #{fwd.1} parent=1 // pred_check
      _
    $region23: #{fwd.1} parent=1 // pred_check_branch
      %61 = sbr.rel (0) target = $region25
    $region24: #{fwd.1} parent=1 // pred_region
      %s63 = ssub.s32 8192, 8192
      %64 = vsyncadd [#allocation8], %s63
      %s65 = sshll.u32 [#allocation7], 4
      %s66 = int_to_ptr.vmem [resolvable:$true] %s65
      %71 = dma.hbm_to_vmem [thread:$0]  %s5, 8192, %s66, [#allocation8], 256, 256, 16
    $region25: #{fwd.1} parent=1 // pred_fallthru
      _
    // Predicated region
    $region26: #{fwd.1} parent=1 // pred_check
      _
    $region27: #{fwd.1} parent=1 // pred_check_branch
      %73 = sbr.rel (0) target = $region29
    $region28: #{fwd.1} parent=1 // pred_region
      %s75 = ssub.s32 8192, 8192
      %76 = vsyncadd [#allocation8], %s75
      %s77 = sshll.u32 [#allocation9], 4
      %s78 = int_to_ptr.vmem [resolvable:$true] %s77
      %83 = dma.hbm_to_vmem [thread:$0]  %s6, 8192, %s78, [#allocation8], 128, 128, 8
    $region29: #{fwd.1} parent=1 // pred_fallthru
      _
    // Predicated region
    $region30: #{fwd.1} parent=1 // pred_check
      _
    $region31: #{fwd.1} parent=1 // pred_check_branch
      %85 = sbr.rel (0) target = $region33
    $region32: #{fwd.1} parent=1 // pred_region
      %s87 = ssub.s32 512, 512
      %88 = vsyncadd [#allocation11], %s87
      %s90 = sshll.u32 [#allocation10], 4
      %s91 = int_to_ptr.vmem [resolvable:$true] %s90
      %93 = dma.hbm_to_vmem [thread:$0]  %s7, 512, %s91, [#allocation11]
    $region33: #{fwd.1} parent=1 // pred_fallthru
      _
    // Predicated region
    $region34: #{fwd.1} parent=1 // pred_check
      _
    $region35: #{fwd.1} parent=1 // pred_check_branch
      %95 = sbr.rel (0) target = $region37
    $region36: #{fwd.1} parent=1 // pred_region
      _
    $region37: #{fwd.1} parent=1 // pred_fallthru
      _
    // Predicated region
    $region38: #{fwd.1} parent=1 // pred_check
      _
    $region39: #{fwd.1} parent=1 // pred_check_branch
      %97 = sbr.rel (0) target = $region41
    $region40: #{fwd.1} parent=1 // pred_region
      %s99 = ssub.s32 32768, 32768
      %100 = vsyncadd [#allocation11], %s99
      %s101 = sshll.u32 [#allocation12], 4
      %s102 = int_to_ptr.vmem [resolvable:$true] %s101
      %107 = dma.hbm_to_vmem [thread:$0]  %s9, 32768, %s102, [#allocation11], 512, 512, 32
    $region41: #{fwd.1} parent=1 // pred_fallthru
      _
    // Predicated region
    $region42: #{fwd.1} parent=1 // pred_check
      _
    $region43: #{fwd.1} parent=1 // pred_check_branch
      %109 = sbr.rel (0) target = $region45
    $region44: #{fwd.1} parent=1 // pred_region
      _
    $region45: #{fwd.1} parent=1 // pred_fallthru
      _
    // Predicated region
    $region46: #{fwd.1} parent=1 // pred_check
      _
    $region47: #{fwd.1} parent=1 // pred_check_branch
      %111 = sbr.rel (0) target = $region49
    $region48: #{fwd.1} parent=1 // pred_region
      %112 = dma.done [#allocation3], 512
    $region49: #{fwd.1} parent=1 // pred_fallthru
      _
    // Predicated region
    $region50: #{fwd.1} parent=1 // pred_check
      _
    $region51: #{fwd.1} parent=1 // pred_check_branch
      %114 = sbr.rel (0) target = $region53
    $region52: #{fwd.1} parent=1 // pred_region
      %115 = dma.done [#allocation5], 4096
    $region53: #{fwd.1} parent=1 // pred_fallthru
      _
    // Predicated region
    $region54: #{fwd.1} parent=1 // pred_check
      _
    $region55: #{fwd.1} parent=1 // pred_check_branch
      %117 = sbr.rel (0) target = $region57
    $region56: #{fwd.1} parent=1 // pred_region
      %118 = dma.done [#allocation5], 512
    $region57: #{fwd.1} parent=1 // pred_fallthru
      _
    // Predicated region
    $region58: #{fwd.1} parent=1 // pred_check
      _
    $region59: #{fwd.1} parent=1 // pred_check_branch
      %120 = sbr.rel (0) target = $region61
    $region60: #{fwd.1} parent=1 // pred_region
      %121 = dma.done [#allocation8], 8192
    $region61: #{fwd.1} parent=1 // pred_fallthru
      _
    // Predicated region
    $region62: #{fwd.1} parent=1 // pred_check
      _
    $region63: #{fwd.1} parent=1 // pred_check_branch
      %123 = sbr.rel (0) target = $region65
    $region64: #{fwd.1} parent=1 // pred_region
      %124 = dma.done [#allocation8], 8192
    $region65: #{fwd.1} parent=1 // pred_fallthru
      _
    // Predicated region
    $region66: #{fwd.1} parent=1 // pred_check
      _
    $region67: #{fwd.1} parent=1 // pred_check_branch
      %126 = sbr.rel (0) target = $region69
    $region68: #{fwd.1} parent=1 // pred_region
      %127 = dma.done [#allocation11], 512
    $region69: #{fwd.1} parent=1 // pred_fallthru
      _
    // Predicated region
    $region70: #{fwd.1} parent=1 // pred_check
      _
    $region71: #{fwd.1} parent=1 // pred_check_branch
      %129 = sbr.rel (0) target = $region73
    $region72: #{fwd.1} parent=1 // pred_region
      %130 = dma.done [#allocation11], 32768
    $region73: #{fwd.1} parent=1 // pred_fallthru
      _
    %v132 = vld [vmem:[%s0] sm:$0x3]
    %v133 = vld [vmem:[#allocation2] sm:$0xff]
    %v134 = vld [vmem:[#allocation2 + $0x8] sm:$0xff]
    %v135 = vld [vmem:[#allocation2 + $0x10] sm:$0xff]
    %v136 = vld [vmem:[#allocation2 + $0x18] sm:$0xff]
    %v137 = vpack.c.bf16 %v132, %v132
    %v142 = vunpack.c.l.b16 %v133
    %v143 = vunpack.c.h.b16 %v133
    %v144 = vunpack.c.l.b16 %v134
    %v145 = vunpack.c.h.b16 %v134
    %v146 = vunpack.c.l.b16 %v135
    %v147 = vunpack.c.h.b16 %v135
    %v148 = vunpack.c.l.b16 %v136
    %v149 = vunpack.c.h.b16 %v136
    %v150 = vpack.c.b16 %v144, %v142
    %v151 = vpack.c.b16 %v145, %v143
    %v152 = vpack.c.b16 %v148, %v146
    %v153 = vpack.c.b16 %v149, %v147
    %vm158 = vcmask 261120
    %v160 = vsel %vm158, %v137, 0
    %162 = vmatprep.subr.bf16.mxu0 0
    %163 = vmatpush1.bf16.msra.mxu0 0
    %164 = vmatprep.subr.bf16.mxu0 0
    %165 = vmatpush1.bf16.msra.mxu0 0
    %166 = vmatprep.subr.bf16.mxu0 0
    %167 = vmatpush1.bf16.msra.mxu0 0
    %168 = vmatprep.subr.bf16.mxu0 0
    %169 = vmatpush1.bf16.msra.mxu0 0
    %170 = vmatprep.subr.bf16.mxu0 0
    %171 = vmatpush1.bf16.msra.mxu0 0
    %172 = vmatprep.subr.bf16.mxu0 0
    %173 = vmatpush1.bf16.msra.mxu0 0
    %174 = vmatprep.subr.bf16.mxu0 %v153
    %175 = vmatpush1.bf16.msra.mxu0 %v152
    %176 = vmatprep.subr.bf16.mxu0 %v151
    %177 = vmatpush1.bf16.msra.mxu0 %v150
    %178 = vmatprep.subr.bf16.mxu0 0
    %179 = vmatpush2.bf16.msra.mxu0 0
    %180 = vmatprep.subr.bf16.mxu0 0
    %181 = vmatpush2.bf16.msra.mxu0 0
    %182 = vmatprep.subr.bf16.mxu0 0
    %183 = vmatpush2.bf16.msra.mxu0 0
    %184 = vmatprep.subr.bf16.mxu0 0
    %185 = vmatpush2.bf16.msra.mxu0 0
    %186 = vmatprep.subr.bf16.mxu0 0
    %187 = vmatpush2.bf16.msra.mxu0 0
    %188 = vmatprep.subr.bf16.mxu0 0
    %189 = vmatpush2.bf16.msra.mxu0 0
    %190 = vmatprep.subr.bf16.mxu0 0
    %191 = vmatpush2.bf16.msra.mxu0 0
    %192 = vmatprep.subr.bf16.mxu0 0
    %193 = vmatpush2.bf16.msra.mxu0 0
    %194 = vmatprep.mubr.bf16.mxu0 0
    %195 = vmatmul.mubr.bf16.gmra.mxu0 %v160
    %v196 = vpop.f32.mrf.mxu0
    %v197 = vadd.f32 0.0, %v196
    %v198 = vpop.f32.mrf.mxu0
    %v199 = vadd.f32 0.0, %v198
    %v200 = vpop.f32.mrf.mxu0
    %v201 = vpop.f32.mrf.mxu0
    %202 = vdwg.mxu0
    %v203 = vld [vmem:[#allocation4] sm:$0xff]
    %v204 = vld [vmem:[#allocation4 + $0x8] sm:$0xff]
    %v205 = vld [vmem:[#allocation4 + $0x10] sm:$0xff]
    %v206 = vld [vmem:[#allocation4 + $0x18] sm:$0xff]
    %v207 = vld [vmem:[#allocation4 + $0x20] sm:$0xff]
    %v208 = vld [vmem:[#allocation4 + $0x28] sm:$0xff]
    %v209 = vld [vmem:[#allocation4 + $0x30] sm:$0xff]
    %v210 = vld [vmem:[#allocation4 + $0x38] sm:$0xff]
    %v211 = vld [vmem:[#allocation4 + $0x40] sm:$0xff]
    %v212 = vld [vmem:[#allocation4 + $0x48] sm:$0xff]
    %v213 = vld [vmem:[#allocation4 + $0x50] sm:$0xff]
    %v214 = vld [vmem:[#allocation4 + $0x58] sm:$0xff]
    %v215 = vld [vmem:[#allocation4 + $0x60] sm:$0xff]
    %v216 = vld [vmem:[#allocation4 + $0x68] sm:$0xff]
    %v217 = vld [vmem:[#allocation4 + $0x70] sm:$0xff]
    %v218 = vld [vmem:[#allocation4 + $0x78] sm:$0xff]
    %v219 = vld [vmem:[#allocation4 + $0x80] sm:$0xff]
    %v220 = vld [vmem:[#allocation4 + $0x88] sm:$0xff]
    %v221 = vld [vmem:[#allocation4 + $0x90] sm:$0xff]
    %v222 = vld [vmem:[#allocation4 + $0x98] sm:$0xff]
    %v223 = vld [vmem:[#allocation4 + $0xa0] sm:$0xff]
    %v224 = vld [vmem:[#allocation4 + $0xa8] sm:$0xff]
    %v225 = vld [vmem:[#allocation4 + $0xb0] sm:$0xff]
    %v226 = vld [vmem:[#allocation4 + $0xb8] sm:$0xff]
    %v227 = vld [vmem:[#allocation4 + $0xc0] sm:$0xff]
    %v228 = vld [vmem:[#allocation4 + $0xc8] sm:$0xff]
    %v229 = vld [vmem:[#allocation4 + $0xd0] sm:$0xff]
    %v230 = vld [vmem:[#allocation4 + $0xd8] sm:$0xff]
    %v231 = vld [vmem:[#allocation4 + $0xe0] sm:$0xff]
    %v232 = vld [vmem:[#allocation4 + $0xe8] sm:$0xff]
    %v233 = vld [vmem:[#allocation4 + $0xf0] sm:$0xff]
    %v234 = vld [vmem:[#allocation4 + $0xf8] sm:$0xff]
    %v235 = vld [vmem:[#allocation6] sm:$0xff]
    %v236 = vld [vmem:[#allocation6 + $0x8] sm:$0xff]
    %v237 = vld [vmem:[#allocation6 + $0x10] sm:$0xff]
    %v238 = vld [vmem:[#allocation6 + $0x18] sm:$0xff]
    %v239 = vld [vmem:[%s4] sm:$0x3]
    %vm240 = vcmask 1041408
    %v241 = vsel %vm240, %v197, 0.0
    %v242 = vrot.slane %v241, 4
    %v243 = vadd.f32 %v241, %v242
    %v244 = vrot.slane %v243, 2
    %v245 = vadd.f32 %v243, %v244
    %v246 = vrot.slane %v245, 1
    %v247 = vadd.f32 %v245, %v246
    %v248 = vsel %vm240, %v199, 0.0
    %v249 = vrot.slane %v248, 4
    %v250 = vadd.f32 %v248, %v249
    %v251 = vrot.slane %v250, 2
    %v252 = vadd.f32 %v250, %v251
    %v253 = vrot.slane %v252, 1
    %v254 = vadd.f32 %v252, %v253
    %v255 = vrcp.pop 2.0
    %v256 = vmul.f32 %v247, %v255
    %v257 = vmul.f32 %v254, %v255
    %258 = vmatprep.subr.mxu0 0.0
    %259 = vmatpush1.msra.mxu0 %v218
    %260 = vmatprep.subr.mxu0 0.0
    %261 = vmatpush1.msra.mxu0 %v217
    %262 = vmatprep.subr.mxu0 0.0
    %263 = vmatpush1.msra.mxu0 %v216
    %264 = vmatprep.subr.mxu0 0.0
    %265 = vmatpush1.msra.mxu0 %v215
    %266 = vmatprep.subr.mxu0 0.0
    %267 = vmatpush1.msra.mxu0 %v214
    %268 = vmatprep.subr.mxu0 0.0
    %269 = vmatpush1.msra.mxu0 %v213
    %270 = vmatprep.subr.mxu0 0.0
    %271 = vmatpush1.msra.mxu0 %v212
    %272 = vmatprep.subr.mxu0 0.0
    %273 = vmatpush1.msra.mxu0 %v211
    %274 = vmatprep.subr.mxu0 0.0
    %275 = vmatpush1.msra.mxu0 %v210
    %276 = vmatprep.subr.mxu0 0.0
    %277 = vmatpush1.msra.mxu0 %v209
    %278 = vmatprep.subr.mxu0 0.0
    %279 = vmatpush1.msra.mxu0 %v208
    %280 = vmatprep.subr.mxu0 0.0
    %281 = vmatpush1.msra.mxu0 %v207
    %282 = vmatprep.subr.mxu0 0.0
    %283 = vmatpush1.msra.mxu0 %v206
    %284 = vmatprep.subr.mxu0 0.0
    %285 = vmatpush1.msra.mxu0 %v205
    %286 = vmatprep.subr.mxu0 0.0
    %287 = vmatpush1.msra.mxu0 %v204
    %288 = vmatprep.subr.mxu0 0.0
    %289 = vmatpush1.msra.mxu0 %v203
    %290 = vmatprep.subr.mxu0 0.0
    %291 = vmatpush2.msra.mxu0 %v234
    %292 = vmatprep.subr.mxu0 0.0
    %293 = vmatpush2.msra.mxu0 %v233
    %294 = vmatprep.subr.mxu0 0.0
    %295 = vmatpush2.msra.mxu0 %v232
    %296 = vmatprep.subr.mxu0 0.0
    %297 = vmatpush2.msra.mxu0 %v231
    %298 = vmatprep.subr.mxu0 0.0
    %299 = vmatpush2.msra.mxu0 %v230
    %300 = vmatprep.subr.mxu0 0.0
    %301 = vmatpush2.msra.mxu0 %v229
    %302 = vmatprep.subr.mxu0 0.0
    %303 = vmatpush2.msra.mxu0 %v228
    %304 = vmatprep.subr.mxu0 0.0
    %305 = vmatpush2.msra.mxu0 %v227
    %306 = vmatprep.subr.mxu0 0.0
    %307 = vmatpush2.msra.mxu0 %v226
    %308 = vmatprep.subr.mxu0 0.0
    %309 = vmatpush2.msra.mxu0 %v225
    %310 = vmatprep.subr.mxu0 0.0
    %311 = vmatpush2.msra.mxu0 %v224
    %312 = vmatprep.subr.mxu0 0.0
    %313 = vmatpush2.msra.mxu0 %v223
    %314 = vmatprep.subr.mxu0 0.0
    %315 = vmatpush2.msra.mxu0 %v222
    %316 = vmatprep.subr.mxu0 0.0
    %317 = vmatpush2.msra.mxu0 %v221
    %318 = vmatprep.subr.mxu0 0.0
    %319 = vmatpush2.msra.mxu0 %v220
    %320 = vmatprep.subr.mxu0 0.0
    %321 = vmatpush2.msra.mxu0 %v219
    %322 = vmatprep.mubr.f32.mxu0 %v257
    %323 = vmatmul.mubr.f32.gmra.mxu0 %v256
    %v324 = vpop.f32.mrf.mxu0
    %v325 = vadd.f32 0.0, %v324
    %v326 = vpop.f32.mrf.mxu0
    %327 = vdwg.mxu0
    %v328 = vmul.f32 %v197, %v197
    %v329 = vmul.f32 %v199, %v199
    %v330 = vsel %vm240, %v328, 0.0
    %v331 = vrot.slane %v330, 4
    %v332 = vadd.f32 %v330, %v331
    %v333 = vrot.slane %v332, 2
    %v334 = vadd.f32 %v332, %v333
    %v335 = vrot.slane %v334, 1
    %v336 = vadd.f32 %v334, %v335
    %v337 = vsel %vm240, %v329, 0.0
    %v338 = vrot.slane %v337, 4
    %v339 = vadd.f32 %v337, %v338
    %v340 = vrot.slane %v339, 2
    %v341 = vadd.f32 %v339, %v340
    %v342 = vrot.slane %v341, 1
    %v343 = vadd.f32 %v341, %v342
    %v344 = vmul.f32 %v336, %v255
    %v345 = vmul.f32 %v343, %v255
    %346 = vmatprep.subr.mxu0 0.0
    %347 = vmatpush1.msra.mxu0 %v218
    %348 = vmatprep.subr.mxu0 0.0
    %349 = vmatpush1.msra.mxu0 %v217
    %350 = vmatprep.subr.mxu0 0.0
    %351 = vmatpush1.msra.mxu0 %v216
    %352 = vmatprep.subr.mxu0 0.0
    %353 = vmatpush1.msra.mxu0 %v215
    %354 = vmatprep.subr.mxu0 0.0
    %355 = vmatpush1.msra.mxu0 %v214
    %356 = vmatprep.subr.mxu0 0.0
    %357 = vmatpush1.msra.mxu0 %v213
    %358 = vmatprep.subr.mxu0 0.0
    %359 = vmatpush1.msra.mxu0 %v212
    %360 = vmatprep.subr.mxu0 0.0
    %361 = vmatpush1.msra.mxu0 %v211
    %362 = vmatprep.subr.mxu0 0.0
    %363 = vmatpush1.msra.mxu0 %v210
    %364 = vmatprep.subr.mxu0 0.0
    %365 = vmatpush1.msra.mxu0 %v209
    %366 = vmatprep.subr.mxu0 0.0
    %367 = vmatpush1.msra.mxu0 %v208
    %368 = vmatprep.subr.mxu0 0.0
    %369 = vmatpush1.msra.mxu0 %v207
    %370 = vmatprep.subr.mxu0 0.0
    %371 = vmatpush1.msra.mxu0 %v206
    %372 = vmatprep.subr.mxu0 0.0
    %373 = vmatpush1.msra.mxu0 %v205
    %374 = vmatprep.subr.mxu0 0.0
    %375 = vmatpush1.msra.mxu0 %v204
    %376 = vmatprep.subr.mxu0 0.0
    %377 = vmatpush1.msra.mxu0 %v203
    %378 = vmatprep.subr.mxu0 0.0
    %379 = vmatpush2.msra.mxu0 %v234
    %380 = vmatprep.subr.mxu0 0.0
    %381 = vmatpush2.msra.mxu0 %v233
    %382 = vmatprep.subr.mxu0 0.0
    %383 = vmatpush2.msra.mxu0 %v232
    %384 = vmatprep.subr.mxu0 0.0
    %385 = vmatpush2.msra.mxu0 %v231
    %386 = vmatprep.subr.mxu0 0.0
    %387 = vmatpush2.msra.mxu0 %v230
    %388 = vmatprep.subr.mxu0 0.0
    %389 = vmatpush2.msra.mxu0 %v229
    %390 = vmatprep.subr.mxu0 0.0
    %391 = vmatpush2.msra.mxu0 %v228
    %392 = vmatprep.subr.mxu0 0.0
    %393 = vmatpush2.msra.mxu0 %v227
    %394 = vmatprep.subr.mxu0 0.0
    %395 = vmatpush2.msra.mxu0 %v226
    %396 = vmatprep.subr.mxu0 0.0
    %397 = vmatpush2.msra.mxu0 %v225
    %398 = vmatprep.subr.mxu0 0.0
    %399 = vmatpush2.msra.mxu0 %v224
    %400 = vmatprep.subr.mxu0 0.0
    %401 = vmatpush2.msra.mxu0 %v223
    %402 = vmatprep.subr.mxu0 0.0
    %403 = vmatpush2.msra.mxu0 %v222
    %404 = vmatprep.subr.mxu0 0.0
    %405 = vmatpush2.msra.mxu0 %v221
    %406 = vmatprep.subr.mxu0 0.0
    %407 = vmatpush2.msra.mxu0 %v220
    %408 = vmatprep.subr.mxu0 0.0
    %409 = vmatpush2.msra.mxu0 %v219
    %410 = vmatprep.mubr.f32.mxu0 %v345
    %411 = vmatmul.mubr.f32.gmra.mxu0 %v344
    %v412 = vpop.f32.mrf.mxu0
    %v413 = vadd.f32 0.0, %v412
    %v414 = vpop.f32.mrf.mxu0
    %415 = vdwg.mxu0
    %v416 = vmul.f32 %v325, %v325
    %v417 = vsub.f32 %v413, %v416
    %v418 = vmax.f32 %v417, 0.0
    %v419 = vadd.f32 %v418, 1e-05
    %v420 = vrsqrt.pop %v419
    %vm421 = vcmask 130048
    %v423 = vsel %vm421, %v420, 0
    %425 = vmatprep.subr.mxu0 0.0
    %426 = vmatpush1.msra.mxu0 0.0
    %427 = vmatprep.subr.mxu0 0.0
    %428 = vmatpush1.msra.mxu0 0.0
    %429 = vmatprep.subr.mxu0 0.0
    %430 = vmatpush1.msra.mxu0 0.0
    %431 = vmatprep.subr.mxu0 0.0
    %432 = vmatpush1.msra.mxu0 0.0
    %433 = vmatprep.subr.mxu0 0.0
    %434 = vmatpush1.msra.mxu0 0.0
    %435 = vmatprep.subr.mxu0 0.0
    %436 = vmatpush1.msra.mxu0 0.0
    %437 = vmatprep.subr.mxu0 0.0
    %438 = vmatpush1.msra.mxu0 0.0
    %439 = vmatprep.subr.mxu0 0.0
    %440 = vmatpush1.msra.mxu0 0.0
    %441 = vmatprep.subr.mxu0 0.0
    %442 = vmatpush1.msra.mxu0 0.0
    %443 = vmatprep.subr.mxu0 0.0
    %444 = vmatpush1.msra.mxu0 0.0
    %445 = vmatprep.subr.mxu0 0.0
    %446 = vmatpush1.msra.mxu0 0.0
    %447 = vmatprep.subr.mxu0 0.0
    %448 = vmatpush1.msra.mxu0 0.0
    %449 = vmatprep.subr.mxu0 0.0
    %450 = vmatpush1.msra.mxu0 0.0
    %451 = vmatprep.subr.mxu0 0.0
    %452 = vmatpush1.msra.mxu0 0.0
    %453 = vmatprep.subr.mxu0 %v238
    %454 = vmatpush1.msra.mxu0 %v237
    %455 = vmatprep.subr.mxu0 %v236
    %456 = vmatpush1.msra.mxu0 %v235
    %457 = vmatprep.subr.mxu0 0.0
    %458 = vmatpush2.msra.mxu0 0.0
    %459 = vmatprep.subr.mxu0 0.0
    %460 = vmatpush2.msra.mxu0 0.0
    %461 = vmatprep.subr.mxu0 0.0
    %462 = vmatpush2.msra.mxu0 0.0
    %463 = vmatprep.subr.mxu0 0.0
    %464 = vmatpush2.msra.mxu0 0.0
    %465 = vmatprep.subr.mxu0 0.0
    %466 = vmatpush2.msra.mxu0 0.0
    %467 = vmatprep.subr.mxu0 0.0
    %468 = vmatpush2.msra.mxu0 0.0
    %469 = vmatprep.subr.mxu0 0.0
    %470 = vmatpush2.msra.mxu0 0.0
    %471 = vmatprep.subr.mxu0 0.0
    %472 = vmatpush2.msra.mxu0 0.0
    %473 = vmatprep.subr.mxu0 0.0
    %474 = vmatpush2.msra.mxu0 0.0
    %475 = vmatprep.subr.mxu0 0.0
    %476 = vmatpush2.msra.mxu0 0.0
    %477 = vmatprep.subr.mxu0 0.0
    %478 = vmatpush2.msra.mxu0 0.0
    %479 = vmatprep.subr.mxu0 0.0
    %480 = vmatpush2.msra.mxu0 0.0
    %481 = vmatprep.subr.mxu0 0.0
    %482 = vmatpush2.msra.mxu0 0.0
    %483 = vmatprep.subr.mxu0 0.0
    %484 = vmatpush2.msra.mxu0 0.0
    %485 = vmatprep.subr.mxu0 0.0
    %486 = vmatpush2.msra.mxu0 0.0
    %487 = vmatprep.subr.mxu0 0.0
    %488 = vmatpush2.msra.mxu0 0.0
    %489 = vmatprep.mubr.f32.mxu0 0.0
    %490 = vmatmul.mubr.f32.gmra.mxu0 %v423
    %v491 = vpop.f32.mrf.mxu0
    %v492 = vadd.f32 0.0, %v491
    %v493 = vpop.f32.mrf.mxu0
    %v494 = vadd.f32 0.0, %v493
    %495 = vdwg.mxu0
    %v496 = vmul.f32 %v325, %v420
    %v498 = vsel %vm421, %v496, 0
    %500 = vmatprep.subr.mxu0 0.0
    %501 = vmatpush1.msra.mxu0 0.0
    %502 = vmatprep.subr.mxu0 0.0
    %503 = vmatpush1.msra.mxu0 0.0
    %504 = vmatprep.subr.mxu0 0.0
    %505 = vmatpush1.msra.mxu0 0.0
    %506 = vmatprep.subr.mxu0 0.0
    %507 = vmatpush1.msra.mxu0 0.0
    %508 = vmatprep.subr.mxu0 0.0
    %509 = vmatpush1.msra.mxu0 0.0
    %510 = vmatprep.subr.mxu0 0.0
    %511 = vmatpush1.msra.mxu0 0.0
    %512 = vmatprep.subr.mxu0 0.0
    %513 = vmatpush1.msra.mxu0 0.0
    %514 = vmatprep.subr.mxu0 0.0
    %515 = vmatpush1.msra.mxu0 0.0
    %516 = vmatprep.subr.mxu0 0.0
    %517 = vmatpush1.msra.mxu0 0.0
    %518 = vmatprep.subr.mxu0 0.0
    %519 = vmatpush1.msra.mxu0 0.0
    %520 = vmatprep.subr.mxu0 0.0
    %521 = vmatpush1.msra.mxu0 0.0
    %522 = vmatprep.subr.mxu0 0.0
    %523 = vmatpush1.msra.mxu0 0.0
    %524 = vmatprep.subr.mxu0 0.0
    %525 = vmatpush1.msra.mxu0 0.0
    %526 = vmatprep.subr.mxu0 0.0
    %527 = vmatpush1.msra.mxu0 0.0
    %528 = vmatprep.subr.mxu0 %v238
    %529 = vmatpush1.msra.mxu0 %v237
    %530 = vmatprep.subr.mxu0 %v236
    %531 = vmatpush1.msra.mxu0 %v235
    %532 = vmatprep.subr.mxu0 0.0
    %533 = vmatpush2.msra.mxu0 0.0
    %534 = vmatprep.subr.mxu0 0.0
    %535 = vmatpush2.msra.mxu0 0.0
    %536 = vmatprep.subr.mxu0 0.0
    %537 = vmatpush2.msra.mxu0 0.0
    %538 = vmatprep.subr.mxu0 0.0
    %539 = vmatpush2.msra.mxu0 0.0
    %540 = vmatprep.subr.mxu0 0.0
    %541 = vmatpush2.msra.mxu0 0.0
    %542 = vmatprep.subr.mxu0 0.0
    %543 = vmatpush2.msra.mxu0 0.0
    %544 = vmatprep.subr.mxu0 0.0
    %545 = vmatpush2.msra.mxu0 0.0
    %546 = vmatprep.subr.mxu0 0.0
    %547 = vmatpush2.msra.mxu0 0.0
    %548 = vmatprep.subr.mxu0 0.0
    %549 = vmatpush2.msra.mxu0 0.0
    %550 = vmatprep.subr.mxu0 0.0
    %551 = vmatpush2.msra.mxu0 0.0
    %552 = vmatprep.subr.mxu0 0.0
    %553 = vmatpush2.msra.mxu0 0.0
    %554 = vmatprep.subr.mxu0 0.0
    %555 = vmatpush2.msra.mxu0 0.0
    %556 = vmatprep.subr.mxu0 0.0
    %557 = vmatpush2.msra.mxu0 0.0
    %558 = vmatprep.subr.mxu0 0.0
    %559 = vmatpush2.msra.mxu0 0.0
    %560 = vmatprep.subr.mxu0 0.0
    %561 = vmatpush2.msra.mxu0 0.0
    %562 = vmatprep.subr.mxu0 0.0
    %563 = vmatpush2.msra.mxu0 0.0
    %564 = vmatprep.mubr.f32.mxu0 0.0
    %565 = vmatmul.mubr.f32.gmra.mxu0 %v498
    %v566 = vpop.f32.mrf.mxu0
    %v567 = vadd.f32 0.0, %v566
    %v568 = vpop.f32.mrf.mxu0
    %v569 = vadd.f32 0.0, %v568
    %570 = vdwg.mxu0
    %v573 = vcombine.low %v567, %v569
    %v575 = vunpack.c.l.s4 1966171168
    %v576 = vunpack.c.0.s8 %v575
    %v577 = vlaneseq
    %v578 = vshrl.u32 %v577, 7
    %v579 = vsub.s32 %v576, %v578
    %v580 = vrot.slane %v573, %v579
    %v582 = vunpack.c.l.s4 1966171168
    %v583 = vunpack.c.0.s8 %v582
    %v584 = vlaneseq
    %v585 = vshrl.u32 %v584, 7
    %v586 = vsub.s32 %v583, %v585
    %v587 = vrot.slane %v580, %v586
    %v589 = vsub.f32 %v239, %v587
    %v590 = vlaneseq
    %v591 = vshrl.u32 %v590, 7
    %v592 = vsub.s32 0, %v591
    %v593 = vrot.slane %v492, %v592
    %v594 = vlaneseq
    %v595 = vshrl.u32 %v594, 7
    %v596 = vsub.s32 0, %v595
    %v597 = vrot.slane %v494, %v596
    %v598 = vmul.f32 %v197, %v593
    %v599 = vmul.f32 %v199, %v597
    %v601 = vlaneseq
    %v602 = vshrl.u32 %v601, 7
    %v603 = vsub.s32 0, %v602
    %v604 = vrot.slane %v589, %v603
    %v605 = vlaneseq
    %v606 = vshrl.u32 %v605, 7
    %v607 = vsub.s32 1, %v606
    %v608 = vrot.slane %v589, %v607
    %v611 = vadd.f32 %v598, %v604
    %v612 = vadd.f32 %v599, %v608
    %v613 = vmax.f32 %v611, 0.0
    %v614 = vmax.f32 %v612, 0.0
    %v615 = vld [vmem:[#allocation7] sm:$0xff]
    %v616 = vld [vmem:[#allocation7 + $0x8] sm:$0xff]
    %v617 = vld [vmem:[#allocation7 + $0x10] sm:$0xff]
    %v618 = vld [vmem:[#allocation7 + $0x18] sm:$0xff]
    %v619 = vld [vmem:[#allocation7 + $0x20] sm:$0xff]
    %v620 = vld [vmem:[#allocation7 + $0x28] sm:$0xff]
    %v621 = vld [vmem:[#allocation7 + $0x30] sm:$0xff]
    %v622 = vld [vmem:[#allocation7 + $0x38] sm:$0xff]
    %v623 = vld [vmem:[#allocation7 + $0x40] sm:$0xff]
    %v624 = vld [vmem:[#allocation7 + $0x48] sm:$0xff]
    %v625 = vld [vmem:[#allocation7 + $0x50] sm:$0xff]
    %v626 = vld [vmem:[#allocation7 + $0x58] sm:$0xff]
    %v627 = vld [vmem:[#allocation7 + $0x60] sm:$0xff]
    %v628 = vld [vmem:[#allocation7 + $0x68] sm:$0xff]
    %v629 = vld [vmem:[#allocation7 + $0x70] sm:$0xff]
    %v630 = vld [vmem:[#allocation7 + $0x78] sm:$0xff]
    %v631 = vld [vmem:[#allocation7 + $0x80] sm:$0xff]
    %v632 = vld [vmem:[#allocation7 + $0x88] sm:$0xff]
    %v633 = vld [vmem:[#allocation7 + $0x90] sm:$0xff]
    %v634 = vld [vmem:[#allocation7 + $0x98] sm:$0xff]
    %v635 = vld [vmem:[#allocation7 + $0xa0] sm:$0xff]
    %v636 = vld [vmem:[#allocation7 + $0xa8] sm:$0xff]
    %v637 = vld [vmem:[#allocation7 + $0xb0] sm:$0xff]
    %v638 = vld [vmem:[#allocation7 + $0xb8] sm:$0xff]
    %v639 = vld [vmem:[#allocation7 + $0xc0] sm:$0xff]
    %v640 = vld [vmem:[#allocation7 + $0xc8] sm:$0xff]
    %v641 = vld [vmem:[#allocation7 + $0xd0] sm:$0xff]
    %v642 = vld [vmem:[#allocation7 + $0xd8] sm:$0xff]
    %v643 = vld [vmem:[#allocation7 + $0xe0] sm:$0xff]
    %v644 = vld [vmem:[#allocation7 + $0xe8] sm:$0xff]
    %v645 = vld [vmem:[#allocation7 + $0xf0] sm:$0xff]
    %v646 = vld [vmem:[#allocation7 + $0xf8] sm:$0xff]
    %v647 = vld [vmem:[#allocation7 + $0x100] sm:$0xff]
    %v648 = vld [vmem:[#allocation7 + $0x108] sm:$0xff]
    %v649 = vld [vmem:[#allocation7 + $0x110] sm:$0xff]
    %v650 = vld [vmem:[#allocation7 + $0x118] sm:$0xff]
    %v651 = vld [vmem:[#allocation7 + $0x120] sm:$0xff]
    %v652 = vld [vmem:[#allocation7 + $0x128] sm:$0xff]
    %v653 = vld [vmem:[#allocation7 + $0x130] sm:$0xff]
    %v654 = vld [vmem:[#allocation7 + $0x138] sm:$0xff]
    %v655 = vld [vmem:[#allocation7 + $0x140] sm:$0xff]
    %v656 = vld [vmem:[#allocation7 + $0x148] sm:$0xff]
    %v657 = vld [vmem:[#allocation7 + $0x150] sm:$0xff]
    %v658 = vld [vmem:[#allocation7 + $0x158] sm:$0xff]
    %v659 = vld [vmem:[#allocation7 + $0x160] sm:$0xff]
    %v660 = vld [vmem:[#allocation7 + $0x168] sm:$0xff]
    %v661 = vld [vmem:[#allocation7 + $0x170] sm:$0xff]
    %v662 = vld [vmem:[#allocation7 + $0x178] sm:$0xff]
    %v663 = vld [vmem:[#allocation7 + $0x180] sm:$0xff]
    %v664 = vld [vmem:[#allocation7 + $0x188] sm:$0xff]
    %v665 = vld [vmem:[#allocation7 + $0x190] sm:$0xff]
    %v666 = vld [vmem:[#allocation7 + $0x198] sm:$0xff]
    %v667 = vld [vmem:[#allocation7 + $0x1a0] sm:$0xff]
    %v668 = vld [vmem:[#allocation7 + $0x1a8] sm:$0xff]
    %v669 = vld [vmem:[#allocation7 + $0x1b0] sm:$0xff]
    %v670 = vld [vmem:[#allocation7 + $0x1b8] sm:$0xff]
    %v671 = vld [vmem:[#allocation7 + $0x1c0] sm:$0xff]
    %v672 = vld [vmem:[#allocation7 + $0x1c8] sm:$0xff]
    %v673 = vld [vmem:[#allocation7 + $0x1d0] sm:$0xff]
    %v674 = vld [vmem:[#allocation7 + $0x1d8] sm:$0xff]
    %v675 = vld [vmem:[#allocation7 + $0x1e0] sm:$0xff]
    %v676 = vld [vmem:[#allocation7 + $0x1e8] sm:$0xff]
    %v677 = vld [vmem:[#allocation7 + $0x1f0] sm:$0xff]
    %v678 = vld [vmem:[#allocation7 + $0x1f8] sm:$0xff]
    %v679 = vpack.c.bf16 %v613, %v613
    %v680 = vpack.c.bf16 %v614, %v614
    %v745 = vunpack.c.l.b16 %v615
    %v746 = vunpack.c.h.b16 %v615
    %v747 = vunpack.c.l.b16 %v616
    %v748 = vunpack.c.h.b16 %v616
    %v749 = vunpack.c.l.b16 %v617
    %v750 = vunpack.c.h.b16 %v617
    %v751 = vunpack.c.l.b16 %v618
    %v752 = vunpack.c.h.b16 %v618
    %v753 = vunpack.c.l.b16 %v619
    %v754 = vunpack.c.h.b16 %v619
    %v755 = vunpack.c.l.b16 %v620
    %v756 = vunpack.c.h.b16 %v620
    %v757 = vunpack.c.l.b16 %v621
    %v758 = vunpack.c.h.b16 %v621
    %v759 = vunpack.c.l.b16 %v622
    %v760 = vunpack.c.h.b16 %v622
    %v761 = vunpack.c.l.b16 %v623
    %v762 = vunpack.c.h.b16 %v623
    %v763 = vunpack.c.l.b16 %v624
    %v764 = vunpack.c.h.b16 %v624
    %v765 = vunpack.c.l.b16 %v625
    %v766 = vunpack.c.h.b16 %v625
    %v767 = vunpack.c.l.b16 %v626
    %v768 = vunpack.c.h.b16 %v626
    %v769 = vunpack.c.l.b16 %v627
    %v770 = vunpack.c.h.b16 %v627
    %v771 = vunpack.c.l.b16 %v628
    %v772 = vunpack.c.h.b16 %v628
    %v773 = vunpack.c.l.b16 %v629
    %v774 = vunpack.c.h.b16 %v629
    %v775 = vunpack.c.l.b16 %v630
    %v776 = vunpack.c.h.b16 %v630
    %v777 = vunpack.c.l.b16 %v631
    %v778 = vunpack.c.h.b16 %v631
    %v779 = vunpack.c.l.b16 %v632
    %v780 = vunpack.c.h.b16 %v632
    %v781 = vunpack.c.l.b16 %v633
    %v782 = vunpack.c.h.b16 %v633
    %v783 = vunpack.c.l.b16 %v634
    %v784 = vunpack.c.h.b16 %v634
    %v785 = vunpack.c.l.b16 %v635
    %v786 = vunpack.c.h.b16 %v635
    %v787 = vunpack.c.l.b16 %v636
    %v788 = vunpack.c.h.b16 %v636
    %v789 = vunpack.c.l.b16 %v637
    %v790 = vunpack.c.h.b16 %v637
    %v791 = vunpack.c.l.b16 %v638
    %v792 = vunpack.c.h.b16 %v638
    %v793 = vunpack.c.l.b16 %v639
    %v794 = vunpack.c.h.b16 %v639
    %v795 = vunpack.c.l.b16 %v640
    %v796 = vunpack.c.h.b16 %v640
    %v797 = vunpack.c.l.b16 %v641
    %v798 = vunpack.c.h.b16 %v641
    %v799 = vunpack.c.l.b16 %v642
    %v800 = vunpack.c.h.b16 %v642
    %v801 = vunpack.c.l.b16 %v643
    %v802 = vunpack.c.h.b16 %v643
    %v803 = vunpack.c.l.b16 %v644
    %v804 = vunpack.c.h.b16 %v644
    %v805 = vunpack.c.l.b16 %v645
    %v806 = vunpack.c.h.b16 %v645
    %v807 = vunpack.c.l.b16 %v646
    %v808 = vunpack.c.h.b16 %v646
    %v809 = vunpack.c.l.b16 %v647
    %v810 = vunpack.c.h.b16 %v647
    %v811 = vunpack.c.l.b16 %v648
    %v812 = vunpack.c.h.b16 %v648
    %v813 = vunpack.c.l.b16 %v649
    %v814 = vunpack.c.h.b16 %v649
    %v815 = vunpack.c.l.b16 %v650
    %v816 = vunpack.c.h.b16 %v650
    %v817 = vunpack.c.l.b16 %v651
    %v818 = vunpack.c.h.b16 %v651
    %v819 = vunpack.c.l.b16 %v652
    %v820 = vunpack.c.h.b16 %v652
    %v821 = vunpack.c.l.b16 %v653
    %v822 = vunpack.c.h.b16 %v653
    %v823 = vunpack.c.l.b16 %v654
    %v824 = vunpack.c.h.b16 %v654
    %v825 = vunpack.c.l.b16 %v655
    %v826 = vunpack.c.h.b16 %v655
    %v827 = vunpack.c.l.b16 %v656
    %v828 = vunpack.c.h.b16 %v656
    %v829 = vunpack.c.l.b16 %v657
    %v830 = vunpack.c.h.b16 %v657
    %v831 = vunpack.c.l.b16 %v658
    %v832 = vunpack.c.h.b16 %v658
    %v833 = vunpack.c.l.b16 %v659
    %v834 = vunpack.c.h.b16 %v659
    %v835 = vunpack.c.l.b16 %v660
    %v836 = vunpack.c.h.b16 %v660
    %v837 = vunpack.c.l.b16 %v661
    %v838 = vunpack.c.h.b16 %v661
    %v839 = vunpack.c.l.b16 %v662
    %v840 = vunpack.c.h.b16 %v662
    %v841 = vunpack.c.l.b16 %v663
    %v842 = vunpack.c.h.b16 %v663
    %v843 = vunpack.c.l.b16 %v664
    %v844 = vunpack.c.h.b16 %v664
    %v845 = vunpack.c.l.b16 %v665
    %v846 = vunpack.c.h.b16 %v665
    %v847 = vunpack.c.l.b16 %v666
    %v848 = vunpack.c.h.b16 %v666
    %v849 = vunpack.c.l.b16 %v667
    %v850 = vunpack.c.h.b16 %v667
    %v851 = vunpack.c.l.b16 %v668
    %v852 = vunpack.c.h.b16 %v668
    %v853 = vunpack.c.l.b16 %v669
    %v854 = vunpack.c.h.b16 %v669
    %v855 = vunpack.c.l.b16 %v670
    %v856 = vunpack.c.h.b16 %v670
    %v857 = vunpack.c.l.b16 %v671
    %v858 = vunpack.c.h.b16 %v671
    %v859 = vunpack.c.l.b16 %v672
    %v860 = vunpack.c.h.b16 %v672
    %v861 = vunpack.c.l.b16 %v673
    %v862 = vunpack.c.h.b16 %v673
    %v863 = vunpack.c.l.b16 %v674
    %v864 = vunpack.c.h.b16 %v674
    %v865 = vunpack.c.l.b16 %v675
    %v866 = vunpack.c.h.b16 %v675
    %v867 = vunpack.c.l.b16 %v676
    %v868 = vunpack.c.h.b16 %v676
    %v869 = vunpack.c.l.b16 %v677
    %v870 = vunpack.c.h.b16 %v677
    %v871 = vunpack.c.l.b16 %v678
    %v872 = vunpack.c.h.b16 %v678
    %v873 = vpack.c.b16 %v749, %v745
    %v874 = vpack.c.b16 %v750, %v746
    %v875 = vpack.c.b16 %v751, %v747
    %v876 = vpack.c.b16 %v752, %v748
    %v877 = vpack.c.b16 %v757, %v753
    %v878 = vpack.c.b16 %v758, %v754
    %v879 = vpack.c.b16 %v759, %v755
    %v880 = vpack.c.b16 %v760, %v756
    %v881 = vpack.c.b16 %v765, %v761
    %v882 = vpack.c.b16 %v766, %v762
    %v883 = vpack.c.b16 %v767, %v763
    %v884 = vpack.c.b16 %v768, %v764
    %v885 = vpack.c.b16 %v773, %v769
    %v886 = vpack.c.b16 %v774, %v770
    %v887 = vpack.c.b16 %v775, %v771
    %v888 = vpack.c.b16 %v776, %v772
    %v889 = vpack.c.b16 %v781, %v777
    %v890 = vpack.c.b16 %v782, %v778
    %v891 = vpack.c.b16 %v783, %v779
    %v892 = vpack.c.b16 %v784, %v780
    %v893 = vpack.c.b16 %v789, %v785
    %v894 = vpack.c.b16 %v790, %v786
    %v895 = vpack.c.b16 %v791, %v787
    %v896 = vpack.c.b16 %v792, %v788
    %v897 = vpack.c.b16 %v797, %v793
    %v898 = vpack.c.b16 %v798, %v794
    %v899 = vpack.c.b16 %v799, %v795
    %v900 = vpack.c.b16 %v800, %v796
    %v901 = vpack.c.b16 %v805, %v801
    %v902 = vpack.c.b16 %v806, %v802
    %v903 = vpack.c.b16 %v807, %v803
    %v904 = vpack.c.b16 %v808, %v804
    %v905 = vpack.c.b16 %v813, %v809
    %v906 = vpack.c.b16 %v814, %v810
    %v907 = vpack.c.b16 %v815, %v811
    %v908 = vpack.c.b16 %v816, %v812
    %v909 = vpack.c.b16 %v821, %v817
    %v910 = vpack.c.b16 %v822, %v818
    %v911 = vpack.c.b16 %v823, %v819
    %v912 = vpack.c.b16 %v824, %v820
    %v913 = vpack.c.b16 %v829, %v825
    %v914 = vpack.c.b16 %v830, %v826
    %v915 = vpack.c.b16 %v831, %v827
    %v916 = vpack.c.b16 %v832, %v828
    %v917 = vpack.c.b16 %v837, %v833
    %v918 = vpack.c.b16 %v838, %v834
    %v919 = vpack.c.b16 %v839, %v835
    %v920 = vpack.c.b16 %v840, %v836
    %v921 = vpack.c.b16 %v845, %v841
    %v922 = vpack.c.b16 %v846, %v842
    %v923 = vpack.c.b16 %v847, %v843
    %v924 = vpack.c.b16 %v848, %v844
    %v925 = vpack.c.b16 %v853, %v849
    %v926 = vpack.c.b16 %v854, %v850
    %v927 = vpack.c.b16 %v855, %v851
    %v928 = vpack.c.b16 %v856, %v852
    %v929 = vpack.c.b16 %v861, %v857
    %v930 = vpack.c.b16 %v862, %v858
    %v931 = vpack.c.b16 %v863, %v859
    %v932 = vpack.c.b16 %v864, %v860
    %v933 = vpack.c.b16 %v869, %v865
    %v934 = vpack.c.b16 %v870, %v866
    %v935 = vpack.c.b16 %v871, %v867
    %v936 = vpack.c.b16 %v872, %v868
    %1001 = vmatprep.subr.bf16.mxu0 %v902
    %1002 = vmatpush1.bf16.msra.mxu0 %v901
    %1003 = vmatprep.subr.bf16.mxu0 %v898
    %1004 = vmatpush1.bf16.msra.mxu0 %v897
    %1005 = vmatprep.subr.bf16.mxu0 %v894
    %1006 = vmatpush1.bf16.msra.mxu0 %v893
    %1007 = vmatprep.subr.bf16.mxu0 %v890
    %1008 = vmatpush1.bf16.msra.mxu0 %v889
    %1009 = vmatprep.subr.bf16.mxu0 %v886
    %1010 = vmatpush1.bf16.msra.mxu0 %v885
    %1011 = vmatprep.subr.bf16.mxu0 %v882
    %1012 = vmatpush1.bf16.msra.mxu0 %v881
    %1013 = vmatprep.subr.bf16.mxu0 %v878
    %1014 = vmatpush1.bf16.msra.mxu0 %v877
    %1015 = vmatprep.subr.bf16.mxu0 %v874
    %1016 = vmatpush1.bf16.msra.mxu0 %v873
    %1017 = vmatprep.subr.bf16.mxu0 %v934
    %1018 = vmatpush2.bf16.msra.mxu0 %v933
    %1019 = vmatprep.subr.bf16.mxu0 %v930
    %1020 = vmatpush2.bf16.msra.mxu0 %v929
    %1021 = vmatprep.subr.bf16.mxu0 %v926
    %1022 = vmatpush2.bf16.msra.mxu0 %v925
    %1023 = vmatprep.subr.bf16.mxu0 %v922
    %1024 = vmatpush2.bf16.msra.mxu0 %v921
    %1025 = vmatprep.subr.bf16.mxu0 %v918
    %1026 = vmatpush2.bf16.msra.mxu0 %v917
    %1027 = vmatprep.subr.bf16.mxu0 %v914
    %1028 = vmatpush2.bf16.msra.mxu0 %v913
    %1029 = vmatprep.subr.bf16.mxu0 %v910
    %1030 = vmatpush2.bf16.msra.mxu0 %v909
    %1031 = vmatprep.subr.bf16.mxu0 %v906
    %1032 = vmatpush2.bf16.msra.mxu0 %v905
    %1033 = vmatprep.mubr.bf16.mxu0 %v680
    %1034 = vmatmul.mubr.bf16.gmra.mxu0 %v679
    %v1035 = vpop.f32.mrf.mxu0
    %v1036 = vadd.f32 0.0, %v1035
    %v1037 = vpop.f32.mrf.mxu0
    %v1038 = vadd.f32 0.0, %v1037
    %v1039 = vpop.f32.mrf.mxu0
    %v1040 = vpop.f32.mrf.mxu0
    %1041 = vdwg.mxu0
    %1042 = vmatprep.subr.bf16.mxu0 %v904
    %1043 = vmatpush1.bf16.msra.mxu0 %v903
    %1044 = vmatprep.subr.bf16.mxu0 %v900
    %1045 = vmatpush1.bf16.msra.mxu0 %v899
    %1046 = vmatprep.subr.bf16.mxu0 %v896
    %1047 = vmatpush1.bf16.msra.mxu0 %v895
    %1048 = vmatprep.subr.bf16.mxu0 %v892
    %1049 = vmatpush1.bf16.msra.mxu0 %v891
    %1050 = vmatprep.subr.bf16.mxu0 %v888
    %1051 = vmatpush1.bf16.msra.mxu0 %v887
    %1052 = vmatprep.subr.bf16.mxu0 %v884
    %1053 = vmatpush1.bf16.msra.mxu0 %v883
    %1054 = vmatprep.subr.bf16.mxu0 %v880
    %1055 = vmatpush1.bf16.msra.mxu0 %v879
    %1056 = vmatprep.subr.bf16.mxu0 %v876
    %1057 = vmatpush1.bf16.msra.mxu0 %v875
    %1058 = vmatprep.subr.bf16.mxu0 %v936
    %1059 = vmatpush2.bf16.msra.mxu0 %v935
    %1060 = vmatprep.subr.bf16.mxu0 %v932
    %1061 = vmatpush2.bf16.msra.mxu0 %v931
    %1062 = vmatprep.subr.bf16.mxu0 %v928
    %1063 = vmatpush2.bf16.msra.mxu0 %v927
    %1064 = vmatprep.subr.bf16.mxu0 %v924
    %1065 = vmatpush2.bf16.msra.mxu0 %v923
    %1066 = vmatprep.subr.bf16.mxu0 %v920
    %1067 = vmatpush2.bf16.msra.mxu0 %v919
    %1068 = vmatprep.subr.bf16.mxu0 %v916
    %1069 = vmatpush2.bf16.msra.mxu0 %v915
    %1070 = vmatprep.subr.bf16.mxu0 %v912
    %1071 = vmatpush2.bf16.msra.mxu0 %v911
    %1072 = vmatprep.subr.bf16.mxu0 %v908
    %1073 = vmatpush2.bf16.msra.mxu0 %v907
    %1074 = vmatprep.mubr.bf16.mxu0 %v680
    %1075 = vmatmul.mubr.bf16.gmra.mxu0 %v679
    %v1076 = vpop.f32.mrf.mxu0
    %v1077 = vadd.f32 0.0, %v1076
    %v1078 = vpop.f32.mrf.mxu0
    %v1079 = vadd.f32 0.0, %v1078
    %v1080 = vpop.f32.mrf.mxu0
    %v1081 = vpop.f32.mrf.mxu0
    %1082 = vdwg.mxu0
    %v1083 = vld [vmem:[#allocation9] sm:$0xff]
    %v1084 = vld [vmem:[#allocation9 + $0x8] sm:$0xff]
    %v1085 = vld [vmem:[#allocation9 + $0x10] sm:$0xff]
    %v1086 = vld [vmem:[#allocation9 + $0x18] sm:$0xff]
    %v1087 = vld [vmem:[#allocation9 + $0x20] sm:$0xff]
    %v1088 = vld [vmem:[#allocation9 + $0x28] sm:$0xff]
    %v1089 = vld [vmem:[#allocation9 + $0x30] sm:$0xff]
    %v1090 = vld [vmem:[#allocation9 + $0x38] sm:$0xff]
    %v1091 = vld [vmem:[#allocation9 + $0x40] sm:$0xff]
    %v1092 = vld [vmem:[#allocation9 + $0x48] sm:$0xff]
    %v1093 = vld [vmem:[#allocation9 + $0x50] sm:$0xff]
    %v1094 = vld [vmem:[#allocation9 + $0x58] sm:$0xff]
    %v1095 = vld [vmem:[#allocation9 + $0x60] sm:$0xff]
    %v1096 = vld [vmem:[#allocation9 + $0x68] sm:$0xff]
    %v1097 = vld [vmem:[#allocation9 + $0x70] sm:$0xff]
    %v1098 = vld [vmem:[#allocation9 + $0x78] sm:$0xff]
    %v1099 = vld [vmem:[#allocation9 + $0x80] sm:$0xff]
    %v1100 = vld [vmem:[#allocation9 + $0x88] sm:$0xff]
    %v1101 = vld [vmem:[#allocation9 + $0x90] sm:$0xff]
    %v1102 = vld [vmem:[#allocation9 + $0x98] sm:$0xff]
    %v1103 = vld [vmem:[#allocation9 + $0xa0] sm:$0xff]
    %v1104 = vld [vmem:[#allocation9 + $0xa8] sm:$0xff]
    %v1105 = vld [vmem:[#allocation9 + $0xb0] sm:$0xff]
    %v1106 = vld [vmem:[#allocation9 + $0xb8] sm:$0xff]
    %v1107 = vld [vmem:[#allocation9 + $0xc0] sm:$0xff]
    %v1108 = vld [vmem:[#allocation9 + $0xc8] sm:$0xff]
    %v1109 = vld [vmem:[#allocation9 + $0xd0] sm:$0xff]
    %v1110 = vld [vmem:[#allocation9 + $0xd8] sm:$0xff]
    %v1111 = vld [vmem:[#allocation9 + $0xe0] sm:$0xff]
    %v1112 = vld [vmem:[#allocation9 + $0xe8] sm:$0xff]
    %v1113 = vld [vmem:[#allocation9 + $0xf0] sm:$0xff]
    %v1114 = vld [vmem:[#allocation9 + $0xf8] sm:$0xff]
    %v1115 = vld [vmem:[#allocation9 + $0x100] sm:$0xff]
    %v1116 = vld [vmem:[#allocation9 + $0x108] sm:$0xff]
    %v1117 = vld [vmem:[#allocation9 + $0x110] sm:$0xff]
    %v1118 = vld [vmem:[#allocation9 + $0x118] sm:$0xff]
    %v1119 = vld [vmem:[#allocation9 + $0x120] sm:$0xff]
    %v1120 = vld [vmem:[#allocation9 + $0x128] sm:$0xff]
    %v1121 = vld [vmem:[#allocation9 + $0x130] sm:$0xff]
    %v1122 = vld [vmem:[#allocation9 + $0x138] sm:$0xff]
    %v1123 = vld [vmem:[#allocation9 + $0x140] sm:$0xff]
    %v1124 = vld [vmem:[#allocation9 + $0x148] sm:$0xff]
    %v1125 = vld [vmem:[#allocation9 + $0x150] sm:$0xff]
    %v1126 = vld [vmem:[#allocation9 + $0x158] sm:$0xff]
    %v1127 = vld [vmem:[#allocation9 + $0x160] sm:$0xff]
    %v1128 = vld [vmem:[#allocation9 + $0x168] sm:$0xff]
    %v1129 = vld [vmem:[#allocation9 + $0x170] sm:$0xff]
    %v1130 = vld [vmem:[#allocation9 + $0x178] sm:$0xff]
    %v1131 = vld [vmem:[#allocation9 + $0x180] sm:$0xff]
    %v1132 = vld [vmem:[#allocation9 + $0x188] sm:$0xff]
    %v1133 = vld [vmem:[#allocation9 + $0x190] sm:$0xff]
    %v1134 = vld [vmem:[#allocation9 + $0x198] sm:$0xff]
    %v1135 = vld [vmem:[#allocation9 + $0x1a0] sm:$0xff]
    %v1136 = vld [vmem:[#allocation9 + $0x1a8] sm:$0xff]
    %v1137 = vld [vmem:[#allocation9 + $0x1b0] sm:$0xff]
    %v1138 = vld [vmem:[#allocation9 + $0x1b8] sm:$0xff]
    %v1139 = vld [vmem:[#allocation9 + $0x1c0] sm:$0xff]
    %v1140 = vld [vmem:[#allocation9 + $0x1c8] sm:$0xff]
    %v1141 = vld [vmem:[#allocation9 + $0x1d0] sm:$0xff]
    %v1142 = vld [vmem:[#allocation9 + $0x1d8] sm:$0xff]
    %v1143 = vld [vmem:[#allocation9 + $0x1e0] sm:$0xff]
    %v1144 = vld [vmem:[#allocation9 + $0x1e8] sm:$0xff]
    %v1145 = vld [vmem:[#allocation9 + $0x1f0] sm:$0xff]
    %v1146 = vld [vmem:[#allocation9 + $0x1f8] sm:$0xff]
    %v1147 = vld [vmem:[#allocation10] sm:$0xff]
    %v1148 = vld [vmem:[#allocation10 + $0x8] sm:$0xff]
    %v1149 = vld [vmem:[#allocation10 + $0x10] sm:$0xff]
    %v1150 = vld [vmem:[#allocation10 + $0x18] sm:$0xff]
    %v1151 = vld [vmem:[%s8] sm:$0xf]
    %v1152 = vsel %vm240, %v1036, 0.0
    %v1153 = vrot.slane %v1152, 4
    %v1154 = vadd.f32 %v1152, %v1153
    %v1155 = vrot.slane %v1154, 2
    %v1156 = vadd.f32 %v1154, %v1155
    %v1157 = vrot.slane %v1156, 1
    %v1158 = vadd.f32 %v1156, %v1157
    %v1159 = vsel %vm240, %v1038, 0.0
    %v1160 = vrot.slane %v1159, 4
    %v1161 = vadd.f32 %v1159, %v1160
    %v1162 = vrot.slane %v1161, 2
    %v1163 = vadd.f32 %v1161, %v1162
    %v1164 = vrot.slane %v1163, 1
    %v1165 = vadd.f32 %v1163, %v1164
    %v1166 = vsel %vm240, %v1077, 0.0
    %v1167 = vrot.slane %v1166, 4
    %v1168 = vadd.f32 %v1166, %v1167
    %v1169 = vrot.slane %v1168, 2
    %v1170 = vadd.f32 %v1168, %v1169
    %v1171 = vrot.slane %v1170, 1
    %v1172 = vadd.f32 %v1170, %v1171
    %v1173 = vsel %vm240, %v1079, 0.0
    %v1174 = vrot.slane %v1173, 4
    %v1175 = vadd.f32 %v1173, %v1174
    %v1176 = vrot.slane %v1175, 2
    %v1177 = vadd.f32 %v1175, %v1176
    %v1178 = vrot.slane %v1177, 1
    %v1179 = vadd.f32 %v1177, %v1178
    %v1180 = vmul.f32 %v1158, %v255
    %v1181 = vmul.f32 %v1165, %v255
    %v1182 = vmul.f32 %v1172, %v255
    %v1183 = vmul.f32 %v1179, %v255
    %1184 = vmatprep.subr.mxu0 0.0
    %1185 = vmatpush1.msra.mxu0 %v1098
    %1186 = vmatprep.subr.mxu0 0.0
    %1187 = vmatpush1.msra.mxu0 %v1097
    %1188 = vmatprep.subr.mxu0 0.0
    %1189 = vmatpush1.msra.mxu0 %v1096
    %1190 = vmatprep.subr.mxu0 0.0
    %1191 = vmatpush1.msra.mxu0 %v1095
    %1192 = vmatprep.subr.mxu0 0.0
    %1193 = vmatpush1.msra.mxu0 %v1094
    %1194 = vmatprep.subr.mxu0 0.0
    %1195 = vmatpush1.msra.mxu0 %v1093
    %1196 = vmatprep.subr.mxu0 0.0
    %1197 = vmatpush1.msra.mxu0 %v1092
    %1198 = vmatprep.subr.mxu0 0.0
    %1199 = vmatpush1.msra.mxu0 %v1091
    %1200 = vmatprep.subr.mxu0 0.0
    %1201 = vmatpush1.msra.mxu0 %v1090
    %1202 = vmatprep.subr.mxu0 0.0
    %1203 = vmatpush1.msra.mxu0 %v1089
    %1204 = vmatprep.subr.mxu0 0.0
    %1205 = vmatpush1.msra.mxu0 %v1088
    %1206 = vmatprep.subr.mxu0 0.0
    %1207 = vmatpush1.msra.mxu0 %v1087
    %1208 = vmatprep.subr.mxu0 0.0
    %1209 = vmatpush1.msra.mxu0 %v1086
    %1210 = vmatprep.subr.mxu0 0.0
    %1211 = vmatpush1.msra.mxu0 %v1085
    %1212 = vmatprep.subr.mxu0 0.0
    %1213 = vmatpush1.msra.mxu0 %v1084
    %1214 = vmatprep.subr.mxu0 0.0
    %1215 = vmatpush1.msra.mxu0 %v1083
    %1216 = vmatprep.subr.mxu0 0.0
    %1217 = vmatpush2.msra.mxu0 %v1114
    %1218 = vmatprep.subr.mxu0 0.0
    %1219 = vmatpush2.msra.mxu0 %v1113
    %1220 = vmatprep.subr.mxu0 0.0
    %1221 = vmatpush2.msra.mxu0 %v1112
    %1222 = vmatprep.subr.mxu0 0.0
    %1223 = vmatpush2.msra.mxu0 %v1111
    %1224 = vmatprep.subr.mxu0 0.0
    %1225 = vmatpush2.msra.mxu0 %v1110
    %1226 = vmatprep.subr.mxu0 0.0
    %1227 = vmatpush2.msra.mxu0 %v1109
    %1228 = vmatprep.subr.mxu0 0.0
    %1229 = vmatpush2.msra.mxu0 %v1108
    %1230 = vmatprep.subr.mxu0 0.0
    %1231 = vmatpush2.msra.mxu0 %v1107
    %1232 = vmatprep.subr.mxu0 0.0
    %1233 = vmatpush2.msra.mxu0 %v1106
    %1234 = vmatprep.subr.mxu0 0.0
    %1235 = vmatpush2.msra.mxu0 %v1105
    %1236 = vmatprep.subr.mxu0 0.0
    %1237 = vmatpush2.msra.mxu0 %v1104
    %1238 = vmatprep.subr.mxu0 0.0
    %1239 = vmatpush2.msra.mxu0 %v1103
    %1240 = vmatprep.subr.mxu0 0.0
    %1241 = vmatpush2.msra.mxu0 %v1102
    %1242 = vmatprep.subr.mxu0 0.0
    %1243 = vmatpush2.msra.mxu0 %v1101
    %1244 = vmatprep.subr.mxu0 0.0
    %1245 = vmatpush2.msra.mxu0 %v1100
    %1246 = vmatprep.subr.mxu0 0.0
    %1247 = vmatpush2.msra.mxu0 %v1099
    %1248 = vmatprep.mubr.f32.mxu0 %v1181
    %1249 = vmatmul.mubr.f32.gmra.mxu0 %v1180
    %v1250 = vpop.f32.mrf.mxu0
    %v1251 = vadd.f32 0.0, %v1250
    %v1252 = vpop.f32.mrf.mxu0
    %1253 = vdwg.mxu0
    %1254 = vmatprep.subr.mxu0 0.0
    %1255 = vmatpush1.msra.mxu0 %v1130
    %1256 = vmatprep.subr.mxu0 0.0
    %1257 = vmatpush1.msra.mxu0 %v1129
    %1258 = vmatprep.subr.mxu0 0.0
    %1259 = vmatpush1.msra.mxu0 %v1128
    %1260 = vmatprep.subr.mxu0 0.0
    %1261 = vmatpush1.msra.mxu0 %v1127
    %1262 = vmatprep.subr.mxu0 0.0
    %1263 = vmatpush1.msra.mxu0 %v1126
    %1264 = vmatprep.subr.mxu0 0.0
    %1265 = vmatpush1.msra.mxu0 %v1125
    %1266 = vmatprep.subr.mxu0 0.0
    %1267 = vmatpush1.msra.mxu0 %v1124
    %1268 = vmatprep.subr.mxu0 0.0
    %1269 = vmatpush1.msra.mxu0 %v1123
    %1270 = vmatprep.subr.mxu0 0.0
    %1271 = vmatpush1.msra.mxu0 %v1122
    %1272 = vmatprep.subr.mxu0 0.0
    %1273 = vmatpush1.msra.mxu0 %v1121
    %1274 = vmatprep.subr.mxu0 0.0
    %1275 = vmatpush1.msra.mxu0 %v1120
    %1276 = vmatprep.subr.mxu0 0.0
    %1277 = vmatpush1.msra.mxu0 %v1119
    %1278 = vmatprep.subr.mxu0 0.0
    %1279 = vmatpush1.msra.mxu0 %v1118
    %1280 = vmatprep.subr.mxu0 0.0
    %1281 = vmatpush1.msra.mxu0 %v1117
    %1282 = vmatprep.subr.mxu0 0.0
    %1283 = vmatpush1.msra.mxu0 %v1116
    %1284 = vmatprep.subr.mxu0 0.0
    %1285 = vmatpush1.msra.mxu0 %v1115
    %1286 = vmatprep.subr.mxu0 0.0
    %1287 = vmatpush2.msra.mxu0 %v1146
    %1288 = vmatprep.subr.mxu0 0.0
    %1289 = vmatpush2.msra.mxu0 %v1145
    %1290 = vmatprep.subr.mxu0 0.0
    %1291 = vmatpush2.msra.mxu0 %v1144
    %1292 = vmatprep.subr.mxu0 0.0
    %1293 = vmatpush2.msra.mxu0 %v1143
    %1294 = vmatprep.subr.mxu0 0.0
    %1295 = vmatpush2.msra.mxu0 %v1142
    %1296 = vmatprep.subr.mxu0 0.0
    %1297 = vmatpush2.msra.mxu0 %v1141
    %1298 = vmatprep.subr.mxu0 0.0
    %1299 = vmatpush2.msra.mxu0 %v1140
    %1300 = vmatprep.subr.mxu0 0.0
    %1301 = vmatpush2.msra.mxu0 %v1139
    %1302 = vmatprep.subr.mxu0 0.0
    %1303 = vmatpush2.msra.mxu0 %v1138
    %1304 = vmatprep.subr.mxu0 0.0
    %1305 = vmatpush2.msra.mxu0 %v1137
    %1306 = vmatprep.subr.mxu0 0.0
    %1307 = vmatpush2.msra.mxu0 %v1136
    %1308 = vmatprep.subr.mxu0 0.0
    %1309 = vmatpush2.msra.mxu0 %v1135
    %1310 = vmatprep.subr.mxu0 0.0
    %1311 = vmatpush2.msra.mxu0 %v1134
    %1312 = vmatprep.subr.mxu0 0.0
    %1313 = vmatpush2.msra.mxu0 %v1133
    %1314 = vmatprep.subr.mxu0 0.0
    %1315 = vmatpush2.msra.mxu0 %v1132
    %1316 = vmatprep.subr.mxu0 0.0
    %1317 = vmatpush2.msra.mxu0 %v1131
    %1318 = vmatprep.mubr.f32.mxu0 %v1183
    %1319 = vmatmul.mubr.f32.gmra.mxu0 %v1182
    %v1320 = vpop.f32.mrf.mxu0
    %v1321 = vadd.f32 %v1251, %v1320
    %v1322 = vpop.f32.mrf.mxu0
    %1323 = vdwg.mxu0
    %v1324 = vmul.f32 %v1036, %v1036
    %v1325 = vmul.f32 %v1038, %v1038
    %v1326 = vmul.f32 %v1077, %v1077
    %v1327 = vmul.f32 %v1079, %v1079
    %v1328 = vsel %vm240, %v1324, 0.0
    %v1329 = vrot.slane %v1328, 4
    %v1330 = vadd.f32 %v1328, %v1329
    %v1331 = vrot.slane %v1330, 2
    %v1332 = vadd.f32 %v1330, %v1331
    %v1333 = vrot.slane %v1332, 1
    %v1334 = vadd.f32 %v1332, %v1333
    %v1335 = vsel %vm240, %v1325, 0.0
    %v1336 = vrot.slane %v1335, 4
    %v1337 = vadd.f32 %v1335, %v1336
    %v1338 = vrot.slane %v1337, 2
    %v1339 = vadd.f32 %v1337, %v1338
    %v1340 = vrot.slane %v1339, 1
    %v1341 = vadd.f32 %v1339, %v1340
    %v1342 = vsel %vm240, %v1326, 0.0
    %v1343 = vrot.slane %v1342, 4
    %v1344 = vadd.f32 %v1342, %v1343
    %v1345 = vrot.slane %v1344, 2
    %v1346 = vadd.f32 %v1344, %v1345
    %v1347 = vrot.slane %v1346, 1
    %v1348 = vadd.f32 %v1346, %v1347
    %v1349 = vsel %vm240, %v1327, 0.0
    %v1350 = vrot.slane %v1349, 4
    %v1351 = vadd.f32 %v1349, %v1350
    %v1352 = vrot.slane %v1351, 2
    %v1353 = vadd.f32 %v1351, %v1352
    %v1354 = vrot.slane %v1353, 1
    %v1355 = vadd.f32 %v1353, %v1354
    %v1356 = vmul.f32 %v1334, %v255
    %v1357 = vmul.f32 %v1341, %v255
    %v1358 = vmul.f32 %v1348, %v255
    %v1359 = vmul.f32 %v1355, %v255
    %1360 = vmatprep.subr.mxu0 0.0
    %1361 = vmatpush1.msra.mxu0 %v1098
    %1362 = vmatprep.subr.mxu0 0.0
    %1363 = vmatpush1.msra.mxu0 %v1097
    %1364 = vmatprep.subr.mxu0 0.0
    %1365 = vmatpush1.msra.mxu0 %v1096
    %1366 = vmatprep.subr.mxu0 0.0
    %1367 = vmatpush1.msra.mxu0 %v1095
    %1368 = vmatprep.subr.mxu0 0.0
    %1369 = vmatpush1.msra.mxu0 %v1094
    %1370 = vmatprep.subr.mxu0 0.0
    %1371 = vmatpush1.msra.mxu0 %v1093
    %1372 = vmatprep.subr.mxu0 0.0
    %1373 = vmatpush1.msra.mxu0 %v1092
    %1374 = vmatprep.subr.mxu0 0.0
    %1375 = vmatpush1.msra.mxu0 %v1091
    %1376 = vmatprep.subr.mxu0 0.0
    %1377 = vmatpush1.msra.mxu0 %v1090
    %1378 = vmatprep.subr.mxu0 0.0
    %1379 = vmatpush1.msra.mxu0 %v1089
    %1380 = vmatprep.subr.mxu0 0.0
    %1381 = vmatpush1.msra.mxu0 %v1088
    %1382 = vmatprep.subr.mxu0 0.0
    %1383 = vmatpush1.msra.mxu0 %v1087
    %1384 = vmatprep.subr.mxu0 0.0
    %1385 = vmatpush1.msra.mxu0 %v1086
    %1386 = vmatprep.subr.mxu0 0.0
    %1387 = vmatpush1.msra.mxu0 %v1085
    %1388 = vmatprep.subr.mxu0 0.0
    %1389 = vmatpush1.msra.mxu0 %v1084
    %1390 = vmatprep.subr.mxu0 0.0
    %1391 = vmatpush1.msra.mxu0 %v1083
    %1392 = vmatprep.subr.mxu0 0.0
    %1393 = vmatpush2.msra.mxu0 %v1114
    %1394 = vmatprep.subr.mxu0 0.0
    %1395 = vmatpush2.msra.mxu0 %v1113
    %1396 = vmatprep.subr.mxu0 0.0
    %1397 = vmatpush2.msra.mxu0 %v1112
    %1398 = vmatprep.subr.mxu0 0.0
    %1399 = vmatpush2.msra.mxu0 %v1111
    %1400 = vmatprep.subr.mxu0 0.0
    %1401 = vmatpush2.msra.mxu0 %v1110
    %1402 = vmatprep.subr.mxu0 0.0
    %1403 = vmatpush2.msra.mxu0 %v1109
    %1404 = vmatprep.subr.mxu0 0.0
    %1405 = vmatpush2.msra.mxu0 %v1108
    %1406 = vmatprep.subr.mxu0 0.0
    %1407 = vmatpush2.msra.mxu0 %v1107
    %1408 = vmatprep.subr.mxu0 0.0
    %1409 = vmatpush2.msra.mxu0 %v1106
    %1410 = vmatprep.subr.mxu0 0.0
    %1411 = vmatpush2.msra.mxu0 %v1105
    %1412 = vmatprep.subr.mxu0 0.0
    %1413 = vmatpush2.msra.mxu0 %v1104
    %1414 = vmatprep.subr.mxu0 0.0
    %1415 = vmatpush2.msra.mxu0 %v1103
    %1416 = vmatprep.subr.mxu0 0.0
    %1417 = vmatpush2.msra.mxu0 %v1102
    %1418 = vmatprep.subr.mxu0 0.0
    %1419 = vmatpush2.msra.mxu0 %v1101
    %1420 = vmatprep.subr.mxu0 0.0
    %1421 = vmatpush2.msra.mxu0 %v1100
    %1422 = vmatprep.subr.mxu0 0.0
    %1423 = vmatpush2.msra.mxu0 %v1099
    %1424 = vmatprep.mubr.f32.mxu0 %v1357
    %1425 = vmatmul.mubr.f32.gmra.mxu0 %v1356
    %v1426 = vpop.f32.mrf.mxu0
    %v1427 = vadd.f32 0.0, %v1426
    %v1428 = vpop.f32.mrf.mxu0
    %1429 = vdwg.mxu0
    %1430 = vmatprep.subr.mxu0 0.0
    %1431 = vmatpush1.msra.mxu0 %v1130
    %1432 = vmatprep.subr.mxu0 0.0
    %1433 = vmatpush1.msra.mxu0 %v1129
    %1434 = vmatprep.subr.mxu0 0.0
    %1435 = vmatpush1.msra.mxu0 %v1128
    %1436 = vmatprep.subr.mxu0 0.0
    %1437 = vmatpush1.msra.mxu0 %v1127
    %1438 = vmatprep.subr.mxu0 0.0
    %1439 = vmatpush1.msra.mxu0 %v1126
    %1440 = vmatprep.subr.mxu0 0.0
    %1441 = vmatpush1.msra.mxu0 %v1125
    %1442 = vmatprep.subr.mxu0 0.0
    %1443 = vmatpush1.msra.mxu0 %v1124
    %1444 = vmatprep.subr.mxu0 0.0
    %1445 = vmatpush1.msra.mxu0 %v1123
    %1446 = vmatprep.subr.mxu0 0.0
    %1447 = vmatpush1.msra.mxu0 %v1122
    %1448 = vmatprep.subr.mxu0 0.0
    %1449 = vmatpush1.msra.mxu0 %v1121
    %1450 = vmatprep.subr.mxu0 0.0
    %1451 = vmatpush1.msra.mxu0 %v1120
    %1452 = vmatprep.subr.mxu0 0.0
    %1453 = vmatpush1.msra.mxu0 %v1119
    %1454 = vmatprep.subr.mxu0 0.0
    %1455 = vmatpush1.msra.mxu0 %v1118
    %1456 = vmatprep.subr.mxu0 0.0
    %1457 = vmatpush1.msra.mxu0 %v1117
    %1458 = vmatprep.subr.mxu0 0.0
    %1459 = vmatpush1.msra.mxu0 %v1116
    %1460 = vmatprep.subr.mxu0 0.0
    %1461 = vmatpush1.msra.mxu0 %v1115
    %1462 = vmatprep.subr.mxu0 0.0
    %1463 = vmatpush2.msra.mxu0 %v1146
    %1464 = vmatprep.subr.mxu0 0.0
    %1465 = vmatpush2.msra.mxu0 %v1145
    %1466 = vmatprep.subr.mxu0 0.0
    %1467 = vmatpush2.msra.mxu0 %v1144
    %1468 = vmatprep.subr.mxu0 0.0
    %1469 = vmatpush2.msra.mxu0 %v1143
    %1470 = vmatprep.subr.mxu0 0.0
    %1471 = vmatpush2.msra.mxu0 %v1142
    %1472 = vmatprep.subr.mxu0 0.0
    %1473 = vmatpush2.msra.mxu0 %v1141
    %1474 = vmatprep.subr.mxu0 0.0
    %1475 = vmatpush2.msra.mxu0 %v1140
    %1476 = vmatprep.subr.mxu0 0.0
    %1477 = vmatpush2.msra.mxu0 %v1139
    %1478 = vmatprep.subr.mxu0 0.0
    %1479 = vmatpush2.msra.mxu0 %v1138
    %1480 = vmatprep.subr.mxu0 0.0
    %1481 = vmatpush2.msra.mxu0 %v1137
    %1482 = vmatprep.subr.mxu0 0.0
    %1483 = vmatpush2.msra.mxu0 %v1136
    %1484 = vmatprep.subr.mxu0 0.0
    %1485 = vmatpush2.msra.mxu0 %v1135
    %1486 = vmatprep.subr.mxu0 0.0
    %1487 = vmatpush2.msra.mxu0 %v1134
    %1488 = vmatprep.subr.mxu0 0.0
    %1489 = vmatpush2.msra.mxu0 %v1133
    %1490 = vmatprep.subr.mxu0 0.0
    %1491 = vmatpush2.msra.mxu0 %v1132
    %1492 = vmatprep.subr.mxu0 0.0
    %1493 = vmatpush2.msra.mxu0 %v1131
    %1494 = vmatprep.mubr.f32.mxu0 %v1359
    %1495 = vmatmul.mubr.f32.gmra.mxu0 %v1358
    %v1496 = vpop.f32.mrf.mxu0
    %v1497 = vadd.f32 %v1427, %v1496
    %v1498 = vpop.f32.mrf.mxu0
    %1499 = vdwg.mxu0
    %v1500 = vmul.f32 %v1321, %v1321
    %v1501 = vsub.f32 %v1497, %v1500
    %v1502 = vmax.f32 %v1501, 0.0
    %v1503 = vadd.f32 %v1502, 1e-05
    %v1504 = vrsqrt.pop %v1503
    %vm1505 = vcmask 64512
    %v1507 = vsel %vm1505, %v1504, 0
    %1509 = vmatprep.subr.mxu0 0.0
    %1510 = vmatpush1.msra.mxu0 0.0
    %1511 = vmatprep.subr.mxu0 0.0
    %1512 = vmatpush1.msra.mxu0 0.0
    %1513 = vmatprep.subr.mxu0 0.0
    %1514 = vmatpush1.msra.mxu0 0.0
    %1515 = vmatprep.subr.mxu0 0.0
    %1516 = vmatpush1.msra.mxu0 0.0
    %1517 = vmatprep.subr.mxu0 0.0
    %1518 = vmatpush1.msra.mxu0 0.0
    %1519 = vmatprep.subr.mxu0 0.0
    %1520 = vmatpush1.msra.mxu0 0.0
    %1521 = vmatprep.subr.mxu0 0.0
    %1522 = vmatpush1.msra.mxu0 0.0
    %1523 = vmatprep.subr.mxu0 0.0
    %1524 = vmatpush1.msra.mxu0 0.0
    %1525 = vmatprep.subr.mxu0 0.0
    %1526 = vmatpush1.msra.mxu0 0.0
    %1527 = vmatprep.subr.mxu0 0.0
    %1528 = vmatpush1.msra.mxu0 0.0
    %1529 = vmatprep.subr.mxu0 0.0
    %1530 = vmatpush1.msra.mxu0 0.0
    %1531 = vmatprep.subr.mxu0 0.0
    %1532 = vmatpush1.msra.mxu0 0.0
    %1533 = vmatprep.subr.mxu0 0.0
    %1534 = vmatpush1.msra.mxu0 0.0
    %1535 = vmatprep.subr.mxu0 0.0
    %1536 = vmatpush1.msra.mxu0 0.0
    %1537 = vmatprep.subr.mxu0 0.0
    %1538 = vmatpush1.msra.mxu0 0.0
    %1539 = vmatprep.subr.mxu0 %v1148
    %1540 = vmatpush1.msra.mxu0 %v1147
    %1541 = vmatprep.subr.mxu0 0.0
    %1542 = vmatpush2.msra.mxu0 0.0
    %1543 = vmatprep.subr.mxu0 0.0
    %1544 = vmatpush2.msra.mxu0 0.0
    %1545 = vmatprep.subr.mxu0 0.0
    %1546 = vmatpush2.msra.mxu0 0.0
    %1547 = vmatprep.subr.mxu0 0.0
    %1548 = vmatpush2.msra.mxu0 0.0
    %1549 = vmatprep.subr.mxu0 0.0
    %1550 = vmatpush2.msra.mxu0 0.0
    %1551 = vmatprep.subr.mxu0 0.0
    %1552 = vmatpush2.msra.mxu0 0.0
    %1553 = vmatprep.subr.mxu0 0.0
    %1554 = vmatpush2.msra.mxu0 0.0
    %1555 = vmatprep.subr.mxu0 0.0
    %1556 = vmatpush2.msra.mxu0 0.0
    %1557 = vmatprep.subr.mxu0 0.0
    %1558 = vmatpush2.msra.mxu0 0.0
    %1559 = vmatprep.subr.mxu0 0.0
    %1560 = vmatpush2.msra.mxu0 0.0
    %1561 = vmatprep.subr.mxu0 0.0
    %1562 = vmatpush2.msra.mxu0 0.0
    %1563 = vmatprep.subr.mxu0 0.0
    %1564 = vmatpush2.msra.mxu0 0.0
    %1565 = vmatprep.subr.mxu0 0.0
    %1566 = vmatpush2.msra.mxu0 0.0
    %1567 = vmatprep.subr.mxu0 0.0
    %1568 = vmatpush2.msra.mxu0 0.0
    %1569 = vmatprep.subr.mxu0 0.0
    %1570 = vmatpush2.msra.mxu0 0.0
    %1571 = vmatprep.subr.mxu0 0.0
    %1572 = vmatpush2.msra.mxu0 0.0
    %1573 = vmatprep.mubr.f32.mxu0 0.0
    %1574 = vmatmul.mubr.f32.gmra.mxu0 %v1507
    %v1575 = vpop.f32.mrf.mxu0
    %v1576 = vadd.f32 0.0, %v1575
    %v1577 = vpop.f32.mrf.mxu0
    %v1578 = vadd.f32 0.0, %v1577
    %1579 = vdwg.mxu0
    %1580 = vmatprep.subr.mxu0 0.0
    %1581 = vmatpush1.msra.mxu0 0.0
    %1582 = vmatprep.subr.mxu0 0.0
    %1583 = vmatpush1.msra.mxu0 0.0
    %1584 = vmatprep.subr.mxu0 0.0
    %1585 = vmatpush1.msra.mxu0 0.0
    %1586 = vmatprep.subr.mxu0 0.0
    %1587 = vmatpush1.msra.mxu0 0.0
    %1588 = vmatprep.subr.mxu0 0.0
    %1589 = vmatpush1.msra.mxu0 0.0
    %1590 = vmatprep.subr.mxu0 0.0
    %1591 = vmatpush1.msra.mxu0 0.0
    %1592 = vmatprep.subr.mxu0 0.0
    %1593 = vmatpush1.msra.mxu0 0.0
    %1594 = vmatprep.subr.mxu0 0.0
    %1595 = vmatpush1.msra.mxu0 0.0
    %1596 = vmatprep.subr.mxu0 0.0
    %1597 = vmatpush1.msra.mxu0 0.0
    %1598 = vmatprep.subr.mxu0 0.0
    %1599 = vmatpush1.msra.mxu0 0.0
    %1600 = vmatprep.subr.mxu0 0.0
    %1601 = vmatpush1.msra.mxu0 0.0
    %1602 = vmatprep.subr.mxu0 0.0
    %1603 = vmatpush1.msra.mxu0 0.0
    %1604 = vmatprep.subr.mxu0 0.0
    %1605 = vmatpush1.msra.mxu0 0.0
    %1606 = vmatprep.subr.mxu0 0.0
    %1607 = vmatpush1.msra.mxu0 0.0
    %1608 = vmatprep.subr.mxu0 0.0
    %1609 = vmatpush1.msra.mxu0 0.0
    %1610 = vmatprep.subr.mxu0 %v1150
    %1611 = vmatpush1.msra.mxu0 %v1149
    %1612 = vmatprep.subr.mxu0 0.0
    %1613 = vmatpush2.msra.mxu0 0.0
    %1614 = vmatprep.subr.mxu0 0.0
    %1615 = vmatpush2.msra.mxu0 0.0
    %1616 = vmatprep.subr.mxu0 0.0
    %1617 = vmatpush2.msra.mxu0 0.0
    %1618 = vmatprep.subr.mxu0 0.0
    %1619 = vmatpush2.msra.mxu0 0.0
    %1620 = vmatprep.subr.mxu0 0.0
    %1621 = vmatpush2.msra.mxu0 0.0
    %1622 = vmatprep.subr.mxu0 0.0
    %1623 = vmatpush2.msra.mxu0 0.0
    %1624 = vmatprep.subr.mxu0 0.0
    %1625 = vmatpush2.msra.mxu0 0.0
    %1626 = vmatprep.subr.mxu0 0.0
    %1627 = vmatpush2.msra.mxu0 0.0
    %1628 = vmatprep.subr.mxu0 0.0
    %1629 = vmatpush2.msra.mxu0 0.0
    %1630 = vmatprep.subr.mxu0 0.0
    %1631 = vmatpush2.msra.mxu0 0.0
    %1632 = vmatprep.subr.mxu0 0.0
    %1633 = vmatpush2.msra.mxu0 0.0
    %1634 = vmatprep.subr.mxu0 0.0
    %1635 = vmatpush2.msra.mxu0 0.0
    %1636 = vmatprep.subr.mxu0 0.0
    %1637 = vmatpush2.msra.mxu0 0.0
    %1638 = vmatprep.subr.mxu0 0.0
    %1639 = vmatpush2.msra.mxu0 0.0
    %1640 = vmatprep.subr.mxu0 0.0
    %1641 = vmatpush2.msra.mxu0 0.0
    %1642 = vmatprep.subr.mxu0 0.0
    %1643 = vmatpush2.msra.mxu0 0.0
    %1644 = vmatprep.mubr.f32.mxu0 0.0
    %1645 = vmatmul.mubr.f32.gmra.mxu0 %v1507
    %v1646 = vpop.f32.mrf.mxu0
    %v1647 = vadd.f32 0.0, %v1646
    %v1648 = vpop.f32.mrf.mxu0
    %v1649 = vadd.f32 0.0, %v1648
    %1650 = vdwg.mxu0
    %v1651 = vmul.f32 %v1321, %v1504
    %v1653 = vsel %vm1505, %v1651, 0
    %1655 = vmatprep.subr.mxu0 0.0
    %1656 = vmatpush1.msra.mxu0 0.0
    %1657 = vmatprep.subr.mxu0 0.0
    %1658 = vmatpush1.msra.mxu0 0.0
    %1659 = vmatprep.subr.mxu0 0.0
    %1660 = vmatpush1.msra.mxu0 0.0
    %1661 = vmatprep.subr.mxu0 0.0
    %1662 = vmatpush1.msra.mxu0 0.0
    %1663 = vmatprep.subr.mxu0 0.0
    %1664 = vmatpush1.msra.mxu0 0.0
    %1665 = vmatprep.subr.mxu0 0.0
    %1666 = vmatpush1.msra.mxu0 0.0
    %1667 = vmatprep.subr.mxu0 0.0
    %1668 = vmatpush1.msra.mxu0 0.0
    %1669 = vmatprep.subr.mxu0 0.0
    %1670 = vmatpush1.msra.mxu0 0.0
    %1671 = vmatprep.subr.mxu0 0.0
    %1672 = vmatpush1.msra.mxu0 0.0
    %1673 = vmatprep.subr.mxu0 0.0
    %1674 = vmatpush1.msra.mxu0 0.0
    %1675 = vmatprep.subr.mxu0 0.0
    %1676 = vmatpush1.msra.mxu0 0.0
    %1677 = vmatprep.subr.mxu0 0.0
    %1678 = vmatpush1.msra.mxu0 0.0
    %1679 = vmatprep.subr.mxu0 0.0
    %1680 = vmatpush1.msra.mxu0 0.0
    %1681 = vmatprep.subr.mxu0 0.0
    %1682 = vmatpush1.msra.mxu0 0.0
    %1683 = vmatprep.subr.mxu0 0.0
    %1684 = vmatpush1.msra.mxu0 0.0
    %1685 = vmatprep.subr.mxu0 %v1148
    %1686 = vmatpush1.msra.mxu0 %v1147
    %1687 = vmatprep.subr.mxu0 0.0
    %1688 = vmatpush2.msra.mxu0 0.0
    %1689 = vmatprep.subr.mxu0 0.0
    %1690 = vmatpush2.msra.mxu0 0.0
    %1691 = vmatprep.subr.mxu0 0.0
    %1692 = vmatpush2.msra.mxu0 0.0
    %1693 = vmatprep.subr.mxu0 0.0
    %1694 = vmatpush2.msra.mxu0 0.0
    %1695 = vmatprep.subr.mxu0 0.0
    %1696 = vmatpush2.msra.mxu0 0.0
    %1697 = vmatprep.subr.mxu0 0.0
    %1698 = vmatpush2.msra.mxu0 0.0
    %1699 = vmatprep.subr.mxu0 0.0
    %1700 = vmatpush2.msra.mxu0 0.0
    %1701 = vmatprep.subr.mxu0 0.0
    %1702 = vmatpush2.msra.mxu0 0.0
    %1703 = vmatprep.subr.mxu0 0.0
    %1704 = vmatpush2.msra.mxu0 0.0
    %1705 = vmatprep.subr.mxu0 0.0
    %1706 = vmatpush2.msra.mxu0 0.0
    %1707 = vmatprep.subr.mxu0 0.0
    %1708 = vmatpush2.msra.mxu0 0.0
    %1709 = vmatprep.subr.mxu0 0.0
    %1710 = vmatpush2.msra.mxu0 0.0
    %1711 = vmatprep.subr.mxu0 0.0
    %1712 = vmatpush2.msra.mxu0 0.0
    %1713 = vmatprep.subr.mxu0 0.0
    %1714 = vmatpush2.msra.mxu0 0.0
    %1715 = vmatprep.subr.mxu0 0.0
    %1716 = vmatpush2.msra.mxu0 0.0
    %1717 = vmatprep.subr.mxu0 0.0
    %1718 = vmatpush2.msra.mxu0 0.0
    %1719 = vmatprep.mubr.f32.mxu0 0.0
    %1720 = vmatmul.mubr.f32.gmra.mxu0 %v1653
    %v1721 = vpop.f32.mrf.mxu0
    %v1722 = vadd.f32 0.0, %v1721
    %v1723 = vpop.f32.mrf.mxu0
    %v1724 = vadd.f32 0.0, %v1723
    %1725 = vdwg.mxu0
    %1726 = vmatprep.subr.mxu0 0.0
    %1727 = vmatpush1.msra.mxu0 0.0
    %1728 = vmatprep.subr.mxu0 0.0
    %1729 = vmatpush1.msra.mxu0 0.0
    %1730 = vmatprep.subr.mxu0 0.0
    %1731 = vmatpush1.msra.mxu0 0.0
    %1732 = vmatprep.subr.mxu0 0.0
    %1733 = vmatpush1.msra.mxu0 0.0
    %1734 = vmatprep.subr.mxu0 0.0
    %1735 = vmatpush1.msra.mxu0 0.0
    %1736 = vmatprep.subr.mxu0 0.0
    %1737 = vmatpush1.msra.mxu0 0.0
    %1738 = vmatprep.subr.mxu0 0.0
    %1739 = vmatpush1.msra.mxu0 0.0
    %1740 = vmatprep.subr.mxu0 0.0
    %1741 = vmatpush1.msra.mxu0 0.0
    %1742 = vmatprep.subr.mxu0 0.0
    %1743 = vmatpush1.msra.mxu0 0.0
    %1744 = vmatprep.subr.mxu0 0.0
    %1745 = vmatpush1.msra.mxu0 0.0
    %1746 = vmatprep.subr.mxu0 0.0
    %1747 = vmatpush1.msra.mxu0 0.0
    %1748 = vmatprep.subr.mxu0 0.0
    %1749 = vmatpush1.msra.mxu0 0.0
    %1750 = vmatprep.subr.mxu0 0.0
    %1751 = vmatpush1.msra.mxu0 0.0
    %1752 = vmatprep.subr.mxu0 0.0
    %1753 = vmatpush1.msra.mxu0 0.0
    %1754 = vmatprep.subr.mxu0 0.0
    %1755 = vmatpush1.msra.mxu0 0.0
    %1756 = vmatprep.subr.mxu0 %v1150
    %1757 = vmatpush1.msra.mxu0 %v1149
    %1758 = vmatprep.subr.mxu0 0.0
    %1759 = vmatpush2.msra.mxu0 0.0
    %1760 = vmatprep.subr.mxu0 0.0
    %1761 = vmatpush2.msra.mxu0 0.0
    %1762 = vmatprep.subr.mxu0 0.0
    %1763 = vmatpush2.msra.mxu0 0.0
    %1764 = vmatprep.subr.mxu0 0.0
    %1765 = vmatpush2.msra.mxu0 0.0
    %1766 = vmatprep.subr.mxu0 0.0
    %1767 = vmatpush2.msra.mxu0 0.0
    %1768 = vmatprep.subr.mxu0 0.0
    %1769 = vmatpush2.msra.mxu0 0.0
    %1770 = vmatprep.subr.mxu0 0.0
    %1771 = vmatpush2.msra.mxu0 0.0
    %1772 = vmatprep.subr.mxu0 0.0
    %1773 = vmatpush2.msra.mxu0 0.0
    %1774 = vmatprep.subr.mxu0 0.0
    %1775 = vmatpush2.msra.mxu0 0.0
    %1776 = vmatprep.subr.mxu0 0.0
    %1777 = vmatpush2.msra.mxu0 0.0
    %1778 = vmatprep.subr.mxu0 0.0
    %1779 = vmatpush2.msra.mxu0 0.0
    %1780 = vmatprep.subr.mxu0 0.0
    %1781 = vmatpush2.msra.mxu0 0.0
    %1782 = vmatprep.subr.mxu0 0.0
    %1783 = vmatpush2.msra.mxu0 0.0
    %1784 = vmatprep.subr.mxu0 0.0
    %1785 = vmatpush2.msra.mxu0 0.0
    %1786 = vmatprep.subr.mxu0 0.0
    %1787 = vmatpush2.msra.mxu0 0.0
    %1788 = vmatprep.subr.mxu0 0.0
    %1789 = vmatpush2.msra.mxu0 0.0
    %1790 = vmatprep.mubr.f32.mxu0 0.0
    %1791 = vmatmul.mubr.f32.gmra.mxu0 %v1653
    %v1792 = vpop.f32.mrf.mxu0
    %v1793 = vadd.f32 0.0, %v1792
    %v1794 = vpop.f32.mrf.mxu0
    %v1795 = vadd.f32 0.0, %v1794
    %1796 = vdwg.mxu0
    %v1801 = vcombine.low %v1722, %v1724
    %v1802 = vcombine.low %v1793, %v1795
    %v1804 = vunpack.c.l.s4 1966171168
    %v1805 = vunpack.c.0.s8 %v1804
    %v1806 = vlaneseq
    %v1807 = vshrl.u32 %v1806, 7
    %v1808 = vsub.s32 %v1805, %v1807
    %v1809 = vrot.slane %v1801, %v1808
    %v1811 = vunpack.c.l.s4 1966171168
    %v1812 = vunpack.c.0.s8 %v1811
    %v1813 = vlaneseq
    %v1814 = vshrl.u32 %v1813, 7
    %v1815 = vsub.s32 %v1812, %v1814
    %v1816 = vrot.slane %v1802, %v1815
    %v1817 = vcombine.low %v1809, %v1816
    %v1819 = vunpack.c.l.s4 1966171168
    %v1820 = vunpack.c.0.s8 %v1819
    %v1821 = vlaneseq
    %v1822 = vshrl.u32 %v1821, 7
    %v1823 = vsub.s32 %v1820, %v1822
    %v1824 = vrot.slane %v1817, %v1823
    %v1826 = vsub.f32 %v1151, %v1824
    %v1827 = vlaneseq
    %v1828 = vshrl.u32 %v1827, 7
    %v1829 = vsub.s32 0, %v1828
    %v1830 = vrot.slane %v1576, %v1829
    %v1831 = vlaneseq
    %v1832 = vshrl.u32 %v1831, 7
    %v1833 = vsub.s32 0, %v1832
    %v1834 = vrot.slane %v1578, %v1833
    %v1835 = vlaneseq
    %v1836 = vshrl.u32 %v1835, 7
    %v1837 = vsub.s32 0, %v1836
    %v1838 = vrot.slane %v1647, %v1837
    %v1839 = vlaneseq
    %v1840 = vshrl.u32 %v1839, 7
    %v1841 = vsub.s32 0, %v1840
    %v1842 = vrot.slane %v1649, %v1841
    %v1843 = vmul.f32 %v1036, %v1830
    %v1844 = vmul.f32 %v1038, %v1834
    %v1845 = vmul.f32 %v1077, %v1838
    %v1846 = vmul.f32 %v1079, %v1842
    %v1848 = vlaneseq
    %v1849 = vshrl.u32 %v1848, 7
    %v1850 = vsub.s32 0, %v1849
    %v1851 = vrot.slane %v1826, %v1850
    %v1852 = vlaneseq
    %v1853 = vshrl.u32 %v1852, 7
    %v1854 = vsub.s32 1, %v1853
    %v1855 = vrot.slane %v1826, %v1854
    %v1856 = vlaneseq
    %v1857 = vshrl.u32 %v1856, 7
    %v1858 = vsub.s32 2, %v1857
    %v1859 = vrot.slane %v1826, %v1858
    %v1860 = vlaneseq
    %v1861 = vshrl.u32 %v1860, 7
    %v1862 = vsub.s32 3, %v1861
    %v1863 = vrot.slane %v1826, %v1862
    %v1868 = vadd.f32 %v1843, %v1851
    %v1869 = vadd.f32 %v1844, %v1855
    %v1870 = vadd.f32 %v1845, %v1859
    %v1871 = vadd.f32 %v1846, %v1863
    %v1872 = vmax.f32 %v1868, 0.0
    %v1873 = vmax.f32 %v1869, 0.0
    %v1874 = vmax.f32 %v1870, 0.0
    %v1875 = vmax.f32 %v1871, 0.0
    %v1876 = vld [vmem:[#allocation12] sm:$0xff]
    %v1877 = vld [vmem:[#allocation12 + $0x8] sm:$0xff]
    %v1878 = vld [vmem:[#allocation12 + $0x10] sm:$0xff]
    %v1879 = vld [vmem:[#allocation12 + $0x18] sm:$0xff]
    %v1880 = vld [vmem:[#allocation12 + $0x20] sm:$0xff]
    %v1881 = vld [vmem:[#allocation12 + $0x28] sm:$0xff]
    %v1882 = vld [vmem:[#allocation12 + $0x30] sm:$0xff]
    %v1883 = vld [vmem:[#allocation12 + $0x38] sm:$0xff]
    %v1884 = vld [vmem:[#allocation12 + $0x40] sm:$0xff]
    %v1885 = vld [vmem:[#allocation12 + $0x48] sm:$0xff]
    %v1886 = vld [vmem:[#allocation12 + $0x50] sm:$0xff]
    %v1887 = vld [vmem:[#allocation12 + $0x58] sm:$0xff]
    %v1888 = vld [vmem:[#allocation12 + $0x60] sm:$0xff]
    %v1889 = vld [vmem:[#allocation12 + $0x68] sm:$0xff]
    %v1890 = vld [vmem:[#allocation12 + $0x70] sm:$0xff]
    %v1891 = vld [vmem:[#allocation12 + $0x78] sm:$0xff]
    %v1892 = vld [vmem:[#allocation12 + $0x80] sm:$0xff]
    %v1893 = vld [vmem:[#allocation12 + $0x88] sm:$0xff]
    %v1894 = vld [vmem:[#allocation12 + $0x90] sm:$0xff]
    %v1895 = vld [vmem:[#allocation12 + $0x98] sm:$0xff]
    %v1896 = vld [vmem:[#allocation12 + $0xa0] sm:$0xff]
    %v1897 = vld [vmem:[#allocation12 + $0xa8] sm:$0xff]
    %v1898 = vld [vmem:[#allocation12 + $0xb0] sm:$0xff]
    %v1899 = vld [vmem:[#allocation12 + $0xb8] sm:$0xff]
    %v1900 = vld [vmem:[#allocation12 + $0xc0] sm:$0xff]
    %v1901 = vld [vmem:[#allocation12 + $0xc8] sm:$0xff]
    %v1902 = vld [vmem:[#allocation12 + $0xd0] sm:$0xff]
    %v1903 = vld [vmem:[#allocation12 + $0xd8] sm:$0xff]
    %v1904 = vld [vmem:[#allocation12 + $0xe0] sm:$0xff]
    %v1905 = vld [vmem:[#allocation12 + $0xe8] sm:$0xff]
    %v1906 = vld [vmem:[#allocation12 + $0xf0] sm:$0xff]
    %v1907 = vld [vmem:[#allocation12 + $0xf8] sm:$0xff]
    %v1908 = vld [vmem:[#allocation12 + $0x100] sm:$0xff]
    %v1909 = vld [vmem:[#allocation12 + $0x108] sm:$0xff]
    %v1910 = vld [vmem:[#allocation12 + $0x110] sm:$0xff]
    %v1911 = vld [vmem:[#allocation12 + $0x118] sm:$0xff]
    %v1912 = vld [vmem:[#allocation12 + $0x120] sm:$0xff]
    %v1913 = vld [vmem:[#allocation12 + $0x128] sm:$0xff]
    %v1914 = vld [vmem:[#allocation12 + $0x130] sm:$0xff]
    %v1915 = vld [vmem:[#allocation12 + $0x138] sm:$0xff]
    %v1916 = vld [vmem:[#allocation12 + $0x140] sm:$0xff]
    %v1917 = vld [vmem:[#allocation12 + $0x148] sm:$0xff]
    %v1918 = vld [vmem:[#allocation12 + $0x150] sm:$0xff]
    %v1919 = vld [vmem:[#allocation12 + $0x158] sm:$0xff]
    %v1920 = vld [vmem:[#allocation12 + $0x160] sm:$0xff]
    %v1921 = vld [vmem:[#allocation12 + $0x168] sm:$0xff]
    %v1922 = vld [vmem:[#allocation12 + $0x170] sm:$0xff]
    %v1923 = vld [vmem:[#allocation12 + $0x178] sm:$0xff]
    %v1924 = vld [vmem:[#allocation12 + $0x180] sm:$0xff]
    %v1925 = vld [vmem:[#allocation12 + $0x188] sm:$0xff]
    %v1926 = vld [vmem:[#allocation12 + $0x190] sm:$0xff]
    %v1927 = vld [vmem:[#allocation12 + $0x198] sm:$0xff]
    %v1928 = vld [vmem:[#allocation12 + $0x1a0] sm:$0xff]
    %v1929 = vld [vmem:[#allocation12 + $0x1a8] sm:$0xff]
    %v1930 = vld [vmem:[#allocation12 + $0x1b0] sm:$0xff]
    %v1931 = vld [vmem:[#allocation12 + $0x1b8] sm:$0xff]
    %v1932 = vld [vmem:[#allocation12 + $0x1c0] sm:$0xff]
    %v1933 = vld [vmem:[#allocation12 + $0x1c8] sm:$0xff]
    %v1934 = vld [vmem:[#allocation12 + $0x1d0] sm:$0xff]
    %v1935 = vld [vmem:[#allocation12 + $0x1d8] sm:$0xff]
    %v1936 = vld [vmem:[#allocation12 + $0x1e0] sm:$0xff]
    %v1937 = vld [vmem:[#allocation12 + $0x1e8] sm:$0xff]
    %v1938 = vld [vmem:[#allocation12 + $0x1f0] sm:$0xff]
    %v1939 = vld [vmem:[#allocation12 + $0x1f8] sm:$0xff]
    %v1940 = vld [vmem:[#allocation12 + $0x200] sm:$0xff]
    %v1941 = vld [vmem:[#allocation12 + $0x208] sm:$0xff]
    %v1942 = vld [vmem:[#allocation12 + $0x210] sm:$0xff]
    %v1943 = vld [vmem:[#allocation12 + $0x218] sm:$0xff]
    %v1944 = vld [vmem:[#allocation12 + $0x220] sm:$0xff]
    %v1945 = vld [vmem:[#allocation12 + $0x228] sm:$0xff]
    %v1946 = vld [vmem:[#allocation12 + $0x230] sm:$0xff]
    %v1947 = vld [vmem:[#allocation12 + $0x238] sm:$0xff]
    %v1948 = vld [vmem:[#allocation12 + $0x240] sm:$0xff]
    %v1949 = vld [vmem:[#allocation12 + $0x248] sm:$0xff]
    %v1950 = vld [vmem:[#allocation12 + $0x250] sm:$0xff]
    %v1951 = vld [vmem:[#allocation12 + $0x258] sm:$0xff]
    %v1952 = vld [vmem:[#allocation12 + $0x260] sm:$0xff]
    %v1953 = vld [vmem:[#allocation12 + $0x268] sm:$0xff]
    %v1954 = vld [vmem:[#allocation12 + $0x270] sm:$0xff]
    %v1955 = vld [vmem:[#allocation12 + $0x278] sm:$0xff]
    %v1956 = vld [vmem:[#allocation12 + $0x280] sm:$0xff]
    %v1957 = vld [vmem:[#allocation12 + $0x288] sm:$0xff]
    %v1958 = vld [vmem:[#allocation12 + $0x290] sm:$0xff]
    %v1959 = vld [vmem:[#allocation12 + $0x298] sm:$0xff]
    %v1960 = vld [vmem:[#allocation12 + $0x2a0] sm:$0xff]
    %v1961 = vld [vmem:[#allocation12 + $0x2a8] sm:$0xff]
    %v1962 = vld [vmem:[#allocation12 + $0x2b0] sm:$0xff]
    %v1963 = vld [vmem:[#allocation12 + $0x2b8] sm:$0xff]
    %v1964 = vld [vmem:[#allocation12 + $0x2c0] sm:$0xff]
    %v1965 = vld [vmem:[#allocation12 + $0x2c8] sm:$0xff]
    %v1966 = vld [vmem:[#allocation12 + $0x2d0] sm:$0xff]
    %v1967 = vld [vmem:[#allocation12 + $0x2d8] sm:$0xff]
    %v1968 = vld [vmem:[#allocation12 + $0x2e0] sm:$0xff]
    %v1969 = vld [vmem:[#allocation12 + $0x2e8] sm:$0xff]
    %v1970 = vld [vmem:[#allocation12 + $0x2f0] sm:$0xff]
    %v1971 = vld [vmem:[#allocation12 + $0x2f8] sm:$0xff]
    %v1972 = vld [vmem:[#allocation12 + $0x300] sm:$0xff]
    %v1973 = vld [vmem:[#allocation12 + $0x308] sm:$0xff]
    %v1974 = vld [vmem:[#allocation12 + $0x310] sm:$0xff]
    %v1975 = vld [vmem:[#allocation12 + $0x318] sm:$0xff]
    %v1976 = vld [vmem:[#allocation12 + $0x320] sm:$0xff]
    %v1977 = vld [vmem:[#allocation12 + $0x328] sm:$0xff]
    %v1978 = vld [vmem:[#allocation12 + $0x330] sm:$0xff]
    %v1979 = vld [vmem:[#allocation12 + $0x338] sm:$0xff]
    %v1980 = vld [vmem:[#allocation12 + $0x340] sm:$0xff]
    %v1981 = vld [vmem:[#allocation12 + $0x348] sm:$0xff]
    %v1982 = vld [vmem:[#allocation12 + $0x350] sm:$0xff]
    %v1983 = vld [vmem:[#allocation12 + $0x358] sm:$0xff]
    %v1984 = vld [vmem:[#allocation12 + $0x360] sm:$0xff]
    %v1985 = vld [vmem:[#allocation12 + $0x368] sm:$0xff]
    %v1986 = vld [vmem:[#allocation12 + $0x370] sm:$0xff]
    %v1987 = vld [vmem:[#allocation12 + $0x378] sm:$0xff]
    %v1988 = vld [vmem:[#allocation12 + $0x380] sm:$0xff]
    %v1989 = vld [vmem:[#allocation12 + $0x388] sm:$0xff]
    %v1990 = vld [vmem:[#allocation12 + $0x390] sm:$0xff]
    %v1991 = vld [vmem:[#allocation12 + $0x398] sm:$0xff]
    %v1992 = vld [vmem:[#allocation12 + $0x3a0] sm:$0xff]
    %v1993 = vld [vmem:[#allocation12 + $0x3a8] sm:$0xff]
    %v1994 = vld [vmem:[#allocation12 + $0x3b0] sm:$0xff]
    %v1995 = vld [vmem:[#allocation12 + $0x3b8] sm:$0xff]
    %v1996 = vld [vmem:[#allocation12 + $0x3c0] sm:$0xff]
    %v1997 = vld [vmem:[#allocation12 + $0x3c8] sm:$0xff]
    %v1998 = vld [vmem:[#allocation12 + $0x3d0] sm:$0xff]
    %v1999 = vld [vmem:[#allocation12 + $0x3d8] sm:$0xff]
    %v2000 = vld [vmem:[#allocation12 + $0x3e0] sm:$0xff]
    %v2001 = vld [vmem:[#allocation12 + $0x3e8] sm:$0xff]
    %v2002 = vld [vmem:[#allocation12 + $0x3f0] sm:$0xff]
    %v2003 = vld [vmem:[#allocation12 + $0x3f8] sm:$0xff]
    %v2004 = vld [vmem:[#allocation12 + $0x400] sm:$0xff]
    %v2005 = vld [vmem:[#allocation12 + $0x408] sm:$0xff]
    %v2006 = vld [vmem:[#allocation12 + $0x410] sm:$0xff]
    %v2007 = vld [vmem:[#allocation12 + $0x418] sm:$0xff]
    %v2008 = vld [vmem:[#allocation12 + $0x420] sm:$0xff]
    %v2009 = vld [vmem:[#allocation12 + $0x428] sm:$0xff]
    %v2010 = vld [vmem:[#allocation12 + $0x430] sm:$0xff]
    %v2011 = vld [vmem:[#allocation12 + $0x438] sm:$0xff]
    %v2012 = vld [vmem:[#allocation12 + $0x440] sm:$0xff]
    %v2013 = vld [vmem:[#allocation12 + $0x448] sm:$0xff]
    %v2014 = vld [vmem:[#allocation12 + $0x450] sm:$0xff]
    %v2015 = vld [vmem:[#allocation12 + $0x458] sm:$0xff]
    %v2016 = vld [vmem:[#allocation12 + $0x460] sm:$0xff]
    %v2017 = vld [vmem:[#allocation12 + $0x468] sm:$0xff]
    %v2018 = vld [vmem:[#allocation12 + $0x470] sm:$0xff]
    %v2019 = vld [vmem:[#allocation12 + $0x478] sm:$0xff]
    %v2020 = vld [vmem:[#allocation12 + $0x480] sm:$0xff]
    %v2021 = vld [vmem:[#allocation12 + $0x488] sm:$0xff]
    %v2022 = vld [vmem:[#allocation12 + $0x490] sm:$0xff]
    %v2023 = vld [vmem:[#allocation12 + $0x498] sm:$0xff]
    %v2024 = vld [vmem:[#allocation12 + $0x4a0] sm:$0xff]
    %v2025 = vld [vmem:[#allocation12 + $0x4a8] sm:$0xff]
    %v2026 = vld [vmem:[#allocation12 + $0x4b0] sm:$0xff]
    %v2027 = vld [vmem:[#allocation12 + $0x4b8] sm:$0xff]
    %v2028 = vld [vmem:[#allocation12 + $0x4c0] sm:$0xff]
    %v2029 = vld [vmem:[#allocation12 + $0x4c8] sm:$0xff]
    %v2030 = vld [vmem:[#allocation12 + $0x4d0] sm:$0xff]
    %v2031 = vld [vmem:[#allocation12 + $0x4d8] sm:$0xff]
    %v2032 = vld [vmem:[#allocation12 + $0x4e0] sm:$0xff]
    %v2033 = vld [vmem:[#allocation12 + $0x4e8] sm:$0xff]
    %v2034 = vld [vmem:[#allocation12 + $0x4f0] sm:$0xff]
    %v2035 = vld [vmem:[#allocation12 + $0x4f8] sm:$0xff]
    %v2036 = vld [vmem:[#allocation12 + $0x500] sm:$0xff]
    %v2037 = vld [vmem:[#allocation12 + $0x508] sm:$0xff]
    %v2038 = vld [vmem:[#allocation12 + $0x510] sm:$0xff]
    %v2039 = vld [vmem:[#allocation12 + $0x518] sm:$0xff]
    %v2040 = vld [vmem:[#allocation12 + $0x520] sm:$0xff]
    %v2041 = vld [vmem:[#allocation12 + $0x528] sm:$0xff]
    %v2042 = vld [vmem:[#allocation12 + $0x530] sm:$0xff]
    %v2043 = vld [vmem:[#allocation12 + $0x538] sm:$0xff]
    %v2044 = vld [vmem:[#allocation12 + $0x540] sm:$0xff]
    %v2045 = vld [vmem:[#allocation12 + $0x548] sm:$0xff]
    %v2046 = vld [vmem:[#allocation12 + $0x550] sm:$0xff]
    %v2047 = vld [vmem:[#allocation12 + $0x558] sm:$0xff]
    %v2048 = vld [vmem:[#allocation12 + $0x560] sm:$0xff]
    %v2049 = vld [vmem:[#allocation12 + $0x568] sm:$0xff]
    %v2050 = vld [vmem:[#allocation12 + $0x570] sm:$0xff]
    %v2051 = vld [vmem:[#allocation12 + $0x578] sm:$0xff]
    %v2052 = vld [vmem:[#allocation12 + $0x580] sm:$0xff]
    %v2053 = vld [vmem:[#allocation12 + $0x588] sm:$0xff]
    %v2054 = vld [vmem:[#allocation12 + $0x590] sm:$0xff]
    %v2055 = vld [vmem:[#allocation12 + $0x598] sm:$0xff]
    %v2056 = vld [vmem:[#allocation12 + $0x5a0] sm:$0xff]
    %v2057 = vld [vmem:[#allocation12 + $0x5a8] sm:$0xff]
    %v2058 = vld [vmem:[#allocation12 + $0x5b0] sm:$0xff]
    %v2059 = vld [vmem:[#allocation12 + $0x5b8] sm:$0xff]
    %v2060 = vld [vmem:[#allocation12 + $0x5c0] sm:$0xff]
    %v2061 = vld [vmem:[#allocation12 + $0x5c8] sm:$0xff]
    %v2062 = vld [vmem:[#allocation12 + $0x5d0] sm:$0xff]
    %v2063 = vld [vmem:[#allocation12 + $0x5d8] sm:$0xff]
    %v2064 = vld [vmem:[#allocation12 + $0x5e0] sm:$0xff]
    %v2065 = vld [vmem:[#allocation12 + $0x5e8] sm:$0xff]
    %v2066 = vld [vmem:[#allocation12 + $0x5f0] sm:$0xff]
    %v2067 = vld [vmem:[#allocation12 + $0x5f8] sm:$0xff]
    %v2068 = vld [vmem:[#allocation12 + $0x600] sm:$0xff]
    %v2069 = vld [vmem:[#allocation12 + $0x608] sm:$0xff]
    %v2070 = vld [vmem:[#allocation12 + $0x610] sm:$0xff]
    %v2071 = vld [vmem:[#allocation12 + $0x618] sm:$0xff]
    %v2072 = vld [vmem:[#allocation12 + $0x620] sm:$0xff]
    %v2073 = vld [vmem:[#allocation12 + $0x628] sm:$0xff]
    %v2074 = vld [vmem:[#allocation12 + $0x630] sm:$0xff]
    %v2075 = vld [vmem:[#allocation12 + $0x638] sm:$0xff]
    %v2076 = vld [vmem:[#allocation12 + $0x640] sm:$0xff]
    %v2077 = vld [vmem:[#allocation12 + $0x648] sm:$0xff]
    %v2078 = vld [vmem:[#allocation12 + $0x650] sm:$0xff]
    %v2079 = vld [vmem:[#allocation12 + $0x658] sm:$0xff]
    %v2080 = vld [vmem:[#allocation12 + $0x660] sm:$0xff]
    %v2081 = vld [vmem:[#allocation12 + $0x668] sm:$0xff]
    %v2082 = vld [vmem:[#allocation12 + $0x670] sm:$0xff]
    %v2083 = vld [vmem:[#allocation12 + $0x678] sm:$0xff]
    %v2084 = vld [vmem:[#allocation12 + $0x680] sm:$0xff]
    %v2085 = vld [vmem:[#allocation12 + $0x688] sm:$0xff]
    %v2086 = vld [vmem:[#allocation12 + $0x690] sm:$0xff]
    %v2087 = vld [vmem:[#allocation12 + $0x698] sm:$0xff]
    %v2088 = vld [vmem:[#allocation12 + $0x6a0] sm:$0xff]
    %v2089 = vld [vmem:[#allocation12 + $0x6a8] sm:$0xff]
    %v2090 = vld [vmem:[#allocation12 + $0x6b0] sm:$0xff]
    %v2091 = vld [vmem:[#allocation12 + $0x6b8] sm:$0xff]
    %v2092 = vld [vmem:[#allocation12 + $0x6c0] sm:$0xff]
    %v2093 = vld [vmem:[#allocation12 + $0x6c8] sm:$0xff]
    %v2094 = vld [vmem:[#allocation12 + $0x6d0] sm:$0xff]
    %v2095 = vld [vmem:[#allocation12 + $0x6d8] sm:$0xff]
    %v2096 = vld [vmem:[#allocation12 + $0x6e0] sm:$0xff]
    %v2097 = vld [vmem:[#allocation12 + $0x6e8] sm:$0xff]
    %v2098 = vld [vmem:[#allocation12 + $0x6f0] sm:$0xff]
    %v2099 = vld [vmem:[#allocation12 + $0x6f8] sm:$0xff]
    %v2100 = vld [vmem:[#allocation12 + $0x700] sm:$0xff]
    %v2101 = vld [vmem:[#allocation12 + $0x708] sm:$0xff]
    %v2102 = vld [vmem:[#allocation12 + $0x710] sm:$0xff]
    %v2103 = vld [vmem:[#allocation12 + $0x718] sm:$0xff]
    %v2104 = vld [vmem:[#allocation12 + $0x720] sm:$0xff]
    %v2105 = vld [vmem:[#allocation12 + $0x728] sm:$0xff]
    %v2106 = vld [vmem:[#allocation12 + $0x730] sm:$0xff]
    %v2107 = vld [vmem:[#allocation12 + $0x738] sm:$0xff]
    %v2108 = vld [vmem:[#allocation12 + $0x740] sm:$0xff]
    %v2109 = vld [vmem:[#allocation12 + $0x748] sm:$0xff]
    %v2110 = vld [vmem:[#allocation12 + $0x750] sm:$0xff]
    %v2111 = vld [vmem:[#allocation12 + $0x758] sm:$0xff]
    %v2112 = vld [vmem:[#allocation12 + $0x760] sm:$0xff]
    %v2113 = vld [vmem:[#allocation12 + $0x768] sm:$0xff]
    %v2114 = vld [vmem:[#allocation12 + $0x770] sm:$0xff]
    %v2115 = vld [vmem:[#allocation12 + $0x778] sm:$0xff]
    %v2116 = vld [vmem:[#allocation12 + $0x780] sm:$0xff]
    %v2117 = vld [vmem:[#allocation12 + $0x788] sm:$0xff]
    %v2118 = vld [vmem:[#allocation12 + $0x790] sm:$0xff]
    %v2119 = vld [vmem:[#allocation12 + $0x798] sm:$0xff]
    %v2120 = vld [vmem:[#allocation12 + $0x7a0] sm:$0xff]
    %v2121 = vld [vmem:[#allocation12 + $0x7a8] sm:$0xff]
    %v2122 = vld [vmem:[#allocation12 + $0x7b0] sm:$0xff]
    %v2123 = vld [vmem:[#allocation12 + $0x7b8] sm:$0xff]
    %v2124 = vld [vmem:[#allocation12 + $0x7c0] sm:$0xff]
    %v2125 = vld [vmem:[#allocation12 + $0x7c8] sm:$0xff]
    %v2126 = vld [vmem:[#allocation12 + $0x7d0] sm:$0xff]
    %v2127 = vld [vmem:[#allocation12 + $0x7d8] sm:$0xff]
    %v2128 = vld [vmem:[#allocation12 + $0x7e0] sm:$0xff]
    %v2129 = vld [vmem:[#allocation12 + $0x7e8] sm:$0xff]
    %v2130 = vld [vmem:[#allocation12 + $0x7f0] sm:$0xff]
    %v2131 = vld [vmem:[#allocation12 + $0x7f8] sm:$0xff]
    %v2132 = vpack.c.bf16 %v1872, %v1872
    %v2133 = vpack.c.bf16 %v1873, %v1873
    %v2134 = vpack.c.bf16 %v1874, %v1874
    %v2135 = vpack.c.bf16 %v1875, %v1875
    %v2136 = vld [vmem:[%s10] sm:$0xff]
    %v2138 = vlaneseq
    %v2139 = vshrl.u32 %v2138, 7
    %v2140 = vsub.s32 0, %v2139
    %v2141 = vrot.slane %v2136, %v2140
    %v2142 = vlaneseq
    %v2143 = vshrl.u32 %v2142, 7
    %v2144 = vsub.s32 1, %v2143
    %v2145 = vrot.slane %v2136, %v2144
    %v2146 = vlaneseq
    %v2147 = vshrl.u32 %v2146, 7
    %v2148 = vsub.s32 2, %v2147
    %v2149 = vrot.slane %v2136, %v2148
    %v2150 = vlaneseq
    %v2151 = vshrl.u32 %v2150, 7
    %v2152 = vsub.s32 3, %v2151
    %v2153 = vrot.slane %v2136, %v2152
    %v2154 = vlaneseq
    %v2155 = vshrl.u32 %v2154, 7
    %v2156 = vsub.s32 4, %v2155
    %v2157 = vrot.slane %v2136, %v2156
    %v2158 = vlaneseq
    %v2159 = vshrl.u32 %v2158, 7
    %v2160 = vsub.s32 5, %v2159
    %v2161 = vrot.slane %v2136, %v2160
    %v2162 = vlaneseq
    %v2163 = vshrl.u32 %v2162, 7
    %v2164 = vsub.s32 6, %v2163
    %v2165 = vrot.slane %v2136, %v2164
    %v2166 = vlaneseq
    %v2167 = vshrl.u32 %v2166, 7
    %v2168 = vsub.s32 7, %v2167
    %v2169 = vrot.slane %v2136, %v2168
    %v2434 = vunpack.c.l.b16 %v1876
    %v2435 = vunpack.c.h.b16 %v1876
    %v2436 = vunpack.c.l.b16 %v1877
    %v2437 = vunpack.c.h.b16 %v1877
    %v2438 = vunpack.c.l.b16 %v1878
    %v2439 = vunpack.c.h.b16 %v1878
    %v2440 = vunpack.c.l.b16 %v1879
    %v2441 = vunpack.c.h.b16 %v1879
    %v2442 = vunpack.c.l.b16 %v1880
    %v2443 = vunpack.c.h.b16 %v1880
    %v2444 = vunpack.c.l.b16 %v1881
    %v2445 = vunpack.c.h.b16 %v1881
    %v2446 = vunpack.c.l.b16 %v1882
    %v2447 = vunpack.c.h.b16 %v1882
    %v2448 = vunpack.c.l.b16 %v1883
    %v2449 = vunpack.c.h.b16 %v1883
    %v2450 = vunpack.c.l.b16 %v1884
    %v2451 = vunpack.c.h.b16 %v1884
    %v2452 = vunpack.c.l.b16 %v1885
    %v2453 = vunpack.c.h.b16 %v1885
    %v2454 = vunpack.c.l.b16 %v1886
    %v2455 = vunpack.c.h.b16 %v1886
    %v2456 = vunpack.c.l.b16 %v1887
    %v2457 = vunpack.c.h.b16 %v1887
    %v2458 = vunpack.c.l.b16 %v1888
    %v2459 = vunpack.c.h.b16 %v1888
    %v2460 = vunpack.c.l.b16 %v1889
    %v2461 = vunpack.c.h.b16 %v1889
    %v2462 = vunpack.c.l.b16 %v1890
    %v2463 = vunpack.c.h.b16 %v1890
    %v2464 = vunpack.c.l.b16 %v1891
    %v2465 = vunpack.c.h.b16 %v1891
    %v2466 = vunpack.c.l.b16 %v1892
    %v2467 = vunpack.c.h.b16 %v1892
    %v2468 = vunpack.c.l.b16 %v1893
    %v2469 = vunpack.c.h.b16 %v1893
    %v2470 = vunpack.c.l.b16 %v1894
    %v2471 = vunpack.c.h.b16 %v1894
    %v2472 = vunpack.c.l.b16 %v1895
    %v2473 = vunpack.c.h.b16 %v1895
    %v2474 = vunpack.c.l.b16 %v1896
    %v2475 = vunpack.c.h.b16 %v1896
    %v2476 = vunpack.c.l.b16 %v1897
    %v2477 = vunpack.c.h.b16 %v1897
    %v2478 = vunpack.c.l.b16 %v1898
    %v2479 = vunpack.c.h.b16 %v1898
    %v2480 = vunpack.c.l.b16 %v1899
    %v2481 = vunpack.c.h.b16 %v1899
    %v2482 = vunpack.c.l.b16 %v1900
    %v2483 = vunpack.c.h.b16 %v1900
    %v2484 = vunpack.c.l.b16 %v1901
    %v2485 = vunpack.c.h.b16 %v1901
    %v2486 = vunpack.c.l.b16 %v1902
    %v2487 = vunpack.c.h.b16 %v1902
    %v2488 = vunpack.c.l.b16 %v1903
    %v2489 = vunpack.c.h.b16 %v1903
    %v2490 = vunpack.c.l.b16 %v1904
    %v2491 = vunpack.c.h.b16 %v1904
    %v2492 = vunpack.c.l.b16 %v1905
    %v2493 = vunpack.c.h.b16 %v1905
    %v2494 = vunpack.c.l.b16 %v1906
    %v2495 = vunpack.c.h.b16 %v1906
    %v2496 = vunpack.c.l.b16 %v1907
    %v2497 = vunpack.c.h.b16 %v1907
    %v2498 = vunpack.c.l.b16 %v1908
    %v2499 = vunpack.c.h.b16 %v1908
    %v2500 = vunpack.c.l.b16 %v1909
    %v2501 = vunpack.c.h.b16 %v1909
    %v2502 = vunpack.c.l.b16 %v1910
    %v2503 = vunpack.c.h.b16 %v1910
    %v2504 = vunpack.c.l.b16 %v1911
    %v2505 = vunpack.c.h.b16 %v1911
    %v2506 = vunpack.c.l.b16 %v1912
    %v2507 = vunpack.c.h.b16 %v1912
    %v2508 = vunpack.c.l.b16 %v1913
    %v2509 = vunpack.c.h.b16 %v1913
    %v2510 = vunpack.c.l.b16 %v1914
    %v2511 = vunpack.c.h.b16 %v1914
    %v2512 = vunpack.c.l.b16 %v1915
    %v2513 = vunpack.c.h.b16 %v1915
    %v2514 = vunpack.c.l.b16 %v1916
    %v2515 = vunpack.c.h.b16 %v1916
    %v2516 = vunpack.c.l.b16 %v1917
    %v2517 = vunpack.c.h.b16 %v1917
    %v2518 = vunpack.c.l.b16 %v1918
    %v2519 = vunpack.c.h.b16 %v1918
    %v2520 = vunpack.c.l.b16 %v1919
    %v2521 = vunpack.c.h.b16 %v1919
    %v2522 = vunpack.c.l.b16 %v1920
    %v2523 = vunpack.c.h.b16 %v1920
    %v2524 = vunpack.c.l.b16 %v1921
    %v2525 = vunpack.c.h.b16 %v1921
    %v2526 = vunpack.c.l.b16 %v1922
    %v2527 = vunpack.c.h.b16 %v1922
    %v2528 = vunpack.c.l.b16 %v1923
    %v2529 = vunpack.c.h.b16 %v1923
    %v2530 = vunpack.c.l.b16 %v1924
    %v2531 = vunpack.c.h.b16 %v1924
    %v2532 = vunpack.c.l.b16 %v1925
    %v2533 = vunpack.c.h.b16 %v1925
    %v2534 = vunpack.c.l.b16 %v1926
    %v2535 = vunpack.c.h.b16 %v1926
    %v2536 = vunpack.c.l.b16 %v1927
    %v2537 = vunpack.c.h.b16 %v1927
    %v2538 = vunpack.c.l.b16 %v1928
    %v2539 = vunpack.c.h.b16 %v1928
    %v2540 = vunpack.c.l.b16 %v1929
    %v2541 = vunpack.c.h.b16 %v1929
    %v2542 = vunpack.c.l.b16 %v1930
    %v2543 = vunpack.c.h.b16 %v1930
    %v2544 = vunpack.c.l.b16 %v1931
    %v2545 = vunpack.c.h.b16 %v1931
    %v2546 = vunpack.c.l.b16 %v1932
    %v2547 = vunpack.c.h.b16 %v1932
    %v2548 = vunpack.c.l.b16 %v1933
    %v2549 = vunpack.c.h.b16 %v1933
    %v2550 = vunpack.c.l.b16 %v1934
    %v2551 = vunpack.c.h.b16 %v1934
    %v2552 = vunpack.c.l.b16 %v1935
    %v2553 = vunpack.c.h.b16 %v1935
    %v2554 = vunpack.c.l.b16 %v1936
    %v2555 = vunpack.c.h.b16 %v1936
    %v2556 = vunpack.c.l.b16 %v1937
    %v2557 = vunpack.c.h.b16 %v1937
    %v2558 = vunpack.c.l.b16 %v1938
    %v2559 = vunpack.c.h.b16 %v1938
    %v2560 = vunpack.c.l.b16 %v1939
    %v2561 = vunpack.c.h.b16 %v1939
    %v2562 = vunpack.c.l.b16 %v1940
    %v2563 = vunpack.c.h.b16 %v1940
    %v2564 = vunpack.c.l.b16 %v1941
    %v2565 = vunpack.c.h.b16 %v1941
    %v2566 = vunpack.c.l.b16 %v1942
    %v2567 = vunpack.c.h.b16 %v1942
    %v2568 = vunpack.c.l.b16 %v1943
    %v2569 = vunpack.c.h.b16 %v1943
    %v2570 = vunpack.c.l.b16 %v1944
    %v2571 = vunpack.c.h.b16 %v1944
    %v2572 = vunpack.c.l.b16 %v1945
    %v2573 = vunpack.c.h.b16 %v1945
    %v2574 = vunpack.c.l.b16 %v1946
    %v2575 = vunpack.c.h.b16 %v1946
    %v2576 = vunpack.c.l.b16 %v1947
    %v2577 = vunpack.c.h.b16 %v1947
    %v2578 = vunpack.c.l.b16 %v1948
    %v2579 = vunpack.c.h.b16 %v1948
    %v2580 = vunpack.c.l.b16 %v1949
    %v2581 = vunpack.c.h.b16 %v1949
    %v2582 = vunpack.c.l.b16 %v1950
    %v2583 = vunpack.c.h.b16 %v1950
    %v2584 = vunpack.c.l.b16 %v1951
    %v2585 = vunpack.c.h.b16 %v1951
    %v2586 = vunpack.c.l.b16 %v1952
    %v2587 = vunpack.c.h.b16 %v1952
    %v2588 = vunpack.c.l.b16 %v1953
    %v2589 = vunpack.c.h.b16 %v1953
    %v2590 = vunpack.c.l.b16 %v1954
    %v2591 = vunpack.c.h.b16 %v1954
    %v2592 = vunpack.c.l.b16 %v1955
    %v2593 = vunpack.c.h.b16 %v1955
    %v2594 = vunpack.c.l.b16 %v1956
    %v2595 = vunpack.c.h.b16 %v1956
    %v2596 = vunpack.c.l.b16 %v1957
    %v2597 = vunpack.c.h.b16 %v1957
    %v2598 = vunpack.c.l.b16 %v1958
    %v2599 = vunpack.c.h.b16 %v1958
    %v2600 = vunpack.c.l.b16 %v1959
    %v2601 = vunpack.c.h.b16 %v1959
    %v2602 = vunpack.c.l.b16 %v1960
    %v2603 = vunpack.c.h.b16 %v1960
    %v2604 = vunpack.c.l.b16 %v1961
    %v2605 = vunpack.c.h.b16 %v1961
    %v2606 = vunpack.c.l.b16 %v1962
    %v2607 = vunpack.c.h.b16 %v1962
    %v2608 = vunpack.c.l.b16 %v1963
    %v2609 = vunpack.c.h.b16 %v1963
    %v2610 = vunpack.c.l.b16 %v1964
    %v2611 = vunpack.c.h.b16 %v1964
    %v2612 = vunpack.c.l.b16 %v1965
    %v2613 = vunpack.c.h.b16 %v1965
    %v2614 = vunpack.c.l.b16 %v1966
    %v2615 = vunpack.c.h.b16 %v1966
    %v2616 = vunpack.c.l.b16 %v1967
    %v2617 = vunpack.c.h.b16 %v1967
    %v2618 = vunpack.c.l.b16 %v1968
    %v2619 = vunpack.c.h.b16 %v1968
    %v2620 = vunpack.c.l.b16 %v1969
    %v2621 = vunpack.c.h.b16 %v1969
    %v2622 = vunpack.c.l.b16 %v1970
    %v2623 = vunpack.c.h.b16 %v1970
    %v2624 = vunpack.c.l.b16 %v1971
    %v2625 = vunpack.c.h.b16 %v1971
    %v2626 = vunpack.c.l.b16 %v1972
    %v2627 = vunpack.c.h.b16 %v1972
    %v2628 = vunpack.c.l.b16 %v1973
    %v2629 = vunpack.c.h.b16 %v1973
    %v2630 = vunpack.c.l.b16 %v1974
    %v2631 = vunpack.c.h.b16 %v1974
    %v2632 = vunpack.c.l.b16 %v1975
    %v2633 = vunpack.c.h.b16 %v1975
    %v2634 = vunpack.c.l.b16 %v1976
    %v2635 = vunpack.c.h.b16 %v1976
    %v2636 = vunpack.c.l.b16 %v1977
    %v2637 = vunpack.c.h.b16 %v1977
    %v2638 = vunpack.c.l.b16 %v1978
    %v2639 = vunpack.c.h.b16 %v1978
    %v2640 = vunpack.c.l.b16 %v1979
    %v2641 = vunpack.c.h.b16 %v1979
    %v2642 = vunpack.c.l.b16 %v1980
    %v2643 = vunpack.c.h.b16 %v1980
    %v2644 = vunpack.c.l.b16 %v1981
    %v2645 = vunpack.c.h.b16 %v1981
    %v2646 = vunpack.c.l.b16 %v1982
    %v2647 = vunpack.c.h.b16 %v1982
    %v2648 = vunpack.c.l.b16 %v1983
    %v2649 = vunpack.c.h.b16 %v1983
    %v2650 = vunpack.c.l.b16 %v1984
    %v2651 = vunpack.c.h.b16 %v1984
    %v2652 = vunpack.c.l.b16 %v1985
    %v2653 = vunpack.c.h.b16 %v1985
    %v2654 = vunpack.c.l.b16 %v1986
    %v2655 = vunpack.c.h.b16 %v1986
    %v2656 = vunpack.c.l.b16 %v1987
    %v2657 = vunpack.c.h.b16 %v1987
    %v2658 = vunpack.c.l.b16 %v1988
    %v2659 = vunpack.c.h.b16 %v1988
    %v2660 = vunpack.c.l.b16 %v1989
    %v2661 = vunpack.c.h.b16 %v1989
    %v2662 = vunpack.c.l.b16 %v1990
    %v2663 = vunpack.c.h.b16 %v1990
    %v2664 = vunpack.c.l.b16 %v1991
    %v2665 = vunpack.c.h.b16 %v1991
    %v2666 = vunpack.c.l.b16 %v1992
    %v2667 = vunpack.c.h.b16 %v1992
    %v2668 = vunpack.c.l.b16 %v1993
    %v2669 = vunpack.c.h.b16 %v1993
    %v2670 = vunpack.c.l.b16 %v1994
    %v2671 = vunpack.c.h.b16 %v1994
    %v2672 = vunpack.c.l.b16 %v1995
    %v2673 = vunpack.c.h.b16 %v1995
    %v2674 = vunpack.c.l.b16 %v1996
    %v2675 = vunpack.c.h.b16 %v1996
    %v2676 = vunpack.c.l.b16 %v1997
    %v2677 = vunpack.c.h.b16 %v1997
    %v2678 = vunpack.c.l.b16 %v1998
    %v2679 = vunpack.c.h.b16 %v1998
    %v2680 = vunpack.c.l.b16 %v1999
    %v2681 = vunpack.c.h.b16 %v1999
    %v2682 = vunpack.c.l.b16 %v2000
    %v2683 = vunpack.c.h.b16 %v2000
    %v2684 = vunpack.c.l.b16 %v2001
    %v2685 = vunpack.c.h.b16 %v2001
    %v2686 = vunpack.c.l.b16 %v2002
    %v2687 = vunpack.c.h.b16 %v2002
    %v2688 = vunpack.c.l.b16 %v2003
    %v2689 = vunpack.c.h.b16 %v2003
    %v2690 = vunpack.c.l.b16 %v2004
    %v2691 = vunpack.c.h.b16 %v2004
    %v2692 = vunpack.c.l.b16 %v2005
    %v2693 = vunpack.c.h.b16 %v2005
    %v2694 = vunpack.c.l.b16 %v2006
    %v2695 = vunpack.c.h.b16 %v2006
    %v2696 = vunpack.c.l.b16 %v2007
    %v2697 = vunpack.c.h.b16 %v2007
    %v2698 = vunpack.c.l.b16 %v2008
    %v2699 = vunpack.c.h.b16 %v2008
    %v2700 = vunpack.c.l.b16 %v2009
    %v2701 = vunpack.c.h.b16 %v2009
    %v2702 = vunpack.c.l.b16 %v2010
    %v2703 = vunpack.c.h.b16 %v2010
    %v2704 = vunpack.c.l.b16 %v2011
    %v2705 = vunpack.c.h.b16 %v2011
    %v2706 = vunpack.c.l.b16 %v2012
    %v2707 = vunpack.c.h.b16 %v2012
    %v2708 = vunpack.c.l.b16 %v2013
    %v2709 = vunpack.c.h.b16 %v2013
    %v2710 = vunpack.c.l.b16 %v2014
    %v2711 = vunpack.c.h.b16 %v2014
    %v2712 = vunpack.c.l.b16 %v2015
    %v2713 = vunpack.c.h.b16 %v2015
    %v2714 = vunpack.c.l.b16 %v2016
    %v2715 = vunpack.c.h.b16 %v2016
    %v2716 = vunpack.c.l.b16 %v2017
    %v2717 = vunpack.c.h.b16 %v2017
    %v2718 = vunpack.c.l.b16 %v2018
    %v2719 = vunpack.c.h.b16 %v2018
    %v2720 = vunpack.c.l.b16 %v2019
    %v2721 = vunpack.c.h.b16 %v2019
    %v2722 = vunpack.c.l.b16 %v2020
    %v2723 = vunpack.c.h.b16 %v2020
    %v2724 = vunpack.c.l.b16 %v2021
    %v2725 = vunpack.c.h.b16 %v2021
    %v2726 = vunpack.c.l.b16 %v2022
    %v2727 = vunpack.c.h.b16 %v2022
    %v2728 = vunpack.c.l.b16 %v2023
    %v2729 = vunpack.c.h.b16 %v2023
    %v2730 = vunpack.c.l.b16 %v2024
    %v2731 = vunpack.c.h.b16 %v2024
    %v2732 = vunpack.c.l.b16 %v2025
    %v2733 = vunpack.c.h.b16 %v2025
    %v2734 = vunpack.c.l.b16 %v2026
    %v2735 = vunpack.c.h.b16 %v2026
    %v2736 = vunpack.c.l.b16 %v2027
    %v2737 = vunpack.c.h.b16 %v2027
    %v2738 = vunpack.c.l.b16 %v2028
    %v2739 = vunpack.c.h.b16 %v2028
    %v2740 = vunpack.c.l.b16 %v2029
    %v2741 = vunpack.c.h.b16 %v2029
    %v2742 = vunpack.c.l.b16 %v2030
    %v2743 = vunpack.c.h.b16 %v2030
    %v2744 = vunpack.c.l.b16 %v2031
    %v2745 = vunpack.c.h.b16 %v2031
    %v2746 = vunpack.c.l.b16 %v2032
    %v2747 = vunpack.c.h.b16 %v2032
    %v2748 = vunpack.c.l.b16 %v2033
    %v2749 = vunpack.c.h.b16 %v2033
    %v2750 = vunpack.c.l.b16 %v2034
    %v2751 = vunpack.c.h.b16 %v2034
    %v2752 = vunpack.c.l.b16 %v2035
    %v2753 = vunpack.c.h.b16 %v2035
    %v2754 = vunpack.c.l.b16 %v2036
    %v2755 = vunpack.c.h.b16 %v2036
    %v2756 = vunpack.c.l.b16 %v2037
    %v2757 = vunpack.c.h.b16 %v2037
    %v2758 = vunpack.c.l.b16 %v2038
    %v2759 = vunpack.c.h.b16 %v2038
    %v2760 = vunpack.c.l.b16 %v2039
    %v2761 = vunpack.c.h.b16 %v2039
    %v2762 = vunpack.c.l.b16 %v2040
    %v2763 = vunpack.c.h.b16 %v2040
    %v2764 = vunpack.c.l.b16 %v2041
    %v2765 = vunpack.c.h.b16 %v2041
    %v2766 = vunpack.c.l.b16 %v2042
    %v2767 = vunpack.c.h.b16 %v2042
    %v2768 = vunpack.c.l.b16 %v2043
    %v2769 = vunpack.c.h.b16 %v2043
    %v2770 = vunpack.c.l.b16 %v2044
    %v2771 = vunpack.c.h.b16 %v2044
    %v2772 = vunpack.c.l.b16 %v2045
    %v2773 = vunpack.c.h.b16 %v2045
    %v2774 = vunpack.c.l.b16 %v2046
    %v2775 = vunpack.c.h.b16 %v2046
    %v2776 = vunpack.c.l.b16 %v2047
    %v2777 = vunpack.c.h.b16 %v2047
    %v2778 = vunpack.c.l.b16 %v2048
    %v2779 = vunpack.c.h.b16 %v2048
    %v2780 = vunpack.c.l.b16 %v2049
    %v2781 = vunpack.c.h.b16 %v2049
    %v2782 = vunpack.c.l.b16 %v2050
    %v2783 = vunpack.c.h.b16 %v2050
    %v2784 = vunpack.c.l.b16 %v2051
    %v2785 = vunpack.c.h.b16 %v2051
    %v2786 = vunpack.c.l.b16 %v2052
    %v2787 = vunpack.c.h.b16 %v2052
    %v2788 = vunpack.c.l.b16 %v2053
    %v2789 = vunpack.c.h.b16 %v2053
    %v2790 = vunpack.c.l.b16 %v2054
    %v2791 = vunpack.c.h.b16 %v2054
    %v2792 = vunpack.c.l.b16 %v2055
    %v2793 = vunpack.c.h.b16 %v2055
    %v2794 = vunpack.c.l.b16 %v2056
    %v2795 = vunpack.c.h.b16 %v2056
    %v2796 = vunpack.c.l.b16 %v2057
    %v2797 = vunpack.c.h.b16 %v2057
    %v2798 = vunpack.c.l.b16 %v2058
    %v2799 = vunpack.c.h.b16 %v2058
    %v2800 = vunpack.c.l.b16 %v2059
    %v2801 = vunpack.c.h.b16 %v2059
    %v2802 = vunpack.c.l.b16 %v2060
    %v2803 = vunpack.c.h.b16 %v2060
    %v2804 = vunpack.c.l.b16 %v2061
    %v2805 = vunpack.c.h.b16 %v2061
    %v2806 = vunpack.c.l.b16 %v2062
    %v2807 = vunpack.c.h.b16 %v2062
    %v2808 = vunpack.c.l.b16 %v2063
    %v2809 = vunpack.c.h.b16 %v2063
    %v2810 = vunpack.c.l.b16 %v2064
    %v2811 = vunpack.c.h.b16 %v2064
    %v2812 = vunpack.c.l.b16 %v2065
    %v2813 = vunpack.c.h.b16 %v2065
    %v2814 = vunpack.c.l.b16 %v2066
    %v2815 = vunpack.c.h.b16 %v2066
    %v2816 = vunpack.c.l.b16 %v2067
    %v2817 = vunpack.c.h.b16 %v2067
    %v2818 = vunpack.c.l.b16 %v2068
    %v2819 = vunpack.c.h.b16 %v2068
    %v2820 = vunpack.c.l.b16 %v2069
    %v2821 = vunpack.c.h.b16 %v2069
    %v2822 = vunpack.c.l.b16 %v2070
    %v2823 = vunpack.c.h.b16 %v2070
    %v2824 = vunpack.c.l.b16 %v2071
    %v2825 = vunpack.c.h.b16 %v2071
    %v2826 = vunpack.c.l.b16 %v2072
    %v2827 = vunpack.c.h.b16 %v2072
    %v2828 = vunpack.c.l.b16 %v2073
    %v2829 = vunpack.c.h.b16 %v2073
    %v2830 = vunpack.c.l.b16 %v2074
    %v2831 = vunpack.c.h.b16 %v2074
    %v2832 = vunpack.c.l.b16 %v2075
    %v2833 = vunpack.c.h.b16 %v2075
    %v2834 = vunpack.c.l.b16 %v2076
    %v2835 = vunpack.c.h.b16 %v2076
    %v2836 = vunpack.c.l.b16 %v2077
    %v2837 = vunpack.c.h.b16 %v2077
    %v2838 = vunpack.c.l.b16 %v2078
    %v2839 = vunpack.c.h.b16 %v2078
    %v2840 = vunpack.c.l.b16 %v2079
    %v2841 = vunpack.c.h.b16 %v2079
    %v2842 = vunpack.c.l.b16 %v2080
    %v2843 = vunpack.c.h.b16 %v2080
    %v2844 = vunpack.c.l.b16 %v2081
    %v2845 = vunpack.c.h.b16 %v2081
    %v2846 = vunpack.c.l.b16 %v2082
    %v2847 = vunpack.c.h.b16 %v2082
    %v2848 = vunpack.c.l.b16 %v2083
    %v2849 = vunpack.c.h.b16 %v2083
    %v2850 = vunpack.c.l.b16 %v2084
    %v2851 = vunpack.c.h.b16 %v2084
    %v2852 = vunpack.c.l.b16 %v2085
    %v2853 = vunpack.c.h.b16 %v2085
    %v2854 = vunpack.c.l.b16 %v2086
    %v2855 = vunpack.c.h.b16 %v2086
    %v2856 = vunpack.c.l.b16 %v2087
    %v2857 = vunpack.c.h.b16 %v2087
    %v2858 = vunpack.c.l.b16 %v2088
    %v2859 = vunpack.c.h.b16 %v2088
    %v2860 = vunpack.c.l.b16 %v2089
    %v2861 = vunpack.c.h.b16 %v2089
    %v2862 = vunpack.c.l.b16 %v2090
    %v2863 = vunpack.c.h.b16 %v2090
    %v2864 = vunpack.c.l.b16 %v2091
    %v2865 = vunpack.c.h.b16 %v2091
    %v2866 = vunpack.c.l.b16 %v2092
    %v2867 = vunpack.c.h.b16 %v2092
    %v2868 = vunpack.c.l.b16 %v2093
    %v2869 = vunpack.c.h.b16 %v2093
    %v2870 = vunpack.c.l.b16 %v2094
    %v2871 = vunpack.c.h.b16 %v2094
    %v2872 = vunpack.c.l.b16 %v2095
    %v2873 = vunpack.c.h.b16 %v2095
    %v2874 = vunpack.c.l.b16 %v2096
    %v2875 = vunpack.c.h.b16 %v2096
    %v2876 = vunpack.c.l.b16 %v2097
    %v2877 = vunpack.c.h.b16 %v2097
    %v2878 = vunpack.c.l.b16 %v2098
    %v2879 = vunpack.c.h.b16 %v2098
    %v2880 = vunpack.c.l.b16 %v2099
    %v2881 = vunpack.c.h.b16 %v2099
    %v2882 = vunpack.c.l.b16 %v2100
    %v2883 = vunpack.c.h.b16 %v2100
    %v2884 = vunpack.c.l.b16 %v2101
    %v2885 = vunpack.c.h.b16 %v2101
    %v2886 = vunpack.c.l.b16 %v2102
    %v2887 = vunpack.c.h.b16 %v2102
    %v2888 = vunpack.c.l.b16 %v2103
    %v2889 = vunpack.c.h.b16 %v2103
    %v2890 = vunpack.c.l.b16 %v2104
    %v2891 = vunpack.c.h.b16 %v2104
    %v2892 = vunpack.c.l.b16 %v2105
    %v2893 = vunpack.c.h.b16 %v2105
    %v2894 = vunpack.c.l.b16 %v2106
    %v2895 = vunpack.c.h.b16 %v2106
    %v2896 = vunpack.c.l.b16 %v2107
    %v2897 = vunpack.c.h.b16 %v2107
    %v2898 = vunpack.c.l.b16 %v2108
    %v2899 = vunpack.c.h.b16 %v2108
    %v2900 = vunpack.c.l.b16 %v2109
    %v2901 = vunpack.c.h.b16 %v2109
    %v2902 = vunpack.c.l.b16 %v2110
    %v2903 = vunpack.c.h.b16 %v2110
    %v2904 = vunpack.c.l.b16 %v2111
    %v2905 = vunpack.c.h.b16 %v2111
    %v2906 = vunpack.c.l.b16 %v2112
    %v2907 = vunpack.c.h.b16 %v2112
    %v2908 = vunpack.c.l.b16 %v2113
    %v2909 = vunpack.c.h.b16 %v2113
    %v2910 = vunpack.c.l.b16 %v2114
    %v2911 = vunpack.c.h.b16 %v2114
    %v2912 = vunpack.c.l.b16 %v2115
    %v2913 = vunpack.c.h.b16 %v2115
    %v2914 = vunpack.c.l.b16 %v2116
    %v2915 = vunpack.c.h.b16 %v2116
    %v2916 = vunpack.c.l.b16 %v2117
    %v2917 = vunpack.c.h.b16 %v2117
    %v2918 = vunpack.c.l.b16 %v2118
    %v2919 = vunpack.c.h.b16 %v2118
    %v2920 = vunpack.c.l.b16 %v2119
    %v2921 = vunpack.c.h.b16 %v2119
    %v2922 = vunpack.c.l.b16 %v2120
    %v2923 = vunpack.c.h.b16 %v2120
    %v2924 = vunpack.c.l.b16 %v2121
    %v2925 = vunpack.c.h.b16 %v2121
    %v2926 = vunpack.c.l.b16 %v2122
    %v2927 = vunpack.c.h.b16 %v2122
    %v2928 = vunpack.c.l.b16 %v2123
    %v2929 = vunpack.c.h.b16 %v2123
    %v2930 = vunpack.c.l.b16 %v2124
    %v2931 = vunpack.c.h.b16 %v2124
    %v2932 = vunpack.c.l.b16 %v2125
    %v2933 = vunpack.c.h.b16 %v2125
    %v2934 = vunpack.c.l.b16 %v2126
    %v2935 = vunpack.c.h.b16 %v2126
    %v2936 = vunpack.c.l.b16 %v2127
    %v2937 = vunpack.c.h.b16 %v2127
    %v2938 = vunpack.c.l.b16 %v2128
    %v2939 = vunpack.c.h.b16 %v2128
    %v2940 = vunpack.c.l.b16 %v2129
    %v2941 = vunpack.c.h.b16 %v2129
    %v2942 = vunpack.c.l.b16 %v2130
    %v2943 = vunpack.c.h.b16 %v2130
    %v2944 = vunpack.c.l.b16 %v2131
    %v2945 = vunpack.c.h.b16 %v2131
    %v2946 = vpack.c.b16 %v2442, %v2434
    %v2947 = vpack.c.b16 %v2443, %v2435
    %v2948 = vpack.c.b16 %v2444, %v2436
    %v2949 = vpack.c.b16 %v2445, %v2437
    %v2950 = vpack.c.b16 %v2446, %v2438
    %v2951 = vpack.c.b16 %v2447, %v2439
    %v2952 = vpack.c.b16 %v2448, %v2440
    %v2953 = vpack.c.b16 %v2449, %v2441
    %v2954 = vpack.c.b16 %v2458, %v2450
    %v2955 = vpack.c.b16 %v2459, %v2451
    %v2956 = vpack.c.b16 %v2460, %v2452
    %v2957 = vpack.c.b16 %v2461, %v2453
    %v2958 = vpack.c.b16 %v2462, %v2454
    %v2959 = vpack.c.b16 %v2463, %v2455
    %v2960 = vpack.c.b16 %v2464, %v2456
    %v2961 = vpack.c.b16 %v2465, %v2457
    %v2962 = vpack.c.b16 %v2474, %v2466
    %v2963 = vpack.c.b16 %v2475, %v2467
    %v2964 = vpack.c.b16 %v2476, %v2468
    %v2965 = vpack.c.b16 %v2477, %v2469
    %v2966 = vpack.c.b16 %v2478, %v2470
    %v2967 = vpack.c.b16 %v2479, %v2471
    %v2968 = vpack.c.b16 %v2480, %v2472
    %v2969 = vpack.c.b16 %v2481, %v2473
    %v2970 = vpack.c.b16 %v2490, %v2482
    %v2971 = vpack.c.b16 %v2491, %v2483
    %v2972 = vpack.c.b16 %v2492, %v2484
    %v2973 = vpack.c.b16 %v2493, %v2485
    %v2974 = vpack.c.b16 %v2494, %v2486
    %v2975 = vpack.c.b16 %v2495, %v2487
    %v2976 = vpack.c.b16 %v2496, %v2488
    %v2977 = vpack.c.b16 %v2497, %v2489
    %v2978 = vpack.c.b16 %v2506, %v2498
    %v2979 = vpack.c.b16 %v2507, %v2499
    %v2980 = vpack.c.b16 %v2508, %v2500
    %v2981 = vpack.c.b16 %v2509, %v2501
    %v2982 = vpack.c.b16 %v2510, %v2502
    %v2983 = vpack.c.b16 %v2511, %v2503
    %v2984 = vpack.c.b16 %v2512, %v2504
    %v2985 = vpack.c.b16 %v2513, %v2505
    %v2986 = vpack.c.b16 %v2522, %v2514
    %v2987 = vpack.c.b16 %v2523, %v2515
    %v2988 = vpack.c.b16 %v2524, %v2516
    %v2989 = vpack.c.b16 %v2525, %v2517
    %v2990 = vpack.c.b16 %v2526, %v2518
    %v2991 = vpack.c.b16 %v2527, %v2519
    %v2992 = vpack.c.b16 %v2528, %v2520
    %v2993 = vpack.c.b16 %v2529, %v2521
    %v2994 = vpack.c.b16 %v2538, %v2530
    %v2995 = vpack.c.b16 %v2539, %v2531
    %v2996 = vpack.c.b16 %v2540, %v2532
    %v2997 = vpack.c.b16 %v2541, %v2533
    %v2998 = vpack.c.b16 %v2542, %v2534
    %v2999 = vpack.c.b16 %v2543, %v2535
    %v3000 = vpack.c.b16 %v2544, %v2536
    %v3001 = vpack.c.b16 %v2545, %v2537
    %v3002 = vpack.c.b16 %v2554, %v2546
    %v3003 = vpack.c.b16 %v2555, %v2547
    %v3004 = vpack.c.b16 %v2556, %v2548
    %v3005 = vpack.c.b16 %v2557, %v2549
    %v3006 = vpack.c.b16 %v2558, %v2550
    %v3007 = vpack.c.b16 %v2559, %v2551
    %v3008 = vpack.c.b16 %v2560, %v2552
    %v3009 = vpack.c.b16 %v2561, %v2553
    %v3010 = vpack.c.b16 %v2570, %v2562
    %v3011 = vpack.c.b16 %v2571, %v2563
    %v3012 = vpack.c.b16 %v2572, %v2564
    %v3013 = vpack.c.b16 %v2573, %v2565
    %v3014 = vpack.c.b16 %v2574, %v2566
    %v3015 = vpack.c.b16 %v2575, %v2567
    %v3016 = vpack.c.b16 %v2576, %v2568
    %v3017 = vpack.c.b16 %v2577, %v2569
    %v3018 = vpack.c.b16 %v2586, %v2578
    %v3019 = vpack.c.b16 %v2587, %v2579
    %v3020 = vpack.c.b16 %v2588, %v2580
    %v3021 = vpack.c.b16 %v2589, %v2581
    %v3022 = vpack.c.b16 %v2590, %v2582
    %v3023 = vpack.c.b16 %v2591, %v2583
    %v3024 = vpack.c.b16 %v2592, %v2584
    %v3025 = vpack.c.b16 %v2593, %v2585
    %v3026 = vpack.c.b16 %v2602, %v2594
    %v3027 = vpack.c.b16 %v2603, %v2595
    %v3028 = vpack.c.b16 %v2604, %v2596
    %v3029 = vpack.c.b16 %v2605, %v2597
    %v3030 = vpack.c.b16 %v2606, %v2598
    %v3031 = vpack.c.b16 %v2607, %v2599
    %v3032 = vpack.c.b16 %v2608, %v2600
    %v3033 = vpack.c.b16 %v2609, %v2601
    %v3034 = vpack.c.b16 %v2618, %v2610
    %v3035 = vpack.c.b16 %v2619, %v2611
    %v3036 = vpack.c.b16 %v2620, %v2612
    %v3037 = vpack.c.b16 %v2621, %v2613
    %v3038 = vpack.c.b16 %v2622, %v2614
    %v3039 = vpack.c.b16 %v2623, %v2615
    %v3040 = vpack.c.b16 %v2624, %v2616
    %v3041 = vpack.c.b16 %v2625, %v2617
    %v3042 = vpack.c.b16 %v2634, %v2626
    %v3043 = vpack.c.b16 %v2635, %v2627
    %v3044 = vpack.c.b16 %v2636, %v2628
    %v3045 = vpack.c.b16 %v2637, %v2629
    %v3046 = vpack.c.b16 %v2638, %v2630
    %v3047 = vpack.c.b16 %v2639, %v2631
    %v3048 = vpack.c.b16 %v2640, %v2632
    %v3049 = vpack.c.b16 %v2641, %v2633
    %v3050 = vpack.c.b16 %v2650, %v2642
    %v3051 = vpack.c.b16 %v2651, %v2643
    %v3052 = vpack.c.b16 %v2652, %v2644
    %v3053 = vpack.c.b16 %v2653, %v2645
    %v3054 = vpack.c.b16 %v2654, %v2646
    %v3055 = vpack.c.b16 %v2655, %v2647
    %v3056 = vpack.c.b16 %v2656, %v2648
    %v3057 = vpack.c.b16 %v2657, %v2649
    %v3058 = vpack.c.b16 %v2666, %v2658
    %v3059 = vpack.c.b16 %v2667, %v2659
    %v3060 = vpack.c.b16 %v2668, %v2660
    %v3061 = vpack.c.b16 %v2669, %v2661
    %v3062 = vpack.c.b16 %v2670, %v2662
    %v3063 = vpack.c.b16 %v2671, %v2663
    %v3064 = vpack.c.b16 %v2672, %v2664
    %v3065 = vpack.c.b16 %v2673, %v2665
    %v3066 = vpack.c.b16 %v2682, %v2674
    %v3067 = vpack.c.b16 %v2683, %v2675
    %v3068 = vpack.c.b16 %v2684, %v2676
    %v3069 = vpack.c.b16 %v2685, %v2677
    %v3070 = vpack.c.b16 %v2686, %v2678
    %v3071 = vpack.c.b16 %v2687, %v2679
    %v3072 = vpack.c.b16 %v2688, %v2680
    %v3073 = vpack.c.b16 %v2689, %v2681
    %v3074 = vpack.c.b16 %v2698, %v2690
    %v3075 = vpack.c.b16 %v2699, %v2691
    %v3076 = vpack.c.b16 %v2700, %v2692
    %v3077 = vpack.c.b16 %v2701, %v2693
    %v3078 = vpack.c.b16 %v2702, %v2694
    %v3079 = vpack.c.b16 %v2703, %v2695
    %v3080 = vpack.c.b16 %v2704, %v2696
    %v3081 = vpack.c.b16 %v2705, %v2697
    %v3082 = vpack.c.b16 %v2714, %v2706
    %v3083 = vpack.c.b16 %v2715, %v2707
    %v3084 = vpack.c.b16 %v2716, %v2708
    %v3085 = vpack.c.b16 %v2717, %v2709
    %v3086 = vpack.c.b16 %v2718, %v2710
    %v3087 = vpack.c.b16 %v2719, %v2711
    %v3088 = vpack.c.b16 %v2720, %v2712
    %v3089 = vpack.c.b16 %v2721, %v2713
    %v3090 = vpack.c.b16 %v2730, %v2722
    %v3091 = vpack.c.b16 %v2731, %v2723
    %v3092 = vpack.c.b16 %v2732, %v2724
    %v3093 = vpack.c.b16 %v2733, %v2725
    %v3094 = vpack.c.b16 %v2734, %v2726
    %v3095 = vpack.c.b16 %v2735, %v2727
    %v3096 = vpack.c.b16 %v2736, %v2728
    %v3097 = vpack.c.b16 %v2737, %v2729
    %v3098 = vpack.c.b16 %v2746, %v2738
    %v3099 = vpack.c.b16 %v2747, %v2739
    %v3100 = vpack.c.b16 %v2748, %v2740
    %v3101 = vpack.c.b16 %v2749, %v2741
    %v3102 = vpack.c.b16 %v2750, %v2742
    %v3103 = vpack.c.b16 %v2751, %v2743
    %v3104 = vpack.c.b16 %v2752, %v2744
    %v3105 = vpack.c.b16 %v2753, %v2745
    %v3106 = vpack.c.b16 %v2762, %v2754
    %v3107 = vpack.c.b16 %v2763, %v2755
    %v3108 = vpack.c.b16 %v2764, %v2756
    %v3109 = vpack.c.b16 %v2765, %v2757
    %v3110 = vpack.c.b16 %v2766, %v2758
    %v3111 = vpack.c.b16 %v2767, %v2759
    %v3112 = vpack.c.b16 %v2768, %v2760
    %v3113 = vpack.c.b16 %v2769, %v2761
    %v3114 = vpack.c.b16 %v2778, %v2770
    %v3115 = vpack.c.b16 %v2779, %v2771
    %v3116 = vpack.c.b16 %v2780, %v2772
    %v3117 = vpack.c.b16 %v2781, %v2773
    %v3118 = vpack.c.b16 %v2782, %v2774
    %v3119 = vpack.c.b16 %v2783, %v2775
    %v3120 = vpack.c.b16 %v2784, %v2776
    %v3121 = vpack.c.b16 %v2785, %v2777
    %v3122 = vpack.c.b16 %v2794, %v2786
    %v3123 = vpack.c.b16 %v2795, %v2787
    %v3124 = vpack.c.b16 %v2796, %v2788
    %v3125 = vpack.c.b16 %v2797, %v2789
    %v3126 = vpack.c.b16 %v2798, %v2790
    %v3127 = vpack.c.b16 %v2799, %v2791
    %v3128 = vpack.c.b16 %v2800, %v2792
    %v3129 = vpack.c.b16 %v2801, %v2793
    %v3130 = vpack.c.b16 %v2810, %v2802
    %v3131 = vpack.c.b16 %v2811, %v2803
    %v3132 = vpack.c.b16 %v2812, %v2804
    %v3133 = vpack.c.b16 %v2813, %v2805
    %v3134 = vpack.c.b16 %v2814, %v2806
    %v3135 = vpack.c.b16 %v2815, %v2807
    %v3136 = vpack.c.b16 %v2816, %v2808
    %v3137 = vpack.c.b16 %v2817, %v2809
    %v3138 = vpack.c.b16 %v2826, %v2818
    %v3139 = vpack.c.b16 %v2827, %v2819
    %v3140 = vpack.c.b16 %v2828, %v2820
    %v3141 = vpack.c.b16 %v2829, %v2821
    %v3142 = vpack.c.b16 %v2830, %v2822
    %v3143 = vpack.c.b16 %v2831, %v2823
    %v3144 = vpack.c.b16 %v2832, %v2824
    %v3145 = vpack.c.b16 %v2833, %v2825
    %v3146 = vpack.c.b16 %v2842, %v2834
    %v3147 = vpack.c.b16 %v2843, %v2835
    %v3148 = vpack.c.b16 %v2844, %v2836
    %v3149 = vpack.c.b16 %v2845, %v2837
    %v3150 = vpack.c.b16 %v2846, %v2838
    %v3151 = vpack.c.b16 %v2847, %v2839
    %v3152 = vpack.c.b16 %v2848, %v2840
    %v3153 = vpack.c.b16 %v2849, %v2841
    %v3154 = vpack.c.b16 %v2858, %v2850
    %v3155 = vpack.c.b16 %v2859, %v2851
    %v3156 = vpack.c.b16 %v2860, %v2852
    %v3157 = vpack.c.b16 %v2861, %v2853
    %v3158 = vpack.c.b16 %v2862, %v2854
    %v3159 = vpack.c.b16 %v2863, %v2855
    %v3160 = vpack.c.b16 %v2864, %v2856
    %v3161 = vpack.c.b16 %v2865, %v2857
    %v3162 = vpack.c.b16 %v2874, %v2866
    %v3163 = vpack.c.b16 %v2875, %v2867
    %v3164 = vpack.c.b16 %v2876, %v2868
    %v3165 = vpack.c.b16 %v2877, %v2869
    %v3166 = vpack.c.b16 %v2878, %v2870
    %v3167 = vpack.c.b16 %v2879, %v2871
    %v3168 = vpack.c.b16 %v2880, %v2872
    %v3169 = vpack.c.b16 %v2881, %v2873
    %v3170 = vpack.c.b16 %v2890, %v2882
    %v3171 = vpack.c.b16 %v2891, %v2883
    %v3172 = vpack.c.b16 %v2892, %v2884
    %v3173 = vpack.c.b16 %v2893, %v2885
    %v3174 = vpack.c.b16 %v2894, %v2886
    %v3175 = vpack.c.b16 %v2895, %v2887
    %v3176 = vpack.c.b16 %v2896, %v2888
    %v3177 = vpack.c.b16 %v2897, %v2889
    %v3178 = vpack.c.b16 %v2906, %v2898
    %v3179 = vpack.c.b16 %v2907, %v2899
    %v3180 = vpack.c.b16 %v2908, %v2900
    %v3181 = vpack.c.b16 %v2909, %v2901
    %v3182 = vpack.c.b16 %v2910, %v2902
    %v3183 = vpack.c.b16 %v2911, %v2903
    %v3184 = vpack.c.b16 %v2912, %v2904
    %v3185 = vpack.c.b16 %v2913, %v2905
    %v3186 = vpack.c.b16 %v2922, %v2914
    %v3187 = vpack.c.b16 %v2923, %v2915
    %v3188 = vpack.c.b16 %v2924, %v2916
    %v3189 = vpack.c.b16 %v2925, %v2917
    %v3190 = vpack.c.b16 %v2926, %v2918
    %v3191 = vpack.c.b16 %v2927, %v2919
    %v3192 = vpack.c.b16 %v2928, %v2920
    %v3193 = vpack.c.b16 %v2929, %v2921
    %v3194 = vpack.c.b16 %v2938, %v2930
    %v3195 = vpack.c.b16 %v2939, %v2931
    %v3196 = vpack.c.b16 %v2940, %v2932
    %v3197 = vpack.c.b16 %v2941, %v2933
    %v3198 = vpack.c.b16 %v2942, %v2934
    %v3199 = vpack.c.b16 %v2943, %v2935
    %v3200 = vpack.c.b16 %v2944, %v2936
    %v3201 = vpack.c.b16 %v2945, %v2937
    %3458 = vmatprep.subr.bf16.mxu0 %v3003
    %3459 = vmatpush1.bf16.msra.mxu0 %v3002
    %3460 = vmatprep.subr.bf16.mxu0 %v2995
    %3461 = vmatpush1.bf16.msra.mxu0 %v2994
    %3462 = vmatprep.subr.bf16.mxu0 %v2987
    %3463 = vmatpush1.bf16.msra.mxu0 %v2986
    %3464 = vmatprep.subr.bf16.mxu0 %v2979
    %3465 = vmatpush1.bf16.msra.mxu0 %v2978
    %3466 = vmatprep.subr.bf16.mxu0 %v2971
    %3467 = vmatpush1.bf16.msra.mxu0 %v2970
    %3468 = vmatprep.subr.bf16.mxu0 %v2963
    %3469 = vmatpush1.bf16.msra.mxu0 %v2962
    %3470 = vmatprep.subr.bf16.mxu0 %v2955
    %3471 = vmatpush1.bf16.msra.mxu0 %v2954
    %3472 = vmatprep.subr.bf16.mxu0 %v2947
    %3473 = vmatpush1.bf16.msra.mxu0 %v2946
    %3474 = vmatprep.subr.bf16.mxu0 %v3067
    %3475 = vmatpush2.bf16.msra.mxu0 %v3066
    %3476 = vmatprep.subr.bf16.mxu0 %v3059
    %3477 = vmatpush2.bf16.msra.mxu0 %v3058
    %3478 = vmatprep.subr.bf16.mxu0 %v3051
    %3479 = vmatpush2.bf16.msra.mxu0 %v3050
    %3480 = vmatprep.subr.bf16.mxu0 %v3043
    %3481 = vmatpush2.bf16.msra.mxu0 %v3042
    %3482 = vmatprep.subr.bf16.mxu0 %v3035
    %3483 = vmatpush2.bf16.msra.mxu0 %v3034
    %3484 = vmatprep.subr.bf16.mxu0 %v3027
    %3485 = vmatpush2.bf16.msra.mxu0 %v3026
    %3486 = vmatprep.subr.bf16.mxu0 %v3019
    %3487 = vmatpush2.bf16.msra.mxu0 %v3018
    %3488 = vmatprep.subr.bf16.mxu0 %v3011
    %3489 = vmatpush2.bf16.msra.mxu0 %v3010
    %3490 = vmatprep.mubr.bf16.mxu0 %v2133
    %3491 = vmatmul.mubr.bf16.gmra.mxu0 %v2132
    %v3492 = vpop.f32.mrf.mxu0
    %v3493 = vadd.f32 %v2141, %v3492
    %v3494 = vpop.f32.mrf.mxu0
    %v3495 = vadd.f32 %v2145, %v3494
    %v3496 = vpop.f32.mrf.mxu0
    %v3497 = vpop.f32.mrf.mxu0
    %3498 = vdwg.mxu0
    %3499 = vmatprep.subr.bf16.mxu0 %v3131
    %3500 = vmatpush1.bf16.msra.mxu0 %v3130
    %3501 = vmatprep.subr.bf16.mxu0 %v3123
    %3502 = vmatpush1.bf16.msra.mxu0 %v3122
    %3503 = vmatprep.subr.bf16.mxu0 %v3115
    %3504 = vmatpush1.bf16.msra.mxu0 %v3114
    %3505 = vmatprep.subr.bf16.mxu0 %v3107
    %3506 = vmatpush1.bf16.msra.mxu0 %v3106
    %3507 = vmatprep.subr.bf16.mxu0 %v3099
    %3508 = vmatpush1.bf16.msra.mxu0 %v3098
    %3509 = vmatprep.subr.bf16.mxu0 %v3091
    %3510 = vmatpush1.bf16.msra.mxu0 %v3090
    %3511 = vmatprep.subr.bf16.mxu0 %v3083
    %3512 = vmatpush1.bf16.msra.mxu0 %v3082
    %3513 = vmatprep.subr.bf16.mxu0 %v3075
    %3514 = vmatpush1.bf16.msra.mxu0 %v3074
    %3515 = vmatprep.subr.bf16.mxu0 %v3195
    %3516 = vmatpush2.bf16.msra.mxu0 %v3194
    %3517 = vmatprep.subr.bf16.mxu0 %v3187
    %3518 = vmatpush2.bf16.msra.mxu0 %v3186
    %3519 = vmatprep.subr.bf16.mxu0 %v3179
    %3520 = vmatpush2.bf16.msra.mxu0 %v3178
    %3521 = vmatprep.subr.bf16.mxu0 %v3171
    %3522 = vmatpush2.bf16.msra.mxu0 %v3170
    %3523 = vmatprep.subr.bf16.mxu0 %v3163
    %3524 = vmatpush2.bf16.msra.mxu0 %v3162
    %3525 = vmatprep.subr.bf16.mxu0 %v3155
    %3526 = vmatpush2.bf16.msra.mxu0 %v3154
    %3527 = vmatprep.subr.bf16.mxu0 %v3147
    %3528 = vmatpush2.bf16.msra.mxu0 %v3146
    %3529 = vmatprep.subr.bf16.mxu0 %v3139
    %3530 = vmatpush2.bf16.msra.mxu0 %v3138
    %3531 = vmatprep.mubr.bf16.mxu0 %v2135
    %3532 = vmatmul.mubr.bf16.gmra.mxu0 %v2134
    %v3533 = vpop.f32.mrf.mxu0
    %v3534 = vadd.f32 %v3493, %v3533
    %v3535 = vpop.f32.mrf.mxu0
    %v3536 = vadd.f32 %v3495, %v3535
    %v3537 = vpop.f32.mrf.mxu0
    %v3538 = vpop.f32.mrf.mxu0
    %3539 = vdwg.mxu0
    %3540 = vmatprep.subr.bf16.mxu0 %v3005
    %3541 = vmatpush1.bf16.msra.mxu0 %v3004
    %3542 = vmatprep.subr.bf16.mxu0 %v2997
    %3543 = vmatpush1.bf16.msra.mxu0 %v2996
    %3544 = vmatprep.subr.bf16.mxu0 %v2989
    %3545 = vmatpush1.bf16.msra.mxu0 %v2988
    %3546 = vmatprep.subr.bf16.mxu0 %v2981
    %3547 = vmatpush1.bf16.msra.mxu0 %v2980
    %3548 = vmatprep.subr.bf16.mxu0 %v2973
    %3549 = vmatpush1.bf16.msra.mxu0 %v2972
    %3550 = vmatprep.subr.bf16.mxu0 %v2965
    %3551 = vmatpush1.bf16.msra.mxu0 %v2964
    %3552 = vmatprep.subr.bf16.mxu0 %v2957
    %3553 = vmatpush1.bf16.msra.mxu0 %v2956
    %3554 = vmatprep.subr.bf16.mxu0 %v2949
    %3555 = vmatpush1.bf16.msra.mxu0 %v2948
    %3556 = vmatprep.subr.bf16.mxu0 %v3069
    %3557 = vmatpush2.bf16.msra.mxu0 %v3068
    %3558 = vmatprep.subr.bf16.mxu0 %v3061
    %3559 = vmatpush2.bf16.msra.mxu0 %v3060
    %3560 = vmatprep.subr.bf16.mxu0 %v3053
    %3561 = vmatpush2.bf16.msra.mxu0 %v3052
    %3562 = vmatprep.subr.bf16.mxu0 %v3045
    %3563 = vmatpush2.bf16.msra.mxu0 %v3044
    %3564 = vmatprep.subr.bf16.mxu0 %v3037
    %3565 = vmatpush2.bf16.msra.mxu0 %v3036
    %3566 = vmatprep.subr.bf16.mxu0 %v3029
    %3567 = vmatpush2.bf16.msra.mxu0 %v3028
    %3568 = vmatprep.subr.bf16.mxu0 %v3021
    %3569 = vmatpush2.bf16.msra.mxu0 %v3020
    %3570 = vmatprep.subr.bf16.mxu0 %v3013
    %3571 = vmatpush2.bf16.msra.mxu0 %v3012
    %3572 = vmatprep.mubr.bf16.mxu0 %v2133
    %3573 = vmatmul.mubr.bf16.gmra.mxu0 %v2132
    %v3574 = vpop.f32.mrf.mxu0
    %v3575 = vadd.f32 %v2149, %v3574
    %v3576 = vpop.f32.mrf.mxu0
    %v3577 = vadd.f32 %v2153, %v3576
    %v3578 = vpop.f32.mrf.mxu0
    %v3579 = vpop.f32.mrf.mxu0
    %3580 = vdwg.mxu0
    %3581 = vmatprep.subr.bf16.mxu0 %v3133
    %3582 = vmatpush1.bf16.msra.mxu0 %v3132
    %3583 = vmatprep.subr.bf16.mxu0 %v3125
    %3584 = vmatpush1.bf16.msra.mxu0 %v3124
    %3585 = vmatprep.subr.bf16.mxu0 %v3117
    %3586 = vmatpush1.bf16.msra.mxu0 %v3116
    %3587 = vmatprep.subr.bf16.mxu0 %v3109
    %3588 = vmatpush1.bf16.msra.mxu0 %v3108
    %3589 = vmatprep.subr.bf16.mxu0 %v3101
    %3590 = vmatpush1.bf16.msra.mxu0 %v3100
    %3591 = vmatprep.subr.bf16.mxu0 %v3093
    %3592 = vmatpush1.bf16.msra.mxu0 %v3092
    %3593 = vmatprep.subr.bf16.mxu0 %v3085
    %3594 = vmatpush1.bf16.msra.mxu0 %v3084
    %3595 = vmatprep.subr.bf16.mxu0 %v3077
    %3596 = vmatpush1.bf16.msra.mxu0 %v3076
    %3597 = vmatprep.subr.bf16.mxu0 %v3197
    %3598 = vmatpush2.bf16.msra.mxu0 %v3196
    %3599 = vmatprep.subr.bf16.mxu0 %v3189
    %3600 = vmatpush2.bf16.msra.mxu0 %v3188
    %3601 = vmatprep.subr.bf16.mxu0 %v3181
    %3602 = vmatpush2.bf16.msra.mxu0 %v3180
    %3603 = vmatprep.subr.bf16.mxu0 %v3173
    %3604 = vmatpush2.bf16.msra.mxu0 %v3172
    %3605 = vmatprep.subr.bf16.mxu0 %v3165
    %3606 = vmatpush2.bf16.msra.mxu0 %v3164
    %3607 = vmatprep.subr.bf16.mxu0 %v3157
    %3608 = vmatpush2.bf16.msra.mxu0 %v3156
    %3609 = vmatprep.subr.bf16.mxu0 %v3149
    %3610 = vmatpush2.bf16.msra.mxu0 %v3148
    %3611 = vmatprep.subr.bf16.mxu0 %v3141
    %3612 = vmatpush2.bf16.msra.mxu0 %v3140
    %3613 = vmatprep.mubr.bf16.mxu0 %v2135
    %3614 = vmatmul.mubr.bf16.gmra.mxu0 %v2134
    %v3615 = vpop.f32.mrf.mxu0
    %v3616 = vadd.f32 %v3575, %v3615
    %v3617 = vpop.f32.mrf.mxu0
    %v3618 = vadd.f32 %v3577, %v3617
    %v3619 = vpop.f32.mrf.mxu0
    %v3620 = vpop.f32.mrf.mxu0
    %3621 = vdwg.mxu0
    %3622 = vmatprep.subr.bf16.mxu0 %v3007
    %3623 = vmatpush1.bf16.msra.mxu0 %v3006
    %3624 = vmatprep.subr.bf16.mxu0 %v2999
    %3625 = vmatpush1.bf16.msra.mxu0 %v2998
    %3626 = vmatprep.subr.bf16.mxu0 %v2991
    %3627 = vmatpush1.bf16.msra.mxu0 %v2990
    %3628 = vmatprep.subr.bf16.mxu0 %v2983
    %3629 = vmatpush1.bf16.msra.mxu0 %v2982
    %3630 = vmatprep.subr.bf16.mxu0 %v2975
    %3631 = vmatpush1.bf16.msra.mxu0 %v2974
    %3632 = vmatprep.subr.bf16.mxu0 %v2967
    %3633 = vmatpush1.bf16.msra.mxu0 %v2966
    %3634 = vmatprep.subr.bf16.mxu0 %v2959
    %3635 = vmatpush1.bf16.msra.mxu0 %v2958
    %3636 = vmatprep.subr.bf16.mxu0 %v2951
    %3637 = vmatpush1.bf16.msra.mxu0 %v2950
    %3638 = vmatprep.subr.bf16.mxu0 %v3071
    %3639 = vmatpush2.bf16.msra.mxu0 %v3070
    %3640 = vmatprep.subr.bf16.mxu0 %v3063
    %3641 = vmatpush2.bf16.msra.mxu0 %v3062
    %3642 = vmatprep.subr.bf16.mxu0 %v3055
    %3643 = vmatpush2.bf16.msra.mxu0 %v3054
    %3644 = vmatprep.subr.bf16.mxu0 %v3047
    %3645 = vmatpush2.bf16.msra.mxu0 %v3046
    %3646 = vmatprep.subr.bf16.mxu0 %v3039
    %3647 = vmatpush2.bf16.msra.mxu0 %v3038
    %3648 = vmatprep.subr.bf16.mxu0 %v3031
    %3649 = vmatpush2.bf16.msra.mxu0 %v3030
    %3650 = vmatprep.subr.bf16.mxu0 %v3023
    %3651 = vmatpush2.bf16.msra.mxu0 %v3022
    %3652 = vmatprep.subr.bf16.mxu0 %v3015
    %3653 = vmatpush2.bf16.msra.mxu0 %v3014
    %3654 = vmatprep.mubr.bf16.mxu0 %v2133
    %3655 = vmatmul.mubr.bf16.gmra.mxu0 %v2132
    %v3656 = vpop.f32.mrf.mxu0
    %v3657 = vadd.f32 %v2157, %v3656
    %v3658 = vpop.f32.mrf.mxu0
    %v3659 = vadd.f32 %v2161, %v3658
    %v3660 = vpop.f32.mrf.mxu0
    %v3661 = vpop.f32.mrf.mxu0
    %3662 = vdwg.mxu0
    %3663 = vmatprep.subr.bf16.mxu0 %v3135
    %3664 = vmatpush1.bf16.msra.mxu0 %v3134
    %3665 = vmatprep.subr.bf16.mxu0 %v3127
    %3666 = vmatpush1.bf16.msra.mxu0 %v3126
    %3667 = vmatprep.subr.bf16.mxu0 %v3119
    %3668 = vmatpush1.bf16.msra.mxu0 %v3118
    %3669 = vmatprep.subr.bf16.mxu0 %v3111
    %3670 = vmatpush1.bf16.msra.mxu0 %v3110
    %3671 = vmatprep.subr.bf16.mxu0 %v3103
    %3672 = vmatpush1.bf16.msra.mxu0 %v3102
    %3673 = vmatprep.subr.bf16.mxu0 %v3095
    %3674 = vmatpush1.bf16.msra.mxu0 %v3094
    %3675 = vmatprep.subr.bf16.mxu0 %v3087
    %3676 = vmatpush1.bf16.msra.mxu0 %v3086
    %3677 = vmatprep.subr.bf16.mxu0 %v3079
    %3678 = vmatpush1.bf16.msra.mxu0 %v3078
    %3679 = vmatprep.subr.bf16.mxu0 %v3199
    %3680 = vmatpush2.bf16.msra.mxu0 %v3198
    %3681 = vmatprep.subr.bf16.mxu0 %v3191
    %3682 = vmatpush2.bf16.msra.mxu0 %v3190
    %3683 = vmatprep.subr.bf16.mxu0 %v3183
    %3684 = vmatpush2.bf16.msra.mxu0 %v3182
    %3685 = vmatprep.subr.bf16.mxu0 %v3175
    %3686 = vmatpush2.bf16.msra.mxu0 %v3174
    %3687 = vmatprep.subr.bf16.mxu0 %v3167
    %3688 = vmatpush2.bf16.msra.mxu0 %v3166
    %3689 = vmatprep.subr.bf16.mxu0 %v3159
    %3690 = vmatpush2.bf16.msra.mxu0 %v3158
    %3691 = vmatprep.subr.bf16.mxu0 %v3151
    %3692 = vmatpush2.bf16.msra.mxu0 %v3150
    %3693 = vmatprep.subr.bf16.mxu0 %v3143
    %3694 = vmatpush2.bf16.msra.mxu0 %v3142
    %3695 = vmatprep.mubr.bf16.mxu0 %v2135
    %3696 = vmatmul.mubr.bf16.gmra.mxu0 %v2134
    %v3697 = vpop.f32.mrf.mxu0
    %v3698 = vadd.f32 %v3657, %v3697
    %v3699 = vpop.f32.mrf.mxu0
    %v3700 = vadd.f32 %v3659, %v3699
    %v3701 = vpop.f32.mrf.mxu0
    %v3702 = vpop.f32.mrf.mxu0
    %3703 = vdwg.mxu0
    %3704 = vmatprep.subr.bf16.mxu0 %v3009
    %3705 = vmatpush1.bf16.msra.mxu0 %v3008
    %3706 = vmatprep.subr.bf16.mxu0 %v3001
    %3707 = vmatpush1.bf16.msra.mxu0 %v3000
    %3708 = vmatprep.subr.bf16.mxu0 %v2993
    %3709 = vmatpush1.bf16.msra.mxu0 %v2992
    %3710 = vmatprep.subr.bf16.mxu0 %v2985
    %3711 = vmatpush1.bf16.msra.mxu0 %v2984
    %3712 = vmatprep.subr.bf16.mxu0 %v2977
    %3713 = vmatpush1.bf16.msra.mxu0 %v2976
    %3714 = vmatprep.subr.bf16.mxu0 %v2969
    %3715 = vmatpush1.bf16.msra.mxu0 %v2968
    %3716 = vmatprep.subr.bf16.mxu0 %v2961
    %3717 = vmatpush1.bf16.msra.mxu0 %v2960
    %3718 = vmatprep.subr.bf16.mxu0 %v2953
    %3719 = vmatpush1.bf16.msra.mxu0 %v2952
    %3720 = vmatprep.subr.bf16.mxu0 %v3073
    %3721 = vmatpush2.bf16.msra.mxu0 %v3072
    %3722 = vmatprep.subr.bf16.mxu0 %v3065
    %3723 = vmatpush2.bf16.msra.mxu0 %v3064
    %3724 = vmatprep.subr.bf16.mxu0 %v3057
    %3725 = vmatpush2.bf16.msra.mxu0 %v3056
    %3726 = vmatprep.subr.bf16.mxu0 %v3049
    %3727 = vmatpush2.bf16.msra.mxu0 %v3048
    %3728 = vmatprep.subr.bf16.mxu0 %v3041
    %3729 = vmatpush2.bf16.msra.mxu0 %v3040
    %3730 = vmatprep.subr.bf16.mxu0 %v3033
    %3731 = vmatpush2.bf16.msra.mxu0 %v3032
    %3732 = vmatprep.subr.bf16.mxu0 %v3025
    %3733 = vmatpush2.bf16.msra.mxu0 %v3024
    %3734 = vmatprep.subr.bf16.mxu0 %v3017
    %3735 = vmatpush2.bf16.msra.mxu0 %v3016
    %3736 = vmatprep.mubr.bf16.mxu0 %v2133
    %3737 = vmatmul.mubr.bf16.gmra.mxu0 %v2132
    %v3738 = vpop.f32.mrf.mxu0
    %v3739 = vadd.f32 %v2165, %v3738
    %v3740 = vpop.f32.mrf.mxu0
    %v3741 = vadd.f32 %v2169, %v3740
    %v3742 = vpop.f32.mrf.mxu0
    %v3743 = vpop.f32.mrf.mxu0
    %3744 = vdwg.mxu0
    %3745 = vmatprep.subr.bf16.mxu0 %v3137
    %3746 = vmatpush1.bf16.msra.mxu0 %v3136
    %3747 = vmatprep.subr.bf16.mxu0 %v3129
    %3748 = vmatpush1.bf16.msra.mxu0 %v3128
    %3749 = vmatprep.subr.bf16.mxu0 %v3121
    %3750 = vmatpush1.bf16.msra.mxu0 %v3120
    %3751 = vmatprep.subr.bf16.mxu0 %v3113
    %3752 = vmatpush1.bf16.msra.mxu0 %v3112
    %3753 = vmatprep.subr.bf16.mxu0 %v3105
    %3754 = vmatpush1.bf16.msra.mxu0 %v3104
    %3755 = vmatprep.subr.bf16.mxu0 %v3097
    %3756 = vmatpush1.bf16.msra.mxu0 %v3096
    %3757 = vmatprep.subr.bf16.mxu0 %v3089
    %3758 = vmatpush1.bf16.msra.mxu0 %v3088
    %3759 = vmatprep.subr.bf16.mxu0 %v3081
    %3760 = vmatpush1.bf16.msra.mxu0 %v3080
    %3761 = vmatprep.subr.bf16.mxu0 %v3201
    %3762 = vmatpush2.bf16.msra.mxu0 %v3200
    %3763 = vmatprep.subr.bf16.mxu0 %v3193
    %3764 = vmatpush2.bf16.msra.mxu0 %v3192
    %3765 = vmatprep.subr.bf16.mxu0 %v3185
    %3766 = vmatpush2.bf16.msra.mxu0 %v3184
    %3767 = vmatprep.subr.bf16.mxu0 %v3177
    %3768 = vmatpush2.bf16.msra.mxu0 %v3176
    %3769 = vmatprep.subr.bf16.mxu0 %v3169
    %3770 = vmatpush2.bf16.msra.mxu0 %v3168
    %3771 = vmatprep.subr.bf16.mxu0 %v3161
    %3772 = vmatpush2.bf16.msra.mxu0 %v3160
    %3773 = vmatprep.subr.bf16.mxu0 %v3153
    %3774 = vmatpush2.bf16.msra.mxu0 %v3152
    %3775 = vmatprep.subr.bf16.mxu0 %v3145
    %3776 = vmatpush2.bf16.msra.mxu0 %v3144
    %3777 = vmatprep.mubr.bf16.mxu0 %v2135
    %3778 = vmatmul.mubr.bf16.gmra.mxu0 %v2134
    %v3779 = vpop.f32.mrf.mxu0
    %v3780 = vadd.f32 %v3739, %v3779
    %v3781 = vpop.f32.mrf.mxu0
    %v3782 = vadd.f32 %v3741, %v3781
    %v3783 = vpop.f32.mrf.mxu0
    %v3784 = vpop.f32.mrf.mxu0
    %3785 = vdwg.mxu0
    %v3786 = vtanh.pop %v3534
    %v3787 = vtanh.pop %v3536
    %v3788 = vtanh.pop %v3616
    %v3789 = vtanh.pop %v3618
    %v3790 = vtanh.pop %v3698
    %v3791 = vtanh.pop %v3700
    %v3792 = vtanh.pop %v3780
    %v3793 = vtanh.pop %v3782
    %v3802 = vcombine.low %v3786, %v3787
    %v3803 = vcombine.low %v3788, %v3789
    %v3805 = vunpack.c.l.s4 1983009808
    %v3806 = vunpack.c.0.s8 %v3805
    %v3807 = vlaneseq
    %v3808 = vshrl.u32 %v3807, 7
    %v3809 = vsub.s32 %v3806, %v3808
    %v3810 = vrot.slane %v3802, %v3809
    %v3812 = vunpack.c.l.s4 1983009808
    %v3813 = vunpack.c.0.s8 %v3812
    %v3814 = vlaneseq
    %v3815 = vshrl.u32 %v3814, 7
    %v3816 = vsub.s32 %v3813, %v3815
    %v3817 = vrot.slane %v3803, %v3816
    %v3818 = vcombine.low %v3810, %v3817
    %v3819 = vcombine.low %v3790, %v3791
    %v3820 = vcombine.low %v3792, %v3793
    %v3822 = vunpack.c.l.s4 1983009808
    %v3823 = vunpack.c.0.s8 %v3822
    %v3824 = vlaneseq
    %v3825 = vshrl.u32 %v3824, 7
    %v3826 = vsub.s32 %v3823, %v3825
    %v3827 = vrot.slane %v3819, %v3826
    %v3829 = vunpack.c.l.s4 1983009808
    %v3830 = vunpack.c.0.s8 %v3829
    %v3831 = vlaneseq
    %v3832 = vshrl.u32 %v3831, 7
    %v3833 = vsub.s32 %v3830, %v3832
    %v3834 = vrot.slane %v3820, %v3833
    %v3835 = vcombine.low %v3827, %v3834
    %3838 = vst [vmem:[%s11] sm:$0xff] %v3818
    %3839 = vst [vmem:[%s11 + $0x8] sm:$0xff] %v3835
    // Predicated region
    $region74: #{fwd.1} parent=1 // pred_check
      _
    $region75: #{fwd.1} parent=1 // pred_check_branch
      %3841 = sbr.rel (0) target = $region77
    $region76: #{fwd.1} parent=1 // pred_region
      _
    $region77: #{fwd.1} parent=1 // pred_fallthru
      _
    // Predicated region
    $region78: #{fwd.1} parent=1 // pred_check
      _
    $region79: #{fwd.1} parent=1 // pred_check_branch
      %3843 = sbr.rel (0) target = $region81
    $region80: #{fwd.1} parent=1 // pred_region
      _
    $region81: #{fwd.1} parent=1 // pred_fallthru
      _
    %3844 = vsyncpa [#allocation3], 1
    %3845 = vsyncpa [#allocation5], 1
    %3846 = vsyncpa [#allocation8], 1
    %3847 = vsyncpa [#allocation11], 1

</llo_original>
